<compile_context>
chip_gen: v5e
topology: v5e:2x2
jax: 0.10.0
libtpu: 0.0.40
codegen_flags: <defaults>
</compile_context>

<pallas_src>
import functools
import math

import jax
import jax.numpy as jnp
from jax import lax
from jax.experimental import pallas as pl
from jax.experimental.pallas import tpu as pltpu


# ----------------------------- Pallas kernel ------------------------------- #
def _layernorm(z, w, b, eps=1e-5):
    # Two-pass statistics (mean, then centered sum-of-squares): same number of
    # lane reductions as the fused-moments form, without the cancellation risk.
    n = z.shape[-1]
    mu = jnp.sum(z, axis=-1, keepdims=True) * (1.0 / n)
    zc = z - mu
    var = jnp.sum(zc * zc, axis=-1, keepdims=True) * (1.0 / n)
    return zc * lax.rsqrt(var + eps) * w + b


def transformer_block_kernel(
    x_ref,
    ln1w_ref, ln1b_ref,
    wqkv_ref, bqkv_ref,
    wo_ref, bo_ref,
    ln2w_ref, ln2b_ref,
    w1_ref, b1_ref, w2_ref, b2_ref,
    o_ref,
    attn_cat_ref,          # VMEM scratch (T, D) bf16: concatenated head outputs
    *, num_heads,
):
    f32 = jnp.float32
    bf16 = jnp.bfloat16

    x = x_ref[0]                       # (T, D) f32
    T, D = x.shape
    H = num_heads
    hd = D // H

    # ---- LayerNorm 1 (f32) ----
    xn = _layernorm(x, ln1w_ref[0], ln1b_ref[0])

    # ---- fused QKV projection: one (T,D)x(D,3D) bf16 MXU matmul ----
    # 1/sqrt(hd) is pre-folded into the Q columns of wqkv/bqkv (init-time).
    qkv = jnp.dot(xn.astype(bf16), wqkv_ref[...],
                  preferred_element_type=f32) + bqkv_ref[0]      # (T, 3D) f32
    q = qkv[:, :D]
    k = qkv[:, D:2 * D]
    v = qkv[:, 2 * D:]

    # ---- per-head attention; concatenate heads into VMEM scratch ----
    for h in range(H):                 # H is static -> unrolled
        sl = slice(h * hd, (h + 1) * hd)   # 128-aligned when hd % 128 == 0
        q_h = q[:, sl].astype(bf16)
        k_h = k[:, sl].astype(bf16)
        v_h = v[:, sl].astype(bf16)
        # Contract last dims directly ("td,sd->ts"); if a bundle dump ever shows
        # a vxpose for k_h here, produce a transposed K slab once per block.
        s = lax.dot_general(q_h, k_h, (((1,), (1,)), ((), ())),
                            preferred_element_type=f32)          # (T, T) f32
        m = jnp.max(s, axis=-1, keepdims=True)
        e = jnp.exp(s - m)
        p = e * pl.reciprocal(jnp.sum(e, axis=-1, keepdims=True), approx=True)
        attn_h = jnp.dot(p.astype(bf16), v_h,
                         preferred_element_type=f32)             # (T, hd) f32
        attn_cat_ref[:, sl] = attn_h.astype(bf16)                # plain store

    # ---- ONE wide-K output projection: (T,D)@(D,D), full MXU depth ----
    x1 = x + jnp.dot(attn_cat_ref[...], wo_ref[...],
                     preferred_element_type=f32) + bo_ref[0]     # residual 1

    # ---- LayerNorm 2 (f32) ----
    xn2 = _layernorm(x1, ln2w_ref[0], ln2b_ref[0])

    # ---- MLP: Linear -> exact (erf) GELU -> Linear, + residual ----
    hdn = jnp.dot(xn2.astype(bf16), w1_ref[...],
                  preferred_element_type=f32) + b1_ref[0]        # (T, Dm) f32
    g = 0.5 * hdn * (1.0 + lax.erf(hdn * 0.7071067811865476))
    y = jnp.dot(g.astype(bf16), w2_ref[...],
                preferred_element_type=f32) + b2_ref[0]

    o_ref[0] = x1 + y


# ------------------------------- Wrapper ------------------------------------ #
def _vmem_limit_bytes():
    # Generation-aware scoped-VMEM budget: leave headroom under the physical
    # capacity (64 MiB/TC on v7x, 128 MiB on v5e/v6e). Fallback if the trace-time
    # hardware query is unavailable.
    try:
        cap = int(pltpu.get_tpu_info().vmem_capacity_bytes)
    except Exception:
        cap = 64 * 1024 * 1024
    return max(32 * 1024 * 1024, min(cap - 16 * 1024 * 1024, 110 * 1024 * 1024))


def transformer_block(x, kparams, num_heads):
    B, T, D = x.shape
    kernel = functools.partial(transformer_block_kernel, num_heads=num_heads)

    # Weights/biases: whole array resident in VMEM (copied once, single-buffered;
    # no per-grid-step DMA and no double-buffered duplicate).
    resident = pl.BlockSpec(memory_space=pltpu.MemorySpace.VMEM)

    return pl.pallas_call(
        kernel,
        out_shape=jax.ShapeDtypeStruct((B, T, D), jnp.float32),
        grid_spec=pltpu.PrefetchScalarGridSpec(
            num_scalar_prefetch=0,
            grid=(B,),
            in_specs=[
                pl.BlockSpec((1, T, D), lambda b: (b, 0, 0)),   # x (lane-dense when D%128==0)
                resident, resident,                              # ln1 w, b
                resident, resident,                              # fused Wqkv, bqkv
                resident, resident,                              # wo, bo
                resident, resident,                              # ln2 w, b
                resident, resident,                              # w1, b1
                resident, resident,                              # w2, b2
            ],
            out_specs=pl.BlockSpec((1, T, D), lambda b: (b, 0, 0)),
            scratch_shapes=[pltpu.VMEM((T, D), jnp.bfloat16)],   # concatenated heads
        ),
        compiler_params=pltpu.CompilerParams(
            dimension_semantics=("parallel",),
            vmem_limit_bytes=_vmem_limit_bytes(),
        ),
    )(
        x,
        kparams["ln1_w"], kparams["ln1_b"],
        kparams["wqkv"], kparams["bqkv"],
        kparams["wo"], kparams["bo"],
        kparams["ln2_w"], kparams["ln2_b"],
        kparams["w1"], kparams["b1"], kparams["w2"], kparams["b2"],
    )


# ----------------------- Parameter construction (glue) ---------------------- #
def init_params(key, embed_dim, mlp_ratio=4.0):
    """Torch-layout parameters: nn.Linear weights are (out, in), biases (out,)."""
    D = embed_dim
    Dm = int(D * mlp_ratio)
    ks = jax.random.split(key, 4)

    def lin(k, fan_in, fan_out):
        bound = 1.0 / math.sqrt(fan_in)
        kw, kb = jax.random.split(k)
        W = jax.random.uniform(kw, (fan_out, fan_in), jnp.float32, -bound, bound)
        b = jax.random.uniform(kb, (fan_out,), jnp.float32, -bound, bound)
        return W, b

    Wqkv, bqkv = lin(ks[0], D, 3 * D)
    Wo, bo = lin(ks[1], D, D)
    W1, b1 = lin(ks[2], D, Dm)
    W2, b2 = lin(ks[3], Dm, D)
    return dict(
        ln1_w=jnp.ones((D,), jnp.float32), ln1_b=jnp.zeros((D,), jnp.float32),
        ln2_w=jnp.ones((D,), jnp.float32), ln2_b=jnp.zeros((D,), jnp.float32),
        wqkv=Wqkv, bqkv=bqkv, wo=Wo, bo=bo, w1=W1, b1=b1, w2=W2, b2=b2,
    )


def prepare_kernel_params(p, num_heads):
    """One-time torch-layout -> kernel-layout transform.

    * qkv_proj (torch): weight (3D, D); per head h the output rows are
      [Q_h | K_h | V_h] chunks of size hd.  Reorganized to a fused (D, 3D)
      weight whose columns are [Q heads | K heads | V heads] (head-major).
    * 1/sqrt(hd) folded into the Q columns (weight AND bias).
    * All matmul weights cast to bf16 (f32 accumulation in-kernel).
    """
    bf16 = jnp.bfloat16
    D = p["wo"].shape[0]
    Dm = p["w1"].shape[0]
    H = num_heads
    hd = D // H
    scale = 1.0 / math.sqrt(hd)

    Wf = p["wqkv"].reshape(H, 3, hd, D).transpose(1, 0, 2, 3).reshape(3 * D, D).T  # (D, 3D)
    bf = p["bqkv"].reshape(H, 3, hd).transpose(1, 0, 2).reshape(3 * D)
    col_scale = jnp.concatenate(
        [jnp.full((D,), scale, jnp.float32), jnp.ones((2 * D,), jnp.float32)])
    Wf = Wf * col_scale
    bf = bf * col_scale

    return dict(
        ln1_w=p["ln1_w"].reshape(1, D), ln1_b=p["ln1_b"].reshape(1, D),
        ln2_w=p["ln2_w"].reshape(1, D), ln2_b=p["ln2_b"].reshape(1, D),
        wqkv=Wf.astype(bf16), bqkv=bf.reshape(1, 3 * D),
        wo=p["wo"].T.astype(bf16), bo=p["bo"].reshape(1, D),
        w1=p["w1"].T.astype(bf16), b1=p["b1"].reshape(1, Dm),
        w2=p["w2"].T.astype(bf16), b2=p["b2"].reshape(1, D),
    )


# ------------------------------ Pure-JAX reference --------------------------- #
def reference_block(x, p, num_heads):
    """f32 reference implementing the PyTorch module's forward on the ORIGINAL
    torch-layout parameters (validates the kernel's weight reorg + scale fold)."""
    B, T, D = x.shape
    H = num_heads
    hd = D // H

    def ln(z, w, b):
        mu = jnp.mean(z, axis=-1, keepdims=True)
        var = jnp.mean((z - mu) ** 2, axis=-1, keepdims=True)
        return (z - mu) / jnp.sqrt(var + 1e-5) * w + b

    xn = ln(x, p["ln1_w"], p["ln1_b"])
    qkv = xn @ p["wqkv"].T + p["bqkv"]                              # (B,T,3D)
    qkv = qkv.reshape(B, T, H, 3 * hd).transpose(0, 2, 1, 3)        # (B,H,T,3hd)
    q, k, v = qkv[..., :hd], qkv[..., hd:2 * hd], qkv[..., 2 * hd:]
    s = jnp.einsum("bhtd,bhsd->bhts", q, k) / math.sqrt(hd)
    w = jax.nn.softmax(s, axis=-1)
    attn = jnp.einsum("bhts,bhsd->bhtd", w, v)
    attn = attn.transpose(0, 2, 1, 3).reshape(B, T, D)
    x1 = x + attn @ p["wo"].T + p["bo"]
    xn2 = ln(x1, p["ln2_w"], p["ln2_b"])
    h = xn2 @ p["w1"].T + p["b1"]
    g = 0.5 * h * (1.0 + lax.erf(h / math.sqrt(2.0)))
    return x1 + g @ p["w2"].T + p["b2"]


# ---------------------------------- main ------------------------------------ #
if __name__ == "__main__":
    # TPU-friendly toy shapes: D multiple of 128 (lane-dense blocks) and
    # head_dim = D/H = 128 (lane-aligned per-head slices), per the perf review.
    B, T, D, H = 2, 16, 256, 2
    key = jax.random.PRNGKey(0)
    kx, kp = jax.random.split(key)

    x = jax.random.normal(kx, (B, T, D), jnp.float32)
    torch_params = init_params(kp, D, mlp_ratio=4.0)
    kparams = prepare_kernel_params(torch_params, H)

    out = transformer_block(x, kparams, H)
    out = jax.block_until_ready(out)

    ref = reference_block(x, torch_params, H)
    assert out.shape == (B, T, D)
    # Tolerance accounts for bf16 matmul operands (f32 accumulation) and the
    # approximate softmax reciprocal; structural bugs would show up as O(1) diffs.
    max_err = float(jnp.max(jnp.abs(out - ref)))
    assert jnp.allclose(out, ref, atol=5e-2, rtol=5e-2), \
        f"mismatch vs JAX reference (max abs err {max_err})"

    print("KERNEL_OK")
</pallas_src>

<mosaic_0001>
module attributes {stable_mosaic.version = 11 : i64} {
  func.func @transformer_block_kernel(%arg0: i32, %arg1: memref<1x16x256xf32, #tpu.memory_space<vmem>>, %arg2: memref<1x256xf32, #tpu.memory_space<vmem>>, %arg3: memref<1x256xf32, #tpu.memory_space<vmem>>, %arg4: memref<256x768xbf16, #tpu.memory_space<vmem>>, %arg5: memref<1x768xf32, #tpu.memory_space<vmem>>, %arg6: memref<256x256xbf16, #tpu.memory_space<vmem>>, %arg7: memref<1x256xf32, #tpu.memory_space<vmem>>, %arg8: memref<1x256xf32, #tpu.memory_space<vmem>>, %arg9: memref<1x256xf32, #tpu.memory_space<vmem>>, %arg10: memref<256x1024xbf16, #tpu.memory_space<vmem>>, %arg11: memref<1x1024xf32, #tpu.memory_space<vmem>>, %arg12: memref<1024x256xbf16, #tpu.memory_space<vmem>>, %arg13: memref<1x256xf32, #tpu.memory_space<vmem>>, %arg14: memref<1x16x256xf32, #tpu.memory_space<vmem>>, %arg15: memref<16x256xbf16, #tpu.memory_space<vmem>>) attributes {dimension_semantics = [#tpu.dimension_semantics<parallel>], iteration_bounds = array<i64: 2>, scalar_prefetch = 0 : i64, scratch_operands = 1 : i64, tpu.core_type = #tpu.core_type<tc>, window_params = [{transform_indices = @transform_0, window_bounds = array<i64: 1, 16, 256>}, {pipeline_mode = #tpu.pipeline_mode<synchronous>, transform_indices = @transform_1, window_bounds = array<i64: 1, 256>}, {pipeline_mode = #tpu.pipeline_mode<synchronous>, transform_indices = @transform_2, window_bounds = array<i64: 1, 256>}, {pipeline_mode = #tpu.pipeline_mode<synchronous>, transform_indices = @transform_3, window_bounds = array<i64: 256, 768>}, {pipeline_mode = #tpu.pipeline_mode<synchronous>, transform_indices = @transform_4, window_bounds = array<i64: 1, 768>}, {pipeline_mode = #tpu.pipeline_mode<synchronous>, transform_indices = @transform_5, window_bounds = array<i64: 256, 256>}, {pipeline_mode = #tpu.pipeline_mode<synchronous>, transform_indices = @transform_6, window_bounds = array<i64: 1, 256>}, {pipeline_mode = #tpu.pipeline_mode<synchronous>, transform_indices = @transform_7, window_bounds = array<i64: 1, 256>}, {pipeline_mode = #tpu.pipeline_mode<synchronous>, transform_indices = @transform_8, window_bounds = array<i64: 1, 256>}, {pipeline_mode = #tpu.pipeline_mode<synchronous>, transform_indices = @transform_9, window_bounds = array<i64: 256, 1024>}, {pipeline_mode = #tpu.pipeline_mode<synchronous>, transform_indices = @transform_10, window_bounds = array<i64: 1, 1024>}, {pipeline_mode = #tpu.pipeline_mode<synchronous>, transform_indices = @transform_11, window_bounds = array<i64: 1024, 256>}, {pipeline_mode = #tpu.pipeline_mode<synchronous>, transform_indices = @transform_12, window_bounds = array<i64: 1, 256>}, {transform_indices = @transform_13, window_bounds = array<i64: 1, 16, 256>}]} {
    %c0 = arith.constant 0 : index
    %c0_0 = arith.constant 0 : index
    %c0_1 = arith.constant 0 : index
    %0 = vector.load %arg1[%c0, %c0_0, %c0_1] : memref<1x16x256xf32, #tpu.memory_space<vmem>>, vector<1x16x256xf32>
    %1 = vector.shape_cast %0 : vector<1x16x256xf32> to vector<16x256xf32>
    %c0_2 = arith.constant 0 : index
    %c0_3 = arith.constant 0 : index
    %2 = vector.load %arg2[%c0_2, %c0_3] : memref<1x256xf32, #tpu.memory_space<vmem>>, vector<1x256xf32>
    %3 = vector.shape_cast %2 : vector<1x256xf32> to vector<256xf32>
    %c0_4 = arith.constant 0 : index
    %c0_5 = arith.constant 0 : index
    %4 = vector.load %arg3[%c0_4, %c0_5] : memref<1x256xf32, #tpu.memory_space<vmem>>, vector<1x256xf32>
    %5 = vector.shape_cast %4 : vector<1x256xf32> to vector<256xf32>
    %cst = arith.constant dense<0.000000e+00> : vector<16xf32>
    %6 = vector.multi_reduction <add>, %1, %cst [1] : vector<16x256xf32> to vector<16xf32>
    %7 = vector.shape_cast %6 : vector<16xf32> to vector<16x1xf32>
    %cst_6 = arith.constant 3.906250e-03 : f32
    %8 = vector.broadcast %cst_6 : f32 to vector<16x1xf32>
    %9 = arith.mulf %7, %8 : vector<16x1xf32>
    %10 = vector.broadcast %9 : vector<16x1xf32> to vector<16x256xf32>
    %11 = arith.subf %1, %10 : vector<16x256xf32>
    %12 = arith.mulf %11, %11 : vector<16x256xf32>
    %cst_7 = arith.constant dense<0.000000e+00> : vector<16xf32>
    %13 = vector.multi_reduction <add>, %12, %cst_7 [1] : vector<16x256xf32> to vector<16xf32>
    %14 = vector.shape_cast %13 : vector<16xf32> to vector<16x1xf32>
    %cst_8 = arith.constant 3.906250e-03 : f32
    %15 = vector.broadcast %cst_8 : f32 to vector<16x1xf32>
    %16 = arith.mulf %14, %15 : vector<16x1xf32>
    %cst_9 = arith.constant 9.99999974E-6 : f32
    %17 = vector.broadcast %cst_9 : f32 to vector<16x1xf32>
    %18 = arith.addf %16, %17 : vector<16x1xf32>
    %19 = math.rsqrt %18 : vector<16x1xf32>
    %20 = vector.broadcast %19 : vector<16x1xf32> to vector<16x256xf32>
    %21 = arith.mulf %11, %20 : vector<16x256xf32>
    %22 = vector.shape_cast %3 : vector<256xf32> to vector<1x256xf32>
    %23 = vector.broadcast %22 : vector<1x256xf32> to vector<16x256xf32>
    %24 = arith.mulf %21, %23 : vector<16x256xf32>
    %25 = vector.shape_cast %5 : vector<256xf32> to vector<1x256xf32>
    %26 = vector.broadcast %25 : vector<1x256xf32> to vector<16x256xf32>
    %27 = arith.addf %24, %26 : vector<16x256xf32>
    %28 = arith.truncf %27 : vector<16x256xf32> to vector<16x256xbf16>
    %c0_10 = arith.constant 0 : index
    %c0_11 = arith.constant 0 : index
    %29 = vector.load %arg4[%c0_10, %c0_11] : memref<256x768xbf16, #tpu.memory_space<vmem>>, vector<256x768xbf16>
    %cst_12 = arith.constant dense<0.000000e+00> : vector<16x768xf32>
    %30 = tpu.matmul %28, %29, %cst_12 {dimension_numbers = #tpu.dot_dimension_numbers<[1], [0], [0], [1], [0, 0, 1, 1], [], []>} : vector<16x256xbf16>, vector<256x768xbf16>, vector<16x768xf32> -> vector<16x768xf32>
    %c0_13 = arith.constant 0 : index
    %c0_14 = arith.constant 0 : index
    %31 = vector.load %arg5[%c0_13, %c0_14] : memref<1x768xf32, #tpu.memory_space<vmem>>, vector<1x768xf32>
    %32 = vector.shape_cast %31 : vector<1x768xf32> to vector<768xf32>
    %33 = vector.shape_cast %32 : vector<768xf32> to vector<1x768xf32>
    %34 = vector.broadcast %33 : vector<1x768xf32> to vector<16x768xf32>
    %35 = arith.addf %30, %34 : vector<16x768xf32>
    %36 = vector.extract_strided_slice %35 {offsets = [0, 0], sizes = [16, 256], strides = [1, 1]} : vector<16x768xf32> to vector<16x256xf32>
    %37 = vector.extract_strided_slice %35 {offsets = [0, 256], sizes = [16, 256], strides = [1, 1]} : vector<16x768xf32> to vector<16x256xf32>
    %38 = vector.extract_strided_slice %35 {offsets = [0, 512], sizes = [16, 256], strides = [1, 1]} : vector<16x768xf32> to vector<16x256xf32>
    %39 = vector.extract_strided_slice %36 {offsets = [0, 0], sizes = [16, 128], strides = [1, 1]} : vector<16x256xf32> to vector<16x128xf32>
    %40 = arith.truncf %39 : vector<16x128xf32> to vector<16x128xbf16>
    %41 = vector.extract_strided_slice %37 {offsets = [0, 0], sizes = [16, 128], strides = [1, 1]} : vector<16x256xf32> to vector<16x128xf32>
    %42 = arith.truncf %41 : vector<16x128xf32> to vector<16x128xbf16>
    %43 = vector.extract_strided_slice %38 {offsets = [0, 0], sizes = [16, 128], strides = [1, 1]} : vector<16x256xf32> to vector<16x128xf32>
    %44 = arith.truncf %43 : vector<16x128xf32> to vector<16x128xbf16>
    %cst_15 = arith.constant dense<0.000000e+00> : vector<16x16xf32>
    %45 = tpu.matmul %40, %42, %cst_15 {dimension_numbers = #tpu.dot_dimension_numbers<[1], [1], [0], [0], [0, 0, 1, 0], [], []>} : vector<16x128xbf16>, vector<16x128xbf16>, vector<16x16xf32> -> vector<16x16xf32>
    %cst_16 = arith.constant dense<0xFF800000> : vector<16xf32>
    %46 = vector.multi_reduction <maximumf>, %45, %cst_16 [1] : vector<16x16xf32> to vector<16xf32>
    %47 = vector.shape_cast %46 : vector<16xf32> to vector<16x1xf32>
    %48 = vector.broadcast %47 : vector<16x1xf32> to vector<16x16xf32>
    %49 = arith.subf %45, %48 : vector<16x16xf32>
    %50 = math.exp %49 : vector<16x16xf32>
    %cst_17 = arith.constant dense<0.000000e+00> : vector<16xf32>
    %51 = vector.multi_reduction <add>, %50, %cst_17 [1] : vector<16x16xf32> to vector<16xf32>
    %52 = vector.shape_cast %51 : vector<16xf32> to vector<16x1xf32>
    %53 = tpu.reciprocal %52 {approx = true} : vector<16x1xf32> -> vector<16x1xf32>
    %54 = vector.broadcast %53 : vector<16x1xf32> to vector<16x16xf32>
    %55 = arith.mulf %50, %54 : vector<16x16xf32>
    %56 = arith.truncf %55 : vector<16x16xf32> to vector<16x16xbf16>
    %cst_18 = arith.constant dense<0.000000e+00> : vector<16x128xf32>
    %57 = tpu.matmul %56, %44, %cst_18 {dimension_numbers = #tpu.dot_dimension_numbers<[1], [0], [0], [1], [0, 0, 1, 1], [], []>} : vector<16x16xbf16>, vector<16x128xbf16>, vector<16x128xf32> -> vector<16x128xf32>
    %58 = arith.truncf %57 : vector<16x128xf32> to vector<16x128xbf16>
    %c0_19 = arith.constant 0 : index
    %c0_20 = arith.constant 0 : index
    %59 = vector.load %arg15[%c0_19, %c0_20] : memref<16x256xbf16, #tpu.memory_space<vmem>>, vector<16x128xbf16>
    tpu.vector_store %arg15[%c0_19, %c0_20], %58 {strides = array<i32>} : memref<16x256xbf16, #tpu.memory_space<vmem>>, vector<16x128xbf16>,
    %60 = vector.extract_strided_slice %36 {offsets = [0, 128], sizes = [16, 128], strides = [1, 1]} : vector<16x256xf32> to vector<16x128xf32>
    %61 = arith.truncf %60 : vector<16x128xf32> to vector<16x128xbf16>
    %62 = vector.extract_strided_slice %37 {offsets = [0, 128], sizes = [16, 128], strides = [1, 1]} : vector<16x256xf32> to vector<16x128xf32>
    %63 = arith.truncf %62 : vector<16x128xf32> to vector<16x128xbf16>
    %64 = vector.extract_strided_slice %38 {offsets = [0, 128], sizes = [16, 128], strides = [1, 1]} : vector<16x256xf32> to vector<16x128xf32>
    %65 = arith.truncf %64 : vector<16x128xf32> to vector<16x128xbf16>
    %cst_21 = arith.constant dense<0.000000e+00> : vector<16x16xf32>
    %66 = tpu.matmul %61, %63, %cst_21 {dimension_numbers = #tpu.dot_dimension_numbers<[1], [1], [0], [0], [0, 0, 1, 0], [], []>} : vector<16x128xbf16>, vector<16x128xbf16>, vector<16x16xf32> -> vector<16x16xf32>
    %cst_22 = arith.constant dense<0xFF800000> : vector<16xf32>
    %67 = vector.multi_reduction <maximumf>, %66, %cst_22 [1] : vector<16x16xf32> to vector<16xf32>
    %68 = vector.shape_cast %67 : vector<16xf32> to vector<16x1xf32>
    %69 = vector.broadcast %68 : vector<16x1xf32> to vector<16x16xf32>
    %70 = arith.subf %66, %69 : vector<16x16xf32>
    %71 = math.exp %70 : vector<16x16xf32>
    %cst_23 = arith.constant dense<0.000000e+00> : vector<16xf32>
    %72 = vector.multi_reduction <add>, %71, %cst_23 [1] : vector<16x16xf32> to vector<16xf32>
    %73 = vector.shape_cast %72 : vector<16xf32> to vector<16x1xf32>
    %74 = tpu.reciprocal %73 {approx = true} : vector<16x1xf32> -> vector<16x1xf32>
    %75 = vector.broadcast %74 : vector<16x1xf32> to vector<16x16xf32>
    %76 = arith.mulf %71, %75 : vector<16x16xf32>
    %77 = arith.truncf %76 : vector<16x16xf32> to vector<16x16xbf16>
    %cst_24 = arith.constant dense<0.000000e+00> : vector<16x128xf32>
    %78 = tpu.matmul %77, %65, %cst_24 {dimension_numbers = #tpu.dot_dimension_numbers<[1], [0], [0], [1], [0, 0, 1, 1], [], []>} : vector<16x16xbf16>, vector<16x128xbf16>, vector<16x128xf32> -> vector<16x128xf32>
    %79 = arith.truncf %78 : vector<16x128xf32> to vector<16x128xbf16>
    %c0_25 = arith.constant 0 : index
    %c128 = arith.constant 128 : index
    %80 = vector.load %arg15[%c0_25, %c128] : memref<16x256xbf16, #tpu.memory_space<vmem>>, vector<16x128xbf16>
    tpu.vector_store %arg15[%c0_25, %c128], %79 {strides = array<i32>} : memref<16x256xbf16, #tpu.memory_space<vmem>>, vector<16x128xbf16>,
    %c0_26 = arith.constant 0 : index
    %c0_27 = arith.constant 0 : index
    %81 = vector.load %arg15[%c0_26, %c0_27] : memref<16x256xbf16, #tpu.memory_space<vmem>>, vector<16x256xbf16>
    %c0_28 = arith.constant 0 : index
    %c0_29 = arith.constant 0 : index
    %82 = vector.load %arg6[%c0_28, %c0_29] : memref<256x256xbf16, #tpu.memory_space<vmem>>, vector<256x256xbf16>
    %cst_30 = arith.constant dense<0.000000e+00> : vector<16x256xf32>
    %83 = tpu.matmul %81, %82, %cst_30 {dimension_numbers = #tpu.dot_dimension_numbers<[1], [0], [0], [1], [0, 0, 1, 1], [], []>} : vector<16x256xbf16>, vector<256x256xbf16>, vector<16x256xf32> -> vector<16x256xf32>
    %84 = arith.addf %1, %83 : vector<16x256xf32>
    %c0_31 = arith.constant 0 : index
    %c0_32 = arith.constant 0 : index
    %85 = vector.load %arg7[%c0_31, %c0_32] : memref<1x256xf32, #tpu.memory_space<vmem>>, vector<1x256xf32>
    %86 = vector.shape_cast %85 : vector<1x256xf32> to vector<256xf32>
    %87 = vector.shape_cast %86 : vector<256xf32> to vector<1x256xf32>
    %88 = vector.broadcast %87 : vector<1x256xf32> to vector<16x256xf32>
    %89 = arith.addf %84, %88 : vector<16x256xf32>
    %c0_33 = arith.constant 0 : index
    %c0_34 = arith.constant 0 : index
    %90 = vector.load %arg8[%c0_33, %c0_34] : memref<1x256xf32, #tpu.memory_space<vmem>>, vector<1x256xf32>
    %91 = vector.shape_cast %90 : vector<1x256xf32> to vector<256xf32>
    %c0_35 = arith.constant 0 : index
    %c0_36 = arith.constant 0 : index
    %92 = vector.load %arg9[%c0_35, %c0_36] : memref<1x256xf32, #tpu.memory_space<vmem>>, vector<1x256xf32>
    %93 = vector.shape_cast %92 : vector<1x256xf32> to vector<256xf32>
    %cst_37 = arith.constant dense<0.000000e+00> : vector<16xf32>
    %94 = vector.multi_reduction <add>, %89, %cst_37 [1] : vector<16x256xf32> to vector<16xf32>
    %95 = vector.shape_cast %94 : vector<16xf32> to vector<16x1xf32>
    %cst_38 = arith.constant 3.906250e-03 : f32
    %96 = vector.broadcast %cst_38 : f32 to vector<16x1xf32>
    %97 = arith.mulf %95, %96 : vector<16x1xf32>
    %98 = vector.broadcast %97 : vector<16x1xf32> to vector<16x256xf32>
    %99 = arith.subf %89, %98 : vector<16x256xf32>
    %100 = arith.mulf %99, %99 : vector<16x256xf32>
    %cst_39 = arith.constant dense<0.000000e+00> : vector<16xf32>
    %101 = vector.multi_reduction <add>, %100, %cst_39 [1] : vector<16x256xf32> to vector<16xf32>
    %102 = vector.shape_cast %101 : vector<16xf32> to vector<16x1xf32>
    %cst_40 = arith.constant 3.906250e-03 : f32
    %103 = vector.broadcast %cst_40 : f32 to vector<16x1xf32>
    %104 = arith.mulf %102, %103 : vector<16x1xf32>
    %cst_41 = arith.constant 9.99999974E-6 : f32
    %105 = vector.broadcast %cst_41 : f32 to vector<16x1xf32>
    %106 = arith.addf %104, %105 : vector<16x1xf32>
    %107 = math.rsqrt %106 : vector<16x1xf32>
    %108 = vector.broadcast %107 : vector<16x1xf32> to vector<16x256xf32>
    %109 = arith.mulf %99, %108 : vector<16x256xf32>
    %110 = vector.shape_cast %91 : vector<256xf32> to vector<1x256xf32>
    %111 = vector.broadcast %110 : vector<1x256xf32> to vector<16x256xf32>
    %112 = arith.mulf %109, %111 : vector<16x256xf32>
    %113 = vector.shape_cast %93 : vector<256xf32> to vector<1x256xf32>
    %114 = vector.broadcast %113 : vector<1x256xf32> to vector<16x256xf32>
    %115 = arith.addf %112, %114 : vector<16x256xf32>
    %116 = arith.truncf %115 : vector<16x256xf32> to vector<16x256xbf16>
    %c0_42 = arith.constant 0 : index
    %c0_43 = arith.constant 0 : index
    %117 = vector.load %arg10[%c0_42, %c0_43] : memref<256x1024xbf16, #tpu.memory_space<vmem>>, vector<256x1024xbf16>
    %cst_44 = arith.constant dense<0.000000e+00> : vector<16x1024xf32>
    %118 = tpu.matmul %116, %117, %cst_44 {dimension_numbers = #tpu.dot_dimension_numbers<[1], [0], [0], [1], [0, 0, 1, 1], [], []>} : vector<16x256xbf16>, vector<256x1024xbf16>, vector<16x1024xf32> -> vector<16x1024xf32>
    %c0_45 = arith.constant 0 : index
    %c0_46 = arith.constant 0 : index
    %119 = vector.load %arg11[%c0_45, %c0_46] : memref<1x1024xf32, #tpu.memory_space<vmem>>, vector<1x1024xf32>
    %120 = vector.shape_cast %119 : vector<1x1024xf32> to vector<1024xf32>
    %121 = vector.shape_cast %120 : vector<1024xf32> to vector<1x1024xf32>
    %122 = vector.broadcast %121 : vector<1x1024xf32> to vector<16x1024xf32>
    %123 = arith.addf %118, %122 : vector<16x1024xf32>
    %cst_47 = arith.constant 5.000000e-01 : f32
    %124 = vector.broadcast %cst_47 : f32 to vector<16x1024xf32>
    %125 = arith.mulf %124, %123 : vector<16x1024xf32>
    %cst_48 = arith.constant 0.707106769 : f32
    %126 = vector.broadcast %cst_48 : f32 to vector<16x1024xf32>
    %127 = arith.mulf %123, %126 : vector<16x1024xf32>
    %128 = math.erf %127 : vector<16x1024xf32>
    %cst_49 = arith.constant 1.000000e+00 : f32
    %129 = vector.broadcast %cst_49 : f32 to vector<16x1024xf32>
    %130 = arith.addf %129, %128 : vector<16x1024xf32>
    %131 = arith.mulf %125, %130 : vector<16x1024xf32>
    %132 = arith.truncf %131 : vector<16x1024xf32> to vector<16x1024xbf16>
    %c0_50 = arith.constant 0 : index
    %c0_51 = arith.constant 0 : index
    %133 = vector.load %arg12[%c0_50, %c0_51] : memref<1024x256xbf16, #tpu.memory_space<vmem>>, vector<1024x256xbf16>
    %cst_52 = arith.constant dense<0.000000e+00> : vector<16x256xf32>
    %134 = tpu.matmul %132, %133, %cst_52 {dimension_numbers = #tpu.dot_dimension_numbers<[1], [0], [0], [1], [0, 0, 1, 1], [], []>} : vector<16x1024xbf16>, vector<1024x256xbf16>, vector<16x256xf32> -> vector<16x256xf32>
    %c0_53 = arith.constant 0 : index
    %c0_54 = arith.constant 0 : index
    %135 = vector.load %arg13[%c0_53, %c0_54] : memref<1x256xf32, #tpu.memory_space<vmem>>, vector<1x256xf32>
    %136 = vector.shape_cast %135 : vector<1x256xf32> to vector<256xf32>
    %137 = vector.shape_cast %136 : vector<256xf32> to vector<1x256xf32>
    %138 = vector.broadcast %137 : vector<1x256xf32> to vector<16x256xf32>
    %139 = arith.addf %134, %138 : vector<16x256xf32>
    %140 = arith.addf %89, %139 : vector<16x256xf32>
    %c0_55 = arith.constant 0 : index
    %c0_56 = arith.constant 0 : index
    %c0_57 = arith.constant 0 : index
    %141 = vector.load %arg14[%c0_55, %c0_56, %c0_57] : memref<1x16x256xf32, #tpu.memory_space<vmem>>, vector<1x16x256xf32>
    %142 = vector.shape_cast %141 : vector<1x16x256xf32> to vector<16x256xf32>
    %143 = vector.shape_cast %140 : vector<16x256xf32> to vector<1x16x256xf32>
    tpu.vector_store %arg14[%c0_55, %c0_56, %c0_57], %143 {strides = array<i32>} : memref<1x16x256xf32, #tpu.memory_space<vmem>>, vector<1x16x256xf32>,
    return
  }
  func.func @transform_0(%arg0: i32) -> (i32, i32, i32) {
    %c0_i32 = arith.constant 0 : i32
    %c0_i32_0 = arith.constant 0 : i32
    %c0_i32_1 = arith.constant 0 : i32
    return %arg0, %c0_i32, %c0_i32_0 : i32, i32, i32
  }
  func.func @transform_1(%arg0: i32) -> (i32, i32) {
    %c0_i32 = arith.constant 0 : i32
    %c0_i32_0 = arith.constant 0 : i32
    %c0_i32_1 = arith.constant 0 : i32
    return %c0_i32, %c0_i32_0 : i32, i32
  }
  func.func @transform_2(%arg0: i32) -> (i32, i32) {
    %c0_i32 = arith.constant 0 : i32
    %c0_i32_0 = arith.constant 0 : i32
    %c0_i32_1 = arith.constant 0 : i32
    return %c0_i32, %c0_i32_0 : i32, i32
  }
  func.func @transform_3(%arg0: i32) -> (i32, i32) {
    %c0_i32 = arith.constant 0 : i32
    %c0_i32_0 = arith.constant 0 : i32
    %c0_i32_1 = arith.constant 0 : i32
    return %c0_i32, %c0_i32_0 : i32, i32
  }
  func.func @transform_4(%arg0: i32) -> (i32, i32) {
    %c0_i32 = arith.constant 0 : i32
    %c0_i32_0 = arith.constant 0 : i32
    %c0_i32_1 = arith.constant 0 : i32
    return %c0_i32, %c0_i32_0 : i32, i32
  }
  func.func @transform_5(%arg0: i32) -> (i32, i32) {
    %c0_i32 = arith.constant 0 : i32
    %c0_i32_0 = arith.constant 0 : i32
    %c0_i32_1 = arith.constant 0 : i32
    return %c0_i32, %c0_i32_0 : i32, i32
  }
  func.func @transform_6(%arg0: i32) -> (i32, i32) {
    %c0_i32 = arith.constant 0 : i32
    %c0_i32_0 = arith.constant 0 : i32
    %c0_i32_1 = arith.constant 0 : i32
    return %c0_i32, %c0_i32_0 : i32, i32
  }
  func.func @transform_7(%arg0: i32) -> (i32, i32) {
    %c0_i32 = arith.constant 0 : i32
    %c0_i32_0 = arith.constant 0 : i32
    %c0_i32_1 = arith.constant 0 : i32
    return %c0_i32, %c0_i32_0 : i32, i32
  }
  func.func @transform_8(%arg0: i32) -> (i32, i32) {
    %c0_i32 = arith.constant 0 : i32
    %c0_i32_0 = arith.constant 0 : i32
    %c0_i32_1 = arith.constant 0 : i32
    return %c0_i32, %c0_i32_0 : i32, i32
  }
  func.func @transform_9(%arg0: i32) -> (i32, i32) {
    %c0_i32 = arith.constant 0 : i32
    %c0_i32_0 = arith.constant 0 : i32
    %c0_i32_1 = arith.constant 0 : i32
    return %c0_i32, %c0_i32_0 : i32, i32
  }
  func.func @transform_10(%arg0: i32) -> (i32, i32) {
    %c0_i32 = arith.constant 0 : i32
    %c0_i32_0 = arith.constant 0 : i32
    %c0_i32_1 = arith.constant 0 : i32
    return %c0_i32, %c0_i32_0 : i32, i32
  }
  func.func @transform_11(%arg0: i32) -> (i32, i32) {
    %c0_i32 = arith.constant 0 : i32
    %c0_i32_0 = arith.constant 0 : i32
    %c0_i32_1 = arith.constant 0 : i32
    return %c0_i32, %c0_i32_0 : i32, i32
  }
  func.func @transform_12(%arg0: i32) -> (i32, i32) {
    %c0_i32 = arith.constant 0 : i32
    %c0_i32_0 = arith.constant 0 : i32
    %c0_i32_1 = arith.constant 0 : i32
    return %c0_i32, %c0_i32_0 : i32, i32
  }
  func.func @transform_13(%arg0: i32) -> (i32, i32, i32) {
    %c0_i32 = arith.constant 0 : i32
    %c0_i32_0 = arith.constant 0 : i32
    %c0_i32_1 = arith.constant 0 : i32
    return %arg0, %c0_i32, %c0_i32_0 : i32, i32, i32
  }
}

</mosaic_0001>

<llo_original>
// kernel: tpu_custom_call.1
$region0: #{tpu_custom_call.1}
  #allocation0 [shape = 'u32[]', space=smem, size = 0x4, offset = 0x4, fixed_abs, tag = 'smem constant byte address 0x4 - core index']
  #allocation1 [shape = 'u32[72,128]{1,0:T(1,128)}', space=vmem, size = 0x9000, scoped, tag = 'internal scratch']
  #allocation2 [shape = 'bf16[16,256]{1,0:T(8,128)(2,1)}', space=vmem, size = 0x2000, scoped, tag = 'scratch operand']
  %s0 = inlined_call_operand.hbm [shape: f32[2,16,256], index: 0, kind: input, shape index: {}]
  %s1 = inlined_call_operand.hbm [shape: f32[1,256], index: 1, kind: input, shape index: {}]
  %s2 = inlined_call_operand.hbm [shape: f32[1,256], index: 2, kind: input, shape index: {}]
  %s3 = inlined_call_operand.hbm [shape: bf16[256,768], index: 3, kind: input, shape index: {}]
  %s4 = inlined_call_operand.hbm [shape: f32[1,768], index: 4, kind: input, shape index: {}]
  %s5 = inlined_call_operand.hbm [shape: bf16[256,256], index: 5, kind: input, shape index: {}]
  %s6 = inlined_call_operand.hbm [shape: f32[1,256], index: 6, kind: input, shape index: {}]
  %s7 = inlined_call_operand.hbm [shape: f32[1,256], index: 7, kind: input, shape index: {}]
  %s8 = inlined_call_operand.hbm [shape: f32[1,256], index: 8, kind: input, shape index: {}]
  %s9 = inlined_call_operand.hbm [shape: bf16[256,1024], index: 9, kind: input, shape index: {}]
  %s10 = inlined_call_operand.vmem [shape: f32[1,1024], index: 10, kind: input, shape index: {}]
  %s11 = inlined_call_operand.hbm [shape: bf16[1024,256], index: 11, kind: input, shape index: {}]
  %s12 = inlined_call_operand.vmem [shape: f32[1,256], index: 12, kind: input, shape index: {}]
  %s13 = inlined_call_operand.hbm [shape: f32[2,16,256], index: 13, kind: output, shape index: {}]
  %s14 = sld [smem:[#allocation0]]
  $region129: #{tpu_custom_call.1} parent=0
    _
  %s16 = ssub.s32 1, %s14
  %s17 = scalar_select 0, %s16, %s14
  $region1: #{tpu_custom_call.1} parent=0
    #allocation3 [shape = 'u8[32768]{0}', space=vmem, size = 0x8000, scoped, tag = 'input window, operand 0']
    #allocation4 [shape = 's32[2]{0}', space=sflag, size = 0x8, scoped, tag = 'scoped memory for tpu_custom_call.1']
    #allocation5 [shape = 's32[2]{0}', space=sflag, size = 0x8, scoped, tag = 'scoped memory for tpu_custom_call.1']
    #allocation6 [shape = 'u8[1024]{0}', space=vmem, size = 0x400, scoped, tag = 'input window, operand 1, single buffered']
    #allocation7 [shape = 's32[1]{0}', space=sflag, size = 0x4, scoped, tag = 'scoped memory for tpu_custom_call.1']
    #allocation8 [shape = 'u8[1024]{0}', space=vmem, size = 0x400, scoped, tag = 'input window, operand 2, single buffered']
    #allocation9 [shape = 'u8[393216]{0}', space=vmem, size = 0x60000, scoped, tag = 'input window, operand 3, single buffered']
    #allocation10 [shape = 's32[1]{0}', space=sflag, size = 0x4, scoped, tag = 'scoped memory for tpu_custom_call.1']
    #allocation11 [shape = 'u8[3072]{0}', space=vmem, size = 0xc00, scoped, tag = 'input window, operand 4, single buffered']
    #allocation12 [shape = 'u8[131072]{0}', space=vmem, size = 0x20000, scoped, tag = 'input window, operand 5, single buffered']
    #allocation13 [shape = 's32[1]{0}', space=sflag, size = 0x4, scoped, tag = 'scoped memory for tpu_custom_call.1']
    #allocation14 [shape = 'u8[1024]{0}', space=vmem, size = 0x400, scoped, tag = 'input window, operand 6, single buffered']
    #allocation15 [shape = 'u8[1024]{0}', space=vmem, size = 0x400, scoped, tag = 'input window, operand 7, single buffered']
    #allocation16 [shape = 's32[1]{0}', space=sflag, size = 0x4, scoped, tag = 'scoped memory for tpu_custom_call.1']
    #allocation17 [shape = 'u8[1024]{0}', space=vmem, size = 0x400, scoped, tag = 'input window, operand 8, single buffered']
    #allocation18 [shape = 'u8[524288]{0}', space=vmem, size = 0x80000, scoped, tag = 'input window, operand 9, single buffered']
    #allocation19 [shape = 's32[1]{0}', space=sflag, size = 0x4, scoped, tag = 'scoped memory for tpu_custom_call.1']
    #allocation20 [shape = 'u8[524288]{0}', space=vmem, size = 0x80000, scoped, tag = 'input window, operand 11, single buffered']
    #allocation21 [shape = 'u8[32768]{0}', space=vmem, size = 0x8000, scoped, tag = 'output window, operand 0']
    %18 = vsyncpa [#allocation4], 0
    %s19 = scalar_lea.sflag [#allocation4], 1
    %20 = vsyncpa %s19, 0
    %21 = vsyncpa [#allocation7], 0
    %22 = vsyncpa [#allocation10], 0
    %23 = vsyncpa [#allocation13], 0
    %24 = vsyncpa [#allocation16], 0
    %25 = vsyncpa [#allocation19], 0
    %26 = vsyncpa [#allocation5], 0
    %s27 = scalar_lea.sflag [#allocation5], 1
    %28 = vsyncpa %s27, 0
    loop: start=0, step=1, limit=4
    $region2: #{tpu_custom_call.1} parent=1 // loop_pre_header
      _
    $region3: #{tpu_custom_call.1} parent=1 // loop_header
      %s30 = sphi 0, %s34
      %p31 = scmp.ge.s32.totalorder %s30, 4
      %s40 = sphi 0, %s42
      %s43 = sphi 0, %s40
      %s44 = sphi 0, %s43
      %s60 = sphi 0, %s44
      %s64 = sphi 0, %s64
      %s66 = sphi 0, %s64
      %s67 = sphi 0, %s66
      %s81 = sphi 0, %s67
      %s85 = sphi 0, %s85
      %s87 = sphi 0, %s85
      %s88 = sphi 0, %s87
      %s102 = sphi 0, %s88
      %s106 = sphi 0, %s106
      %s108 = sphi 0, %s106
      %s109 = sphi 0, %s108
      %s123 = sphi 0, %s109
      %s127 = sphi 0, %s127
      %s129 = sphi 0, %s127
      %s130 = sphi 0, %s129
      %s144 = sphi 0, %s130
      %s148 = sphi 0, %s148
      %s150 = sphi 0, %s148
      %s151 = sphi 0, %s150
      %s165 = sphi 0, %s151
      %s169 = sphi 0, %s169
      %s171 = sphi 0, %s169
      %s172 = sphi 0, %s171
      %s186 = sphi 0, %s172
      %s190 = sphi 0, %s190
      %s192 = sphi 0, %s190
      %s193 = sphi 0, %s192
      %s207 = sphi 0, %s193
      %s211 = sphi 0, %s211
      %s213 = sphi 0, %s211
      %s214 = sphi 0, %s213
      %s228 = sphi 0, %s214
      %s232 = sphi 0, %s232
      %s234 = sphi 0, %s232
      %s235 = sphi 0, %s234
      %s249 = sphi 0, %s235
      %s253 = sphi 0, %s253
      %s255 = sphi 0, %s253
      %s256 = sphi 0, %s255
      %s270 = sphi 0, %s256
      %s274 = sphi 0, %s274
      %s276 = sphi 0, %s274
      %s277 = sphi 0, %s276
      %s291 = sphi 0, %s277
      %s295 = sphi 0, %s295
      %s297 = sphi 0, %s295
      %s298 = sphi 0, %s297
      %s312 = sphi 0, %s298
      %s318 = sphi 0, %s320
      %s321 = sphi 0, %s318
      %s322 = sphi 0, %s321
      %s338 = sphi 0, %s322
    $region4: #{tpu_custom_call.1} parent=1 // loop_header_branch
      %33 = sbr.rel (%p31) target = $region8
    $region5: #{tpu_custom_call.1} parent=1 // loop_body
      %s35 = ssub.s32 %s30, 1
      %s36 = ssub.s32 %s30, 2
      %s37 = sadd.s32 %s30, 1
      %s38 = ssub.s32 %s30, %s37
      %p39 = scmp.eq.s32.totalorder %s38, 0
      %s41 = sadd.s32 %s40, 1
      %s42 = scalar_select %p39, %s40, %s41
      %p45 = pneg %p39
      %p46 = scmp.eq.s32.totalorder %s30, 1
      %p47 = por %p45, %p46
      %p48 = scmp.ne.s32.totalorder %s40, %s43
      %p49 = scmp.eq.s32.totalorder %s30, 0
      %p50 = por %p48, %p49
      %p51 = scmp.ne.s32.totalorder %s40, %s43
      %p52 = scmp.eq.s32.totalorder %s35, 1
      %p53 = por %p51, %p52
      %p54 = scmp.ne.s32.totalorder %s43, %s44
      %p55 = scmp.eq.s32.totalorder %s35, 0
      %p56 = por %p54, %p55
      %p57 = scmp.ne.s32.totalorder %s43, %s44
      %p58 = scmp.eq.s32.totalorder %s36, 1
      %p59 = por %p57, %p58
      %p61 = scmp.ne.s32.totalorder %s44, %s60
      %p62 = scmp.eq.s32.totalorder %s36, 0
      %p63 = por %p61, %p62
      %s65 = sadd.s32 %s64, 1
      %p68 = scmp.eq.s32.totalorder %s30, 1
      %p69 = scmp.ne.s32.totalorder %s64, %s66
      %p70 = scmp.eq.s32.totalorder %s30, 0
      %p71 = por %p69, %p70
      %p72 = scmp.ne.s32.totalorder %s64, %s66
      %p73 = scmp.eq.s32.totalorder %s35, 1
      %p74 = por %p72, %p73
      %p75 = scmp.ne.s32.totalorder %s66, %s67
      %p76 = scmp.eq.s32.totalorder %s35, 0
      %p77 = por %p75, %p76
      %p78 = scmp.ne.s32.totalorder %s66, %s67
      %p79 = scmp.eq.s32.totalorder %s36, 1
      %p80 = por %p78, %p79
      %p82 = scmp.ne.s32.totalorder %s67, %s81
      %p83 = scmp.eq.s32.totalorder %s36, 0
      %p84 = por %p82, %p83
      %s86 = sadd.s32 %s85, 1
      %p89 = scmp.eq.s32.totalorder %s30, 1
      %p90 = scmp.ne.s32.totalorder %s85, %s87
      %p91 = scmp.eq.s32.totalorder %s30, 0
      %p92 = por %p90, %p91
      %p93 = scmp.ne.s32.totalorder %s85, %s87
      %p94 = scmp.eq.s32.totalorder %s35, 1
      %p95 = por %p93, %p94
      %p96 = scmp.ne.s32.totalorder %s87, %s88
      %p97 = scmp.eq.s32.totalorder %s35, 0
      %p98 = por %p96, %p97
      %p99 = scmp.ne.s32.totalorder %s87, %s88
      %p100 = scmp.eq.s32.totalorder %s36, 1
      %p101 = por %p99, %p100
      %p103 = scmp.ne.s32.totalorder %s88, %s102
      %p104 = scmp.eq.s32.totalorder %s36, 0
      %p105 = por %p103, %p104
      %s107 = sadd.s32 %s106, 1
      %p110 = scmp.eq.s32.totalorder %s30, 1
      %p111 = scmp.ne.s32.totalorder %s106, %s108
      %p112 = scmp.eq.s32.totalorder %s30, 0
      %p113 = por %p111, %p112
      %p114 = scmp.ne.s32.totalorder %s106, %s108
      %p115 = scmp.eq.s32.totalorder %s35, 1
      %p116 = por %p114, %p115
      %p117 = scmp.ne.s32.totalorder %s108, %s109
      %p118 = scmp.eq.s32.totalorder %s35, 0
      %p119 = por %p117, %p118
      %p120 = scmp.ne.s32.totalorder %s108, %s109
      %p121 = scmp.eq.s32.totalorder %s36, 1
      %p122 = por %p120, %p121
      %p124 = scmp.ne.s32.totalorder %s109, %s123
      %p125 = scmp.eq.s32.totalorder %s36, 0
      %p126 = por %p124, %p125
      %s128 = sadd.s32 %s127, 1
      %p131 = scmp.eq.s32.totalorder %s30, 1
      %p132 = scmp.ne.s32.totalorder %s127, %s129
      %p133 = scmp.eq.s32.totalorder %s30, 0
      %p134 = por %p132, %p133
      %p135 = scmp.ne.s32.totalorder %s127, %s129
      %p136 = scmp.eq.s32.totalorder %s35, 1
      %p137 = por %p135, %p136
      %p138 = scmp.ne.s32.totalorder %s129, %s130
      %p139 = scmp.eq.s32.totalorder %s35, 0
      %p140 = por %p138, %p139
      %p141 = scmp.ne.s32.totalorder %s129, %s130
      %p142 = scmp.eq.s32.totalorder %s36, 1
      %p143 = por %p141, %p142
      %p145 = scmp.ne.s32.totalorder %s130, %s144
      %p146 = scmp.eq.s32.totalorder %s36, 0
      %p147 = por %p145, %p146
      %s149 = sadd.s32 %s148, 1
      %p152 = scmp.eq.s32.totalorder %s30, 1
      %p153 = scmp.ne.s32.totalorder %s148, %s150
      %p154 = scmp.eq.s32.totalorder %s30, 0
      %p155 = por %p153, %p154
      %p156 = scmp.ne.s32.totalorder %s148, %s150
      %p157 = scmp.eq.s32.totalorder %s35, 1
      %p158 = por %p156, %p157
      %p159 = scmp.ne.s32.totalorder %s150, %s151
      %p160 = scmp.eq.s32.totalorder %s35, 0
      %p161 = por %p159, %p160
      %p162 = scmp.ne.s32.totalorder %s150, %s151
      %p163 = scmp.eq.s32.totalorder %s36, 1
      %p164 = por %p162, %p163
      %p166 = scmp.ne.s32.totalorder %s151, %s165
      %p167 = scmp.eq.s32.totalorder %s36, 0
      %p168 = por %p166, %p167
      %s170 = sadd.s32 %s169, 1
      %p173 = scmp.eq.s32.totalorder %s30, 1
      %p174 = scmp.ne.s32.totalorder %s169, %s171
      %p175 = scmp.eq.s32.totalorder %s30, 0
      %p176 = por %p174, %p175
      %p177 = scmp.ne.s32.totalorder %s169, %s171
      %p178 = scmp.eq.s32.totalorder %s35, 1
      %p179 = por %p177, %p178
      %p180 = scmp.ne.s32.totalorder %s171, %s172
      %p181 = scmp.eq.s32.totalorder %s35, 0
      %p182 = por %p180, %p181
      %p183 = scmp.ne.s32.totalorder %s171, %s172
      %p184 = scmp.eq.s32.totalorder %s36, 1
      %p185 = por %p183, %p184
      %p187 = scmp.ne.s32.totalorder %s172, %s186
      %p188 = scmp.eq.s32.totalorder %s36, 0
      %p189 = por %p187, %p188
      %s191 = sadd.s32 %s190, 1
      %p194 = scmp.eq.s32.totalorder %s30, 1
      %p195 = scmp.ne.s32.totalorder %s190, %s192
      %p196 = scmp.eq.s32.totalorder %s30, 0
      %p197 = por %p195, %p196
      %p198 = scmp.ne.s32.totalorder %s190, %s192
      %p199 = scmp.eq.s32.totalorder %s35, 1
      %p200 = por %p198, %p199
      %p201 = scmp.ne.s32.totalorder %s192, %s193
      %p202 = scmp.eq.s32.totalorder %s35, 0
      %p203 = por %p201, %p202
      %p204 = scmp.ne.s32.totalorder %s192, %s193
      %p205 = scmp.eq.s32.totalorder %s36, 1
      %p206 = por %p204, %p205
      %p208 = scmp.ne.s32.totalorder %s193, %s207
      %p209 = scmp.eq.s32.totalorder %s36, 0
      %p210 = por %p208, %p209
      %s212 = sadd.s32 %s211, 1
      %p215 = scmp.eq.s32.totalorder %s30, 1
      %p216 = scmp.ne.s32.totalorder %s211, %s213
      %p217 = scmp.eq.s32.totalorder %s30, 0
      %p218 = por %p216, %p217
      %p219 = scmp.ne.s32.totalorder %s211, %s213
      %p220 = scmp.eq.s32.totalorder %s35, 1
      %p221 = por %p219, %p220
      %p222 = scmp.ne.s32.totalorder %s213, %s214
      %p223 = scmp.eq.s32.totalorder %s35, 0
      %p224 = por %p222, %p223
      %p225 = scmp.ne.s32.totalorder %s213, %s214
      %p226 = scmp.eq.s32.totalorder %s36, 1
      %p227 = por %p225, %p226
      %p229 = scmp.ne.s32.totalorder %s214, %s228
      %p230 = scmp.eq.s32.totalorder %s36, 0
      %p231 = por %p229, %p230
      %s233 = sadd.s32 %s232, 1
      %p236 = scmp.eq.s32.totalorder %s30, 1
      %p237 = scmp.ne.s32.totalorder %s232, %s234
      %p238 = scmp.eq.s32.totalorder %s30, 0
      %p239 = por %p237, %p238
      %p240 = scmp.ne.s32.totalorder %s232, %s234
      %p241 = scmp.eq.s32.totalorder %s35, 1
      %p242 = por %p240, %p241
      %p243 = scmp.ne.s32.totalorder %s234, %s235
      %p244 = scmp.eq.s32.totalorder %s35, 0
      %p245 = por %p243, %p244
      %p246 = scmp.ne.s32.totalorder %s234, %s235
      %p247 = scmp.eq.s32.totalorder %s36, 1
      %p248 = por %p246, %p247
      %p250 = scmp.ne.s32.totalorder %s235, %s249
      %p251 = scmp.eq.s32.totalorder %s36, 0
      %p252 = por %p250, %p251
      %s254 = sadd.s32 %s253, 1
      %p257 = scmp.eq.s32.totalorder %s30, 1
      %p258 = scmp.ne.s32.totalorder %s253, %s255
      %p259 = scmp.eq.s32.totalorder %s30, 0
      %p260 = por %p258, %p259
      %p261 = scmp.ne.s32.totalorder %s253, %s255
      %p262 = scmp.eq.s32.totalorder %s35, 1
      %p263 = por %p261, %p262
      %p264 = scmp.ne.s32.totalorder %s255, %s256
      %p265 = scmp.eq.s32.totalorder %s35, 0
      %p266 = por %p264, %p265
      %p267 = scmp.ne.s32.totalorder %s255, %s256
      %p268 = scmp.eq.s32.totalorder %s36, 1
      %p269 = por %p267, %p268
      %p271 = scmp.ne.s32.totalorder %s256, %s270
      %p272 = scmp.eq.s32.totalorder %s36, 0
      %p273 = por %p271, %p272
      %s275 = sadd.s32 %s274, 1
      %p278 = scmp.eq.s32.totalorder %s30, 1
      %p279 = scmp.ne.s32.totalorder %s274, %s276
      %p280 = scmp.eq.s32.totalorder %s30, 0
      %p281 = por %p279, %p280
      %p282 = scmp.ne.s32.totalorder %s274, %s276
      %p283 = scmp.eq.s32.totalorder %s35, 1
      %p284 = por %p282, %p283
      %p285 = scmp.ne.s32.totalorder %s276, %s277
      %p286 = scmp.eq.s32.totalorder %s35, 0
      %p287 = por %p285, %p286
      %p288 = scmp.ne.s32.totalorder %s276, %s277
      %p289 = scmp.eq.s32.totalorder %s36, 1
      %p290 = por %p288, %p289
      %p292 = scmp.ne.s32.totalorder %s277, %s291
      %p293 = scmp.eq.s32.totalorder %s36, 0
      %p294 = por %p292, %p293
      %s296 = sadd.s32 %s295, 1
      %p299 = scmp.eq.s32.totalorder %s30, 1
      %p300 = scmp.ne.s32.totalorder %s295, %s297
      %p301 = scmp.eq.s32.totalorder %s30, 0
      %p302 = por %p300, %p301
      %p303 = scmp.ne.s32.totalorder %s295, %s297
      %p304 = scmp.eq.s32.totalorder %s35, 1
      %p305 = por %p303, %p304
      %p306 = scmp.ne.s32.totalorder %s297, %s298
      %p307 = scmp.eq.s32.totalorder %s35, 0
      %p308 = por %p306, %p307
      %p309 = scmp.ne.s32.totalorder %s297, %s298
      %p310 = scmp.eq.s32.totalorder %s36, 1
      %p311 = por %p309, %p310
      %p313 = scmp.ne.s32.totalorder %s298, %s312
      %p314 = scmp.eq.s32.totalorder %s36, 0
      %p315 = por %p313, %p314
      %s316 = ssub.s32 %s30, %s37
      %p317 = scmp.eq.s32.totalorder %s316, 0
      %s319 = sadd.s32 %s318, 1
      %s320 = scalar_select %p317, %s318, %s319
      %p323 = pneg %p317
      %p324 = scmp.eq.s32.totalorder %s30, 1
      %p325 = por %p323, %p324
      %p326 = scmp.ne.s32.totalorder %s318, %s321
      %p327 = scmp.eq.s32.totalorder %s30, 0
      %p328 = por %p326, %p327
      %p329 = scmp.ne.s32.totalorder %s318, %s321
      %p330 = scmp.eq.s32.totalorder %s35, 1
      %p331 = por %p329, %p330
      %p332 = scmp.ne.s32.totalorder %s321, %s322
      %p333 = scmp.eq.s32.totalorder %s35, 0
      %p334 = por %p332, %p333
      %p335 = scmp.ne.s32.totalorder %s321, %s322
      %p336 = scmp.eq.s32.totalorder %s36, 1
      %p337 = por %p335, %p336
      %p339 = scmp.ne.s32.totalorder %s322, %s338
      %p340 = scmp.eq.s32.totalorder %s36, 0
      %p341 = por %p339, %p340
      %p342 = scmp.le.s32.totalorder 1, %s30
      %p343 = scmp.lt.s32.totalorder %s30, 3
      %p344 = pnand %p342, %p343
      %p345 = pneg %p344
      // Predicated region
      $region9: #{tpu_custom_call.1} parent=5 // pred_check
        _
      $region10: #{tpu_custom_call.1} parent=5 // pred_check_branch
        %347 = sbr.rel (%p344) target = $region12
      $region11: #{tpu_custom_call.1} parent=5 // pred_region
        %s348 = ssub.s32 %s30, 1
        // Predicated region
        $region13: #{tpu_custom_call.1} parent=11 // pred_check
          %p349 = pneg %p77
        $region14: #{tpu_custom_call.1} parent=11 // pred_check_branch
          %351 = sbr.rel (%p349) target = $region16
        $region15: #{tpu_custom_call.1} parent=11 // pred_region
          %353 = vsyncadd [#allocation7], 0
          %s355 = sshll.u32 %s1, 4
          %s356 = int_to_ptr.hbm [resolvable:$true] %s355
          %s357 = sshll.u32 [#allocation6], 4
          %s358 = int_to_ptr.vmem [resolvable:$true] %s357
          %360 = dma.hbm_to_vmem [thread:$0]  %s356, 32, %s358, [#allocation7]
        $region16: #{tpu_custom_call.1} parent=11 // pred_fallthru
          _
        // Predicated region
        $region17: #{tpu_custom_call.1} parent=11 // pred_check
          %p361 = pneg %p98
        $region18: #{tpu_custom_call.1} parent=11 // pred_check_branch
          %363 = sbr.rel (%p361) target = $region20
        $region19: #{tpu_custom_call.1} parent=11 // pred_region
          %365 = vsyncadd [#allocation7], 0
          %s367 = sshll.u32 %s2, 4
          %s368 = int_to_ptr.hbm [resolvable:$true] %s367
          %s369 = sshll.u32 [#allocation8], 4
          %s370 = int_to_ptr.vmem [resolvable:$true] %s369
          %372 = dma.hbm_to_vmem [thread:$0]  %s368, 32, %s370, [#allocation7]
        $region20: #{tpu_custom_call.1} parent=11 // pred_fallthru
          _
        // Predicated region
        $region21: #{tpu_custom_call.1} parent=11 // pred_check
          %p373 = pneg %p119
        $region22: #{tpu_custom_call.1} parent=11 // pred_check_branch
          %375 = sbr.rel (%p373) target = $region24
        $region23: #{tpu_custom_call.1} parent=11 // pred_region
          %377 = vsyncadd [#allocation10], 0
          %s378 = sshll.u32 %s3, 4
          %s379 = int_to_ptr.hbm [resolvable:$true] %s378
          %s380 = sshll.u32 [#allocation9], 4
          %s381 = int_to_ptr.vmem [resolvable:$true] %s380
          %386 = dma.hbm_to_vmem [thread:$0]  %s379, 12288, %s381, [#allocation10], 384, 384, 24
        $region24: #{tpu_custom_call.1} parent=11 // pred_fallthru
          _
        // Predicated region
        $region25: #{tpu_custom_call.1} parent=11 // pred_check
          %p387 = pneg %p140
        $region26: #{tpu_custom_call.1} parent=11 // pred_check_branch
          %389 = sbr.rel (%p387) target = $region28
        $region27: #{tpu_custom_call.1} parent=11 // pred_region
          %391 = vsyncadd [#allocation10], 0
          %s393 = sshll.u32 %s4, 4
          %s394 = int_to_ptr.hbm [resolvable:$true] %s393
          %s395 = sshll.u32 [#allocation11], 4
          %s396 = int_to_ptr.vmem [resolvable:$true] %s395
          %398 = dma.hbm_to_vmem [thread:$0]  %s394, 96, %s396, [#allocation10]
        $region28: #{tpu_custom_call.1} parent=11 // pred_fallthru
          _
        // Predicated region
        $region29: #{tpu_custom_call.1} parent=11 // pred_check
          %p399 = pneg %p161
        $region30: #{tpu_custom_call.1} parent=11 // pred_check_branch
          %401 = sbr.rel (%p399) target = $region32
        $region31: #{tpu_custom_call.1} parent=11 // pred_region
          %403 = vsyncadd [#allocation13], 0
          %s404 = sshll.u32 %s5, 4
          %s405 = int_to_ptr.hbm [resolvable:$true] %s404
          %s406 = sshll.u32 [#allocation12], 4
          %s407 = int_to_ptr.vmem [resolvable:$true] %s406
          %412 = dma.hbm_to_vmem [thread:$0]  %s405, 4096, %s407, [#allocation13], 128, 128, 8
        $region32: #{tpu_custom_call.1} parent=11 // pred_fallthru
          _
        // Predicated region
        $region33: #{tpu_custom_call.1} parent=11 // pred_check
          %p413 = pneg %p182
        $region34: #{tpu_custom_call.1} parent=11 // pred_check_branch
          %415 = sbr.rel (%p413) target = $region36
        $region35: #{tpu_custom_call.1} parent=11 // pred_region
          %417 = vsyncadd [#allocation13], 0
          %s419 = sshll.u32 %s6, 4
          %s420 = int_to_ptr.hbm [resolvable:$true] %s419
          %s421 = sshll.u32 [#allocation14], 4
          %s422 = int_to_ptr.vmem [resolvable:$true] %s421
          %424 = dma.hbm_to_vmem [thread:$0]  %s420, 32, %s422, [#allocation13]
        $region36: #{tpu_custom_call.1} parent=11 // pred_fallthru
          _
        // Predicated region
        $region37: #{tpu_custom_call.1} parent=11 // pred_check
          %p425 = pneg %p203
        $region38: #{tpu_custom_call.1} parent=11 // pred_check_branch
          %427 = sbr.rel (%p425) target = $region40
        $region39: #{tpu_custom_call.1} parent=11 // pred_region
          %429 = vsyncadd [#allocation16], 0
          %s431 = sshll.u32 %s7, 4
          %s432 = int_to_ptr.hbm [resolvable:$true] %s431
          %s433 = sshll.u32 [#allocation15], 4
          %s434 = int_to_ptr.vmem [resolvable:$true] %s433
          %436 = dma.hbm_to_vmem [thread:$0]  %s432, 32, %s434, [#allocation16]
        $region40: #{tpu_custom_call.1} parent=11 // pred_fallthru
          _
        // Predicated region
        $region41: #{tpu_custom_call.1} parent=11 // pred_check
          %p437 = pneg %p224
        $region42: #{tpu_custom_call.1} parent=11 // pred_check_branch
          %439 = sbr.rel (%p437) target = $region44
        $region43: #{tpu_custom_call.1} parent=11 // pred_region
          %441 = vsyncadd [#allocation16], 0
          %s443 = sshll.u32 %s8, 4
          %s444 = int_to_ptr.hbm [resolvable:$true] %s443
          %s445 = sshll.u32 [#allocation17], 4
          %s446 = int_to_ptr.vmem [resolvable:$true] %s445
          %448 = dma.hbm_to_vmem [thread:$0]  %s444, 32, %s446, [#allocation16]
        $region44: #{tpu_custom_call.1} parent=11 // pred_fallthru
          _
        // Predicated region
        $region45: #{tpu_custom_call.1} parent=11 // pred_check
          %p449 = pneg %p245
        $region46: #{tpu_custom_call.1} parent=11 // pred_check_branch
          %451 = sbr.rel (%p449) target = $region48
        $region47: #{tpu_custom_call.1} parent=11 // pred_region
          %453 = vsyncadd [#allocation19], 0
          %s454 = sshll.u32 %s9, 4
          %s455 = int_to_ptr.hbm [resolvable:$true] %s454
          %s456 = sshll.u32 [#allocation18], 4
          %s457 = int_to_ptr.vmem [resolvable:$true] %s456
          %462 = dma.hbm_to_vmem [thread:$0]  %s455, 16384, %s457, [#allocation19], 512, 512, 32
        $region48: #{tpu_custom_call.1} parent=11 // pred_fallthru
          _
        // Predicated region
        $region49: #{tpu_custom_call.1} parent=11 // pred_check
          %p463 = pneg %p266
        $region50: #{tpu_custom_call.1} parent=11 // pred_check_branch
          %465 = sbr.rel (%p463) target = $region52
        $region51: #{tpu_custom_call.1} parent=11 // pred_region
          _
        $region52: #{tpu_custom_call.1} parent=11 // pred_fallthru
          _
        // Predicated region
        $region53: #{tpu_custom_call.1} parent=11 // pred_check
          %p466 = pneg %p287
        $region54: #{tpu_custom_call.1} parent=11 // pred_check_branch
          %468 = sbr.rel (%p466) target = $region56
        $region55: #{tpu_custom_call.1} parent=11 // pred_region
          %470 = vsyncadd [#allocation19], 0
          %s471 = sshll.u32 %s11, 4
          %s472 = int_to_ptr.hbm [resolvable:$true] %s471
          %s473 = sshll.u32 [#allocation20], 4
          %s474 = int_to_ptr.vmem [resolvable:$true] %s473
          %479 = dma.hbm_to_vmem [thread:$0]  %s472, 16384, %s474, [#allocation19], 128, 128, 8
        $region56: #{tpu_custom_call.1} parent=11 // pred_fallthru
          _
        // Predicated region
        $region57: #{tpu_custom_call.1} parent=11 // pred_check
          %p480 = pneg %p308
        $region58: #{tpu_custom_call.1} parent=11 // pred_check_branch
          %482 = sbr.rel (%p480) target = $region60
        $region59: #{tpu_custom_call.1} parent=11 // pred_region
          _
        $region60: #{tpu_custom_call.1} parent=11 // pred_fallthru
          _
      $region12: #{tpu_custom_call.1} parent=5 // pred_fallthru
        _
      %p483 = scmp.lt.s32.totalorder %s30, 2
      // Predicated region
      $region61: #{tpu_custom_call.1} parent=5 // pred_check
        %p484 = pneg %p483
      $region62: #{tpu_custom_call.1} parent=5 // pred_check_branch
        %486 = sbr.rel (%p484) target = $region64
      $region63: #{tpu_custom_call.1} parent=5 // pred_region
        // Predicated region
        $region65: #{tpu_custom_call.1} parent=63 // pred_check
          %p487 = pneg %p50
        $region66: #{tpu_custom_call.1} parent=63 // pred_check_branch
          %489 = sbr.rel (%p487) target = $region68
        $region67: #{tpu_custom_call.1} parent=63 // pred_region
          %s490 = sand.u32 %s40, 1
          %s491 = scalar_lea.sflag [#allocation4], %s490
          %s492 = sand.u32 %s40, 1
          %s493 = smul.addr %s492, 32
          %s494 = scalar_lea.vmem [#allocation3], %s493
          %496 = vsyncadd %s491, 0
          %s497 = smul.addr %s30, 4
          %s498 = smul.addr %s497, 8
          %s499 = scalar_lea.hbm %s0, %s498
          %s500 = sshll.u32 %s499, 4
          %s501 = int_to_ptr.hbm [resolvable:$true] %s500
          %s502 = sshll.u32 %s494, 4
          %s503 = int_to_ptr.vmem [resolvable:$true] %s502
          %508 = dma.hbm_to_vmem [thread:$0]  %s501, 512, %s503, %s491, 256, 256, 16
        $region68: #{tpu_custom_call.1} parent=63 // pred_fallthru
          _
      $region64: #{tpu_custom_call.1} parent=5 // pred_fallthru
        _
      %p509 = scmp.le.s32.totalorder 1, %s30
      %p510 = scmp.lt.s32.totalorder %s30, 3
      %p511 = pnand %p509, %p510
      %p512 = pneg %p511
      // Predicated region
      $region69: #{tpu_custom_call.1} parent=5 // pred_check
        _
      $region70: #{tpu_custom_call.1} parent=5 // pred_check_branch
        %514 = sbr.rel (%p511) target = $region72
      $region71: #{tpu_custom_call.1} parent=5 // pred_region
        %s515 = ssub.s32 %s30, 1
        %s516 = sand.u32 %s43, 1
        %s517 = scalar_lea.sflag [#allocation4], %s516
        %s518 = sand.u32 %s43, 1
        %s519 = smul.addr %s518, 32
        %s520 = scalar_lea.vmem [#allocation3], %s519
        // Predicated region
        $region73: #{tpu_custom_call.1} parent=71 // pred_check
          %p521 = pneg %p56
        $region74: #{tpu_custom_call.1} parent=71 // pred_check_branch
          %523 = sbr.rel (%p521) target = $region76
        $region75: #{tpu_custom_call.1} parent=71 // pred_region
          %525 = dma.done %s517, 512
        $region76: #{tpu_custom_call.1} parent=71 // pred_fallthru
          _
        // Predicated region
        $region77: #{tpu_custom_call.1} parent=71 // pred_check
          %p526 = pneg %p77
        $region78: #{tpu_custom_call.1} parent=71 // pred_check_branch
          %528 = sbr.rel (%p526) target = $region80
        $region79: #{tpu_custom_call.1} parent=71 // pred_region
          %530 = dma.done [#allocation7], 32
        $region80: #{tpu_custom_call.1} parent=71 // pred_fallthru
          _
        // Predicated region
        $region81: #{tpu_custom_call.1} parent=71 // pred_check
          %p531 = pneg %p98
        $region82: #{tpu_custom_call.1} parent=71 // pred_check_branch
          %533 = sbr.rel (%p531) target = $region84
        $region83: #{tpu_custom_call.1} parent=71 // pred_region
          %535 = dma.done [#allocation7], 32
        $region84: #{tpu_custom_call.1} parent=71 // pred_fallthru
          _
        // Predicated region
        $region85: #{tpu_custom_call.1} parent=71 // pred_check
          %p536 = pneg %p119
        $region86: #{tpu_custom_call.1} parent=71 // pred_check_branch
          %538 = sbr.rel (%p536) target = $region88
        $region87: #{tpu_custom_call.1} parent=71 // pred_region
          %540 = dma.done [#allocation10], 12288
        $region88: #{tpu_custom_call.1} parent=71 // pred_fallthru
          _
        // Predicated region
        $region89: #{tpu_custom_call.1} parent=71 // pred_check
          %p541 = pneg %p140
        $region90: #{tpu_custom_call.1} parent=71 // pred_check_branch
          %543 = sbr.rel (%p541) target = $region92
        $region91: #{tpu_custom_call.1} parent=71 // pred_region
          %545 = dma.done [#allocation10], 96
        $region92: #{tpu_custom_call.1} parent=71 // pred_fallthru
          _
        // Predicated region
        $region93: #{tpu_custom_call.1} parent=71 // pred_check
          %p546 = pneg %p161
        $region94: #{tpu_custom_call.1} parent=71 // pred_check_branch
          %548 = sbr.rel (%p546) target = $region96
        $region95: #{tpu_custom_call.1} parent=71 // pred_region
          %550 = dma.done [#allocation13], 4096
        $region96: #{tpu_custom_call.1} parent=71 // pred_fallthru
          _
        // Predicated region
        $region97: #{tpu_custom_call.1} parent=71 // pred_check
          %p551 = pneg %p182
        $region98: #{tpu_custom_call.1} parent=71 // pred_check_branch
          %553 = sbr.rel (%p551) target = $region100
        $region99: #{tpu_custom_call.1} parent=71 // pred_region
          %555 = dma.done [#allocation13], 32
        $region100: #{tpu_custom_call.1} parent=71 // pred_fallthru
          _
        // Predicated region
        $region101: #{tpu_custom_call.1} parent=71 // pred_check
          %p556 = pneg %p203
        $region102: #{tpu_custom_call.1} parent=71 // pred_check_branch
          %558 = sbr.rel (%p556) target = $region104
        $region103: #{tpu_custom_call.1} parent=71 // pred_region
          %560 = dma.done [#allocation16], 32
        $region104: #{tpu_custom_call.1} parent=71 // pred_fallthru
          _
        // Predicated region
        $region105: #{tpu_custom_call.1} parent=71 // pred_check
          %p561 = pneg %p224
        $region106: #{tpu_custom_call.1} parent=71 // pred_check_branch
          %563 = sbr.rel (%p561) target = $region108
        $region107: #{tpu_custom_call.1} parent=71 // pred_region
          %565 = dma.done [#allocation16], 32
        $region108: #{tpu_custom_call.1} parent=71 // pred_fallthru
          _
        // Predicated region
        $region109: #{tpu_custom_call.1} parent=71 // pred_check
          %p566 = pneg %p245
        $region110: #{tpu_custom_call.1} parent=71 // pred_check_branch
          %568 = sbr.rel (%p566) target = $region112
        $region111: #{tpu_custom_call.1} parent=71 // pred_region
          %570 = dma.done [#allocation19], 16384
        $region112: #{tpu_custom_call.1} parent=71 // pred_fallthru
          _
        // Predicated region
        $region113: #{tpu_custom_call.1} parent=71 // pred_check
          %p571 = pneg %p287
        $region114: #{tpu_custom_call.1} parent=71 // pred_check_branch
          %573 = sbr.rel (%p571) target = $region116
        $region115: #{tpu_custom_call.1} parent=71 // pred_region
          %575 = dma.done [#allocation19], 16384
        $region116: #{tpu_custom_call.1} parent=71 // pred_fallthru
          _
        %s576 = sand.u32 %s43, 1
        %s577 = scalar_lea.sflag [#allocation4], %s576
        %s578 = sand.u32 %s43, 1
        %s579 = smul.addr %s578, 32
        %s580 = scalar_lea.vmem [#allocation3], %s579
        %p581 = pneg %p56
        %p582 = pneg %p53
        %p583 = pneg %p77
        %p584 = pneg %p74
        %p585 = pneg %p98
        %p586 = pneg %p95
        %p587 = pneg %p119
        %p588 = pneg %p116
        %p589 = pneg %p140
        %p590 = pneg %p137
        %p591 = pneg %p161
        %p592 = pneg %p158
        %p593 = pneg %p182
        %p594 = pneg %p179
        %p595 = pneg %p203
        %p596 = pneg %p200
        %p597 = pneg %p224
        %p598 = pneg %p221
        %p599 = pneg %p245
        %p600 = pneg %p242
        %p601 = pneg %p266
        %p602 = pneg %p263
        %p603 = pneg %p287
        %p604 = pneg %p284
        %p605 = pneg %p308
        %p606 = pneg %p305
        %p607 = pneg %p334
        %p608 = pneg %p331
        %s609 = sand.u32 %s321, 1
        %s610 = scalar_lea.sflag [#allocation5], %s609
        %s611 = sand.u32 %s321, 1
        %s612 = smul.addr %s611, 32
        %s613 = scalar_lea.vmem [#allocation21], %s612
        %v615 = vld [vmem:[%s520] sm:$0xff]
        %v616 = vld [vmem:[%s520 + $0x8] sm:$0xff]
        %v617 = vld [vmem:[%s520 + $0x10] sm:$0xff]
        %v618 = vld [vmem:[%s520 + $0x18] sm:$0xff]
        %v619 = vld [vmem:[#allocation6] sm:$0x3]
        %v620 = vld [vmem:[#allocation8] sm:$0x3]
        %v621 = vadd.f32 %v615, %v616
        %622 = vadd.xlane.f32.xlu0 %v621
        %v623 = vpop.xlane.xlu0 %622
        %v624 = vadd.f32 %v617, %v618
        %625 = vadd.xlane.f32.xlu0 %v624
        %v626 = vpop.xlane.xlu0 %625
        %v627 = vmul.f32 %v623, 0.00390625
        %v628 = vmul.f32 %v626, 0.00390625
        %v629 = vsub.f32 %v615, %v627
        %v630 = vsub.f32 %v616, %v627
        %v631 = vsub.f32 %v617, %v628
        %v632 = vsub.f32 %v618, %v628
        %v633 = vmul.f32 %v629, %v629
        %v634 = vmul.f32 %v630, %v630
        %v635 = vmul.f32 %v631, %v631
        %v636 = vmul.f32 %v632, %v632
        %v637 = vadd.f32 %v633, %v634
        %638 = vadd.xlane.f32.xlu0 %v637
        %v639 = vpop.xlane.xlu0 %638
        %v640 = vadd.f32 %v635, %v636
        %641 = vadd.xlane.f32.xlu0 %v640
        %v642 = vpop.xlane.xlu0 %641
        %v643 = vmul.f32 %v639, 0.00390625
        %v644 = vmul.f32 %v642, 0.00390625
        %v645 = vadd.f32 %v643, 1e-05
        %v646 = vadd.f32 %v644, 1e-05
        %v647 = vrsqrt.pop %v645
        %v648 = vmul.f32 %v647, %v645
        %v649 = vmul.f32 %v648, %v647
        %v650 = vmul.f32 0.5, %v649
        %v651 = vsub.f32 1.5, %v650
        %v652 = vmul.f32 %v647, %v651
        %vm653 = vweird.f32 %v645
        %vm654 = vweird.f32 %v647
        %vm655 = vmor %vm653, %vm654
        %v656 = vsel %vm655, %v647, %v652
        %v657 = vrsqrt.pop %v646
        %v658 = vmul.f32 %v657, %v646
        %v659 = vmul.f32 %v658, %v657
        %v660 = vmul.f32 0.5, %v659
        %v661 = vsub.f32 1.5, %v660
        %v662 = vmul.f32 %v657, %v661
        %vm663 = vweird.f32 %v646
        %vm664 = vweird.f32 %v657
        %vm665 = vmor %vm663, %vm664
        %v666 = vsel %vm665, %v657, %v662
        %v667 = vmul.f32 %v629, %v656
        %v668 = vmul.f32 %v630, %v656
        %v669 = vmul.f32 %v631, %v666
        %v670 = vmul.f32 %v632, %v666
        %v672 = vperm.slane %v619, 0
        %v673 = vperm.slane %v619, 1
        %v676 = vmul.f32 %v667, %v672
        %v677 = vmul.f32 %v668, %v673
        %v678 = vmul.f32 %v669, %v672
        %v679 = vmul.f32 %v670, %v673
        %v681 = vperm.slane %v620, 0
        %v682 = vperm.slane %v620, 1
        %v685 = vadd.f32 %v676, %v681
        %v686 = vadd.f32 %v677, %v682
        %v687 = vadd.f32 %v678, %v681
        %v688 = vadd.f32 %v679, %v682
        %v689 = vpack.c.bf16 %v687, %v685
        %v690 = vpack.c.bf16 %v688, %v686
        %v691 = vld [vmem:[#allocation9] sm:$0xff]
        %v692 = vld [vmem:[#allocation9 + $0x8] sm:$0xff]
        %v693 = vld [vmem:[#allocation9 + $0x10] sm:$0xff]
        %v694 = vld [vmem:[#allocation9 + $0x18] sm:$0xff]
        %v695 = vld [vmem:[#allocation9 + $0x20] sm:$0xff]
        %v696 = vld [vmem:[#allocation9 + $0x28] sm:$0xff]
        %v697 = vld [vmem:[#allocation9 + $0x30] sm:$0xff]
        %v698 = vld [vmem:[#allocation9 + $0x38] sm:$0xff]
        %v699 = vld [vmem:[#allocation9 + $0x40] sm:$0xff]
        %v700 = vld [vmem:[#allocation9 + $0x48] sm:$0xff]
        %v701 = vld [vmem:[#allocation9 + $0x50] sm:$0xff]
        %v702 = vld [vmem:[#allocation9 + $0x58] sm:$0xff]
        %v703 = vld [vmem:[#allocation9 + $0x60] sm:$0xff]
        %v704 = vld [vmem:[#allocation9 + $0x68] sm:$0xff]
        %v705 = vld [vmem:[#allocation9 + $0x70] sm:$0xff]
        %v706 = vld [vmem:[#allocation9 + $0x78] sm:$0xff]
        %v707 = vld [vmem:[#allocation9 + $0x80] sm:$0xff]
        %v708 = vld [vmem:[#allocation9 + $0x88] sm:$0xff]
        %v709 = vld [vmem:[#allocation9 + $0x90] sm:$0xff]
        %v710 = vld [vmem:[#allocation9 + $0x98] sm:$0xff]
        %v711 = vld [vmem:[#allocation9 + $0xa0] sm:$0xff]
        %v712 = vld [vmem:[#allocation9 + $0xa8] sm:$0xff]
        %v713 = vld [vmem:[#allocation9 + $0xb0] sm:$0xff]
        %v714 = vld [vmem:[#allocation9 + $0xb8] sm:$0xff]
        %v715 = vld [vmem:[#allocation9 + $0xc0] sm:$0xff]
        %v716 = vld [vmem:[#allocation9 + $0xc8] sm:$0xff]
        %v717 = vld [vmem:[#allocation9 + $0xd0] sm:$0xff]
        %v718 = vld [vmem:[#allocation9 + $0xd8] sm:$0xff]
        %v719 = vld [vmem:[#allocation9 + $0xe0] sm:$0xff]
        %v720 = vld [vmem:[#allocation9 + $0xe8] sm:$0xff]
        %v721 = vld [vmem:[#allocation9 + $0xf0] sm:$0xff]
        %v722 = vld [vmem:[#allocation9 + $0xf8] sm:$0xff]
        %v723 = vld [vmem:[#allocation9 + $0x100] sm:$0xff]
        %v724 = vld [vmem:[#allocation9 + $0x108] sm:$0xff]
        %v725 = vld [vmem:[#allocation9 + $0x110] sm:$0xff]
        %v726 = vld [vmem:[#allocation9 + $0x118] sm:$0xff]
        %v727 = vld [vmem:[#allocation9 + $0x120] sm:$0xff]
        %v728 = vld [vmem:[#allocation9 + $0x128] sm:$0xff]
        %v729 = vld [vmem:[#allocation9 + $0x130] sm:$0xff]
        %v730 = vld [vmem:[#allocation9 + $0x138] sm:$0xff]
        %v731 = vld [vmem:[#allocation9 + $0x140] sm:$0xff]
        %v732 = vld [vmem:[#allocation9 + $0x148] sm:$0xff]
        %v733 = vld [vmem:[#allocation9 + $0x150] sm:$0xff]
        %v734 = vld [vmem:[#allocation9 + $0x158] sm:$0xff]
        %v735 = vld [vmem:[#allocation9 + $0x160] sm:$0xff]
        %v736 = vld [vmem:[#allocation9 + $0x168] sm:$0xff]
        %v737 = vld [vmem:[#allocation9 + $0x170] sm:$0xff]
        %v738 = vld [vmem:[#allocation9 + $0x178] sm:$0xff]
        %v739 = vld [vmem:[#allocation9 + $0x180] sm:$0xff]
        %v740 = vld [vmem:[#allocation9 + $0x188] sm:$0xff]
        %v741 = vld [vmem:[#allocation9 + $0x190] sm:$0xff]
        %v742 = vld [vmem:[#allocation9 + $0x198] sm:$0xff]
        %v743 = vld [vmem:[#allocation9 + $0x1a0] sm:$0xff]
        %v744 = vld [vmem:[#allocation9 + $0x1a8] sm:$0xff]
        %v745 = vld [vmem:[#allocation9 + $0x1b0] sm:$0xff]
        %v746 = vld [vmem:[#allocation9 + $0x1b8] sm:$0xff]
        %v747 = vld [vmem:[#allocation9 + $0x1c0] sm:$0xff]
        %v748 = vld [vmem:[#allocation9 + $0x1c8] sm:$0xff]
        %v749 = vld [vmem:[#allocation9 + $0x1d0] sm:$0xff]
        %v750 = vld [vmem:[#allocation9 + $0x1d8] sm:$0xff]
        %v751 = vld [vmem:[#allocation9 + $0x1e0] sm:$0xff]
        %v752 = vld [vmem:[#allocation9 + $0x1e8] sm:$0xff]
        %v753 = vld [vmem:[#allocation9 + $0x1f0] sm:$0xff]
        %v754 = vld [vmem:[#allocation9 + $0x1f8] sm:$0xff]
        %v755 = vld [vmem:[#allocation9 + $0x200] sm:$0xff]
        %v756 = vld [vmem:[#allocation9 + $0x208] sm:$0xff]
        %v757 = vld [vmem:[#allocation9 + $0x210] sm:$0xff]
        %v758 = vld [vmem:[#allocation9 + $0x218] sm:$0xff]
        %v759 = vld [vmem:[#allocation9 + $0x220] sm:$0xff]
        %v760 = vld [vmem:[#allocation9 + $0x228] sm:$0xff]
        %v761 = vld [vmem:[#allocation9 + $0x230] sm:$0xff]
        %v762 = vld [vmem:[#allocation9 + $0x238] sm:$0xff]
        %v763 = vld [vmem:[#allocation9 + $0x240] sm:$0xff]
        %v764 = vld [vmem:[#allocation9 + $0x248] sm:$0xff]
        %v765 = vld [vmem:[#allocation9 + $0x250] sm:$0xff]
        %v766 = vld [vmem:[#allocation9 + $0x258] sm:$0xff]
        %v767 = vld [vmem:[#allocation9 + $0x260] sm:$0xff]
        %v768 = vld [vmem:[#allocation9 + $0x268] sm:$0xff]
        %v769 = vld [vmem:[#allocation9 + $0x270] sm:$0xff]
        %v770 = vld [vmem:[#allocation9 + $0x278] sm:$0xff]
        %v771 = vld [vmem:[#allocation9 + $0x280] sm:$0xff]
        %v772 = vld [vmem:[#allocation9 + $0x288] sm:$0xff]
        %v773 = vld [vmem:[#allocation9 + $0x290] sm:$0xff]
        %v774 = vld [vmem:[#allocation9 + $0x298] sm:$0xff]
        %v775 = vld [vmem:[#allocation9 + $0x2a0] sm:$0xff]
        %v776 = vld [vmem:[#allocation9 + $0x2a8] sm:$0xff]
        %v777 = vld [vmem:[#allocation9 + $0x2b0] sm:$0xff]
        %v778 = vld [vmem:[#allocation9 + $0x2b8] sm:$0xff]
        %v779 = vld [vmem:[#allocation9 + $0x2c0] sm:$0xff]
        %v780 = vld [vmem:[#allocation9 + $0x2c8] sm:$0xff]
        %v781 = vld [vmem:[#allocation9 + $0x2d0] sm:$0xff]
        %v782 = vld [vmem:[#allocation9 + $0x2d8] sm:$0xff]
        %v783 = vld [vmem:[#allocation9 + $0x2e0] sm:$0xff]
        %v784 = vld [vmem:[#allocation9 + $0x2e8] sm:$0xff]
        %v785 = vld [vmem:[#allocation9 + $0x2f0] sm:$0xff]
        %v786 = vld [vmem:[#allocation9 + $0x2f8] sm:$0xff]
        %v787 = vld [vmem:[#allocation11] sm:$0x3f]
        %v789 = vperm.slane %v787, 0
        %v790 = vperm.slane %v787, 1
        %v791 = vperm.slane %v787, 2
        %v792 = vperm.slane %v787, 3
        %v793 = vperm.slane %v787, 4
        %v794 = vperm.slane %v787, 5
        %v897 = vunpack.c.l.b16 %v691
        %v898 = vunpack.c.h.b16 %v691
        %v899 = vunpack.c.l.b16 %v692
        %v900 = vunpack.c.h.b16 %v692
        %v901 = vunpack.c.l.b16 %v693
        %v902 = vunpack.c.h.b16 %v693
        %v903 = vunpack.c.l.b16 %v694
        %v904 = vunpack.c.h.b16 %v694
        %v905 = vunpack.c.l.b16 %v695
        %v906 = vunpack.c.h.b16 %v695
        %v907 = vunpack.c.l.b16 %v696
        %v908 = vunpack.c.h.b16 %v696
        %v909 = vunpack.c.l.b16 %v697
        %v910 = vunpack.c.h.b16 %v697
        %v911 = vunpack.c.l.b16 %v698
        %v912 = vunpack.c.h.b16 %v698
        %v913 = vunpack.c.l.b16 %v699
        %v914 = vunpack.c.h.b16 %v699
        %v915 = vunpack.c.l.b16 %v700
        %v916 = vunpack.c.h.b16 %v700
        %v917 = vunpack.c.l.b16 %v701
        %v918 = vunpack.c.h.b16 %v701
        %v919 = vunpack.c.l.b16 %v702
        %v920 = vunpack.c.h.b16 %v702
        %v921 = vunpack.c.l.b16 %v703
        %v922 = vunpack.c.h.b16 %v703
        %v923 = vunpack.c.l.b16 %v704
        %v924 = vunpack.c.h.b16 %v704
        %v925 = vunpack.c.l.b16 %v705
        %v926 = vunpack.c.h.b16 %v705
        %v927 = vunpack.c.l.b16 %v706
        %v928 = vunpack.c.h.b16 %v706
        %v929 = vunpack.c.l.b16 %v707
        %v930 = vunpack.c.h.b16 %v707
        %v931 = vunpack.c.l.b16 %v708
        %v932 = vunpack.c.h.b16 %v708
        %v933 = vunpack.c.l.b16 %v709
        %v934 = vunpack.c.h.b16 %v709
        %v935 = vunpack.c.l.b16 %v710
        %v936 = vunpack.c.h.b16 %v710
        %v937 = vunpack.c.l.b16 %v711
        %v938 = vunpack.c.h.b16 %v711
        %v939 = vunpack.c.l.b16 %v712
        %v940 = vunpack.c.h.b16 %v712
        %v941 = vunpack.c.l.b16 %v713
        %v942 = vunpack.c.h.b16 %v713
        %v943 = vunpack.c.l.b16 %v714
        %v944 = vunpack.c.h.b16 %v714
        %v945 = vunpack.c.l.b16 %v715
        %v946 = vunpack.c.h.b16 %v715
        %v947 = vunpack.c.l.b16 %v716
        %v948 = vunpack.c.h.b16 %v716
        %v949 = vunpack.c.l.b16 %v717
        %v950 = vunpack.c.h.b16 %v717
        %v951 = vunpack.c.l.b16 %v718
        %v952 = vunpack.c.h.b16 %v718
        %v953 = vunpack.c.l.b16 %v719
        %v954 = vunpack.c.h.b16 %v719
        %v955 = vunpack.c.l.b16 %v720
        %v956 = vunpack.c.h.b16 %v720
        %v957 = vunpack.c.l.b16 %v721
        %v958 = vunpack.c.h.b16 %v721
        %v959 = vunpack.c.l.b16 %v722
        %v960 = vunpack.c.h.b16 %v722
        %v961 = vunpack.c.l.b16 %v723
        %v962 = vunpack.c.h.b16 %v723
        %v963 = vunpack.c.l.b16 %v724
        %v964 = vunpack.c.h.b16 %v724
        %v965 = vunpack.c.l.b16 %v725
        %v966 = vunpack.c.h.b16 %v725
        %v967 = vunpack.c.l.b16 %v726
        %v968 = vunpack.c.h.b16 %v726
        %v969 = vunpack.c.l.b16 %v727
        %v970 = vunpack.c.h.b16 %v727
        %v971 = vunpack.c.l.b16 %v728
        %v972 = vunpack.c.h.b16 %v728
        %v973 = vunpack.c.l.b16 %v729
        %v974 = vunpack.c.h.b16 %v729
        %v975 = vunpack.c.l.b16 %v730
        %v976 = vunpack.c.h.b16 %v730
        %v977 = vunpack.c.l.b16 %v731
        %v978 = vunpack.c.h.b16 %v731
        %v979 = vunpack.c.l.b16 %v732
        %v980 = vunpack.c.h.b16 %v732
        %v981 = vunpack.c.l.b16 %v733
        %v982 = vunpack.c.h.b16 %v733
        %v983 = vunpack.c.l.b16 %v734
        %v984 = vunpack.c.h.b16 %v734
        %v985 = vunpack.c.l.b16 %v735
        %v986 = vunpack.c.h.b16 %v735
        %v987 = vunpack.c.l.b16 %v736
        %v988 = vunpack.c.h.b16 %v736
        %v989 = vunpack.c.l.b16 %v737
        %v990 = vunpack.c.h.b16 %v737
        %v991 = vunpack.c.l.b16 %v738
        %v992 = vunpack.c.h.b16 %v738
        %v993 = vunpack.c.l.b16 %v739
        %v994 = vunpack.c.h.b16 %v739
        %v995 = vunpack.c.l.b16 %v740
        %v996 = vunpack.c.h.b16 %v740
        %v997 = vunpack.c.l.b16 %v741
        %v998 = vunpack.c.h.b16 %v741
        %v999 = vunpack.c.l.b16 %v742
        %v1000 = vunpack.c.h.b16 %v742
        %v1001 = vunpack.c.l.b16 %v743
        %v1002 = vunpack.c.h.b16 %v743
        %v1003 = vunpack.c.l.b16 %v744
        %v1004 = vunpack.c.h.b16 %v744
        %v1005 = vunpack.c.l.b16 %v745
        %v1006 = vunpack.c.h.b16 %v745
        %v1007 = vunpack.c.l.b16 %v746
        %v1008 = vunpack.c.h.b16 %v746
        %v1009 = vunpack.c.l.b16 %v747
        %v1010 = vunpack.c.h.b16 %v747
        %v1011 = vunpack.c.l.b16 %v748
        %v1012 = vunpack.c.h.b16 %v748
        %v1013 = vunpack.c.l.b16 %v749
        %v1014 = vunpack.c.h.b16 %v749
        %v1015 = vunpack.c.l.b16 %v750
        %v1016 = vunpack.c.h.b16 %v750
        %v1017 = vunpack.c.l.b16 %v751
        %v1018 = vunpack.c.h.b16 %v751
        %v1019 = vunpack.c.l.b16 %v752
        %v1020 = vunpack.c.h.b16 %v752
        %v1021 = vunpack.c.l.b16 %v753
        %v1022 = vunpack.c.h.b16 %v753
        %v1023 = vunpack.c.l.b16 %v754
        %v1024 = vunpack.c.h.b16 %v754
        %v1025 = vunpack.c.l.b16 %v755
        %v1026 = vunpack.c.h.b16 %v755
        %v1027 = vunpack.c.l.b16 %v756
        %v1028 = vunpack.c.h.b16 %v756
        %v1029 = vunpack.c.l.b16 %v757
        %v1030 = vunpack.c.h.b16 %v757
        %v1031 = vunpack.c.l.b16 %v758
        %v1032 = vunpack.c.h.b16 %v758
        %v1033 = vunpack.c.l.b16 %v759
        %v1034 = vunpack.c.h.b16 %v759
        %v1035 = vunpack.c.l.b16 %v760
        %v1036 = vunpack.c.h.b16 %v760
        %v1037 = vunpack.c.l.b16 %v761
        %v1038 = vunpack.c.h.b16 %v761
        %v1039 = vunpack.c.l.b16 %v762
        %v1040 = vunpack.c.h.b16 %v762
        %v1041 = vunpack.c.l.b16 %v763
        %v1042 = vunpack.c.h.b16 %v763
        %v1043 = vunpack.c.l.b16 %v764
        %v1044 = vunpack.c.h.b16 %v764
        %v1045 = vunpack.c.l.b16 %v765
        %v1046 = vunpack.c.h.b16 %v765
        %v1047 = vunpack.c.l.b16 %v766
        %v1048 = vunpack.c.h.b16 %v766
        %v1049 = vunpack.c.l.b16 %v767
        %v1050 = vunpack.c.h.b16 %v767
        %v1051 = vunpack.c.l.b16 %v768
        %v1052 = vunpack.c.h.b16 %v768
        %v1053 = vunpack.c.l.b16 %v769
        %v1054 = vunpack.c.h.b16 %v769
        %v1055 = vunpack.c.l.b16 %v770
        %v1056 = vunpack.c.h.b16 %v770
        %v1057 = vunpack.c.l.b16 %v771
        %v1058 = vunpack.c.h.b16 %v771
        %v1059 = vunpack.c.l.b16 %v772
        %v1060 = vunpack.c.h.b16 %v772
        %v1061 = vunpack.c.l.b16 %v773
        %v1062 = vunpack.c.h.b16 %v773
        %v1063 = vunpack.c.l.b16 %v774
        %v1064 = vunpack.c.h.b16 %v774
        %v1065 = vunpack.c.l.b16 %v775
        %v1066 = vunpack.c.h.b16 %v775
        %v1067 = vunpack.c.l.b16 %v776
        %v1068 = vunpack.c.h.b16 %v776
        %v1069 = vunpack.c.l.b16 %v777
        %v1070 = vunpack.c.h.b16 %v777
        %v1071 = vunpack.c.l.b16 %v778
        %v1072 = vunpack.c.h.b16 %v778
        %v1073 = vunpack.c.l.b16 %v779
        %v1074 = vunpack.c.h.b16 %v779
        %v1075 = vunpack.c.l.b16 %v780
        %v1076 = vunpack.c.h.b16 %v780
        %v1077 = vunpack.c.l.b16 %v781
        %v1078 = vunpack.c.h.b16 %v781
        %v1079 = vunpack.c.l.b16 %v782
        %v1080 = vunpack.c.h.b16 %v782
        %v1081 = vunpack.c.l.b16 %v783
        %v1082 = vunpack.c.h.b16 %v783
        %v1083 = vunpack.c.l.b16 %v784
        %v1084 = vunpack.c.h.b16 %v784
        %v1085 = vunpack.c.l.b16 %v785
        %v1086 = vunpack.c.h.b16 %v785
        %v1087 = vunpack.c.l.b16 %v786
        %v1088 = vunpack.c.h.b16 %v786
        %v1089 = vpack.c.b16 %v903, %v897
        %v1090 = vpack.c.b16 %v904, %v898
        %v1091 = vpack.c.b16 %v905, %v899
        %v1092 = vpack.c.b16 %v906, %v900
        %v1093 = vpack.c.b16 %v907, %v901
        %v1094 = vpack.c.b16 %v908, %v902
        %v1095 = vpack.c.b16 %v915, %v909
        %v1096 = vpack.c.b16 %v916, %v910
        %v1097 = vpack.c.b16 %v917, %v911
        %v1098 = vpack.c.b16 %v918, %v912
        %v1099 = vpack.c.b16 %v919, %v913
        %v1100 = vpack.c.b16 %v920, %v914
        %v1101 = vpack.c.b16 %v927, %v921
        %v1102 = vpack.c.b16 %v928, %v922
        %v1103 = vpack.c.b16 %v929, %v923
        %v1104 = vpack.c.b16 %v930, %v924
        %v1105 = vpack.c.b16 %v931, %v925
        %v1106 = vpack.c.b16 %v932, %v926
        %v1107 = vpack.c.b16 %v939, %v933
        %v1108 = vpack.c.b16 %v940, %v934
        %v1109 = vpack.c.b16 %v941, %v935
        %v1110 = vpack.c.b16 %v942, %v936
        %v1111 = vpack.c.b16 %v943, %v937
        %v1112 = vpack.c.b16 %v944, %v938
        %v1113 = vpack.c.b16 %v951, %v945
        %v1114 = vpack.c.b16 %v952, %v946
        %v1115 = vpack.c.b16 %v953, %v947
        %v1116 = vpack.c.b16 %v954, %v948
        %v1117 = vpack.c.b16 %v955, %v949
        %v1118 = vpack.c.b16 %v956, %v950
        %v1119 = vpack.c.b16 %v963, %v957
        %v1120 = vpack.c.b16 %v964, %v958
        %v1121 = vpack.c.b16 %v965, %v959
        %v1122 = vpack.c.b16 %v966, %v960
        %v1123 = vpack.c.b16 %v967, %v961
        %v1124 = vpack.c.b16 %v968, %v962
        %v1125 = vpack.c.b16 %v975, %v969
        %v1126 = vpack.c.b16 %v976, %v970
        %v1127 = vpack.c.b16 %v977, %v971
        %v1128 = vpack.c.b16 %v978, %v972
        %v1129 = vpack.c.b16 %v979, %v973
        %v1130 = vpack.c.b16 %v980, %v974
        %v1131 = vpack.c.b16 %v987, %v981
        %v1132 = vpack.c.b16 %v988, %v982
        %v1133 = vpack.c.b16 %v989, %v983
        %v1134 = vpack.c.b16 %v990, %v984
        %v1135 = vpack.c.b16 %v991, %v985
        %v1136 = vpack.c.b16 %v992, %v986
        %v1137 = vpack.c.b16 %v999, %v993
        %v1138 = vpack.c.b16 %v1000, %v994
        %v1139 = vpack.c.b16 %v1001, %v995
        %v1140 = vpack.c.b16 %v1002, %v996
        %v1141 = vpack.c.b16 %v1003, %v997
        %v1142 = vpack.c.b16 %v1004, %v998
        %v1143 = vpack.c.b16 %v1011, %v1005
        %v1144 = vpack.c.b16 %v1012, %v1006
        %v1145 = vpack.c.b16 %v1013, %v1007
        %v1146 = vpack.c.b16 %v1014, %v1008
        %v1147 = vpack.c.b16 %v1015, %v1009
        %v1148 = vpack.c.b16 %v1016, %v1010
        %v1149 = vpack.c.b16 %v1023, %v1017
        %v1150 = vpack.c.b16 %v1024, %v1018
        %v1151 = vpack.c.b16 %v1025, %v1019
        %v1152 = vpack.c.b16 %v1026, %v1020
        %v1153 = vpack.c.b16 %v1027, %v1021
        %v1154 = vpack.c.b16 %v1028, %v1022
        %v1155 = vpack.c.b16 %v1035, %v1029
        %v1156 = vpack.c.b16 %v1036, %v1030
        %v1157 = vpack.c.b16 %v1037, %v1031
        %v1158 = vpack.c.b16 %v1038, %v1032
        %v1159 = vpack.c.b16 %v1039, %v1033
        %v1160 = vpack.c.b16 %v1040, %v1034
        %v1161 = vpack.c.b16 %v1047, %v1041
        %v1162 = vpack.c.b16 %v1048, %v1042
        %v1163 = vpack.c.b16 %v1049, %v1043
        %v1164 = vpack.c.b16 %v1050, %v1044
        %v1165 = vpack.c.b16 %v1051, %v1045
        %v1166 = vpack.c.b16 %v1052, %v1046
        %v1167 = vpack.c.b16 %v1059, %v1053
        %v1168 = vpack.c.b16 %v1060, %v1054
        %v1169 = vpack.c.b16 %v1061, %v1055
        %v1170 = vpack.c.b16 %v1062, %v1056
        %v1171 = vpack.c.b16 %v1063, %v1057
        %v1172 = vpack.c.b16 %v1064, %v1058
        %v1173 = vpack.c.b16 %v1071, %v1065
        %v1174 = vpack.c.b16 %v1072, %v1066
        %v1175 = vpack.c.b16 %v1073, %v1067
        %v1176 = vpack.c.b16 %v1074, %v1068
        %v1177 = vpack.c.b16 %v1075, %v1069
        %v1178 = vpack.c.b16 %v1076, %v1070
        %v1179 = vpack.c.b16 %v1083, %v1077
        %v1180 = vpack.c.b16 %v1084, %v1078
        %v1181 = vpack.c.b16 %v1085, %v1079
        %v1182 = vpack.c.b16 %v1086, %v1080
        %v1183 = vpack.c.b16 %v1087, %v1081
        %v1184 = vpack.c.b16 %v1088, %v1082
        %1281 = vmatpush.bf16.msra.mxu0 %v1131
        %1282 = vmatpush.bf16.msra.mxu0 %v1125
        %1283 = vmatpush.bf16.msra.mxu0 %v1119
        %1284 = vmatpush.bf16.msra.mxu0 %v1113
        %1285 = vmatpush.bf16.msra.mxu0 %v1107
        %1286 = vmatpush.bf16.msra.mxu0 %v1101
        %1287 = vmatpush.bf16.msra.mxu0 %v1095
        %1288 = vmatpush.bf16.msra.mxu0 %v1089
        %1289 = vmatmul.bf16.gmra.mxu0 %v689
        %v1290 = vpop.f32.mrf.mxu0
        %v1291 = vadd.f32 %v789, %v1290
        %v1292 = vpop.f32.mrf.mxu0
        %v1293 = vadd.f32 %v789, %v1292
        %1294 = vdwg.mxu0
        %1295 = vmatpush.bf16.msra.mxu0 %v1179
        %1296 = vmatpush.bf16.msra.mxu0 %v1173
        %1297 = vmatpush.bf16.msra.mxu0 %v1167
        %1298 = vmatpush.bf16.msra.mxu0 %v1161
        %1299 = vmatpush.bf16.msra.mxu0 %v1155
        %1300 = vmatpush.bf16.msra.mxu0 %v1149
        %1301 = vmatpush.bf16.msra.mxu0 %v1143
        %1302 = vmatpush.bf16.msra.mxu0 %v1137
        %1303 = vmatmul.bf16.gmra.mxu0 %v690
        %v1304 = vpop.f32.mrf.mxu0
        %v1305 = vadd.f32 %v1291, %v1304
        %v1306 = vpop.f32.mrf.mxu0
        %v1307 = vadd.f32 %v1293, %v1306
        %1308 = vdwg.mxu0
        %1309 = vmatpush.bf16.msra.mxu0 %v1132
        %1310 = vmatpush.bf16.msra.mxu0 %v1126
        %1311 = vmatpush.bf16.msra.mxu0 %v1120
        %1312 = vmatpush.bf16.msra.mxu0 %v1114
        %1313 = vmatpush.bf16.msra.mxu0 %v1108
        %1314 = vmatpush.bf16.msra.mxu0 %v1102
        %1315 = vmatpush.bf16.msra.mxu0 %v1096
        %1316 = vmatpush.bf16.msra.mxu0 %v1090
        %1317 = vmatmul.bf16.gmra.mxu0 %v689
        %v1318 = vpop.f32.mrf.mxu0
        %v1319 = vadd.f32 %v790, %v1318
        %v1320 = vpop.f32.mrf.mxu0
        %v1321 = vadd.f32 %v790, %v1320
        %1322 = vdwg.mxu0
        %1323 = vmatpush.bf16.msra.mxu0 %v1180
        %1324 = vmatpush.bf16.msra.mxu0 %v1174
        %1325 = vmatpush.bf16.msra.mxu0 %v1168
        %1326 = vmatpush.bf16.msra.mxu0 %v1162
        %1327 = vmatpush.bf16.msra.mxu0 %v1156
        %1328 = vmatpush.bf16.msra.mxu0 %v1150
        %1329 = vmatpush.bf16.msra.mxu0 %v1144
        %1330 = vmatpush.bf16.msra.mxu0 %v1138
        %1331 = vmatmul.bf16.gmra.mxu0 %v690
        %v1332 = vpop.f32.mrf.mxu0
        %v1333 = vadd.f32 %v1319, %v1332
        %v1334 = vpop.f32.mrf.mxu0
        %v1335 = vadd.f32 %v1321, %v1334
        %1336 = vdwg.mxu0
        %1337 = vmatpush.bf16.msra.mxu0 %v1133
        %1338 = vmatpush.bf16.msra.mxu0 %v1127
        %1339 = vmatpush.bf16.msra.mxu0 %v1121
        %1340 = vmatpush.bf16.msra.mxu0 %v1115
        %1341 = vmatpush.bf16.msra.mxu0 %v1109
        %1342 = vmatpush.bf16.msra.mxu0 %v1103
        %1343 = vmatpush.bf16.msra.mxu0 %v1097
        %1344 = vmatpush.bf16.msra.mxu0 %v1091
        %1345 = vmatmul.bf16.gmra.mxu0 %v689
        %v1346 = vpop.f32.mrf.mxu0
        %v1347 = vadd.f32 %v791, %v1346
        %v1348 = vpop.f32.mrf.mxu0
        %v1349 = vadd.f32 %v791, %v1348
        %1350 = vdwg.mxu0
        %1351 = vmatpush.bf16.msra.mxu0 %v1181
        %1352 = vmatpush.bf16.msra.mxu0 %v1175
        %1353 = vmatpush.bf16.msra.mxu0 %v1169
        %1354 = vmatpush.bf16.msra.mxu0 %v1163
        %1355 = vmatpush.bf16.msra.mxu0 %v1157
        %1356 = vmatpush.bf16.msra.mxu0 %v1151
        %1357 = vmatpush.bf16.msra.mxu0 %v1145
        %1358 = vmatpush.bf16.msra.mxu0 %v1139
        %1359 = vmatmul.bf16.gmra.mxu0 %v690
        %v1360 = vpop.f32.mrf.mxu0
        %v1361 = vadd.f32 %v1347, %v1360
        %v1362 = vpop.f32.mrf.mxu0
        %v1363 = vadd.f32 %v1349, %v1362
        %1364 = vdwg.mxu0
        %1365 = vmatpush.bf16.msra.mxu0 %v1134
        %1366 = vmatpush.bf16.msra.mxu0 %v1128
        %1367 = vmatpush.bf16.msra.mxu0 %v1122
        %1368 = vmatpush.bf16.msra.mxu0 %v1116
        %1369 = vmatpush.bf16.msra.mxu0 %v1110
        %1370 = vmatpush.bf16.msra.mxu0 %v1104
        %1371 = vmatpush.bf16.msra.mxu0 %v1098
        %1372 = vmatpush.bf16.msra.mxu0 %v1092
        %1373 = vmatmul.bf16.gmra.mxu0 %v689
        %v1374 = vpop.f32.mrf.mxu0
        %v1375 = vadd.f32 %v792, %v1374
        %v1376 = vpop.f32.mrf.mxu0
        %v1377 = vadd.f32 %v792, %v1376
        %1378 = vdwg.mxu0
        %1379 = vmatpush.bf16.msra.mxu0 %v1182
        %1380 = vmatpush.bf16.msra.mxu0 %v1176
        %1381 = vmatpush.bf16.msra.mxu0 %v1170
        %1382 = vmatpush.bf16.msra.mxu0 %v1164
        %1383 = vmatpush.bf16.msra.mxu0 %v1158
        %1384 = vmatpush.bf16.msra.mxu0 %v1152
        %1385 = vmatpush.bf16.msra.mxu0 %v1146
        %1386 = vmatpush.bf16.msra.mxu0 %v1140
        %1387 = vmatmul.bf16.gmra.mxu0 %v690
        %v1388 = vpop.f32.mrf.mxu0
        %v1389 = vadd.f32 %v1375, %v1388
        %v1390 = vpop.f32.mrf.mxu0
        %v1391 = vadd.f32 %v1377, %v1390
        %1392 = vdwg.mxu0
        %1393 = vmatpush.bf16.msra.mxu0 %v1135
        %1394 = vmatpush.bf16.msra.mxu0 %v1129
        %1395 = vmatpush.bf16.msra.mxu0 %v1123
        %1396 = vmatpush.bf16.msra.mxu0 %v1117
        %1397 = vmatpush.bf16.msra.mxu0 %v1111
        %1398 = vmatpush.bf16.msra.mxu0 %v1105
        %1399 = vmatpush.bf16.msra.mxu0 %v1099
        %1400 = vmatpush.bf16.msra.mxu0 %v1093
        %1401 = vmatmul.bf16.gmra.mxu0 %v689
        %v1402 = vpop.f32.mrf.mxu0
        %v1403 = vadd.f32 %v793, %v1402
        %v1404 = vpop.f32.mrf.mxu0
        %v1405 = vadd.f32 %v793, %v1404
        %1406 = vdwg.mxu0
        %1407 = vmatpush.bf16.msra.mxu0 %v1183
        %1408 = vmatpush.bf16.msra.mxu0 %v1177
        %1409 = vmatpush.bf16.msra.mxu0 %v1171
        %1410 = vmatpush.bf16.msra.mxu0 %v1165
        %1411 = vmatpush.bf16.msra.mxu0 %v1159
        %1412 = vmatpush.bf16.msra.mxu0 %v1153
        %1413 = vmatpush.bf16.msra.mxu0 %v1147
        %1414 = vmatpush.bf16.msra.mxu0 %v1141
        %1415 = vmatmul.bf16.gmra.mxu0 %v690
        %v1416 = vpop.f32.mrf.mxu0
        %v1417 = vadd.f32 %v1403, %v1416
        %v1418 = vpop.f32.mrf.mxu0
        %v1419 = vadd.f32 %v1405, %v1418
        %1420 = vdwg.mxu0
        %1421 = vmatpush.bf16.msra.mxu0 %v1136
        %1422 = vmatpush.bf16.msra.mxu0 %v1130
        %1423 = vmatpush.bf16.msra.mxu0 %v1124
        %1424 = vmatpush.bf16.msra.mxu0 %v1118
        %1425 = vmatpush.bf16.msra.mxu0 %v1112
        %1426 = vmatpush.bf16.msra.mxu0 %v1106
        %1427 = vmatpush.bf16.msra.mxu0 %v1100
        %1428 = vmatpush.bf16.msra.mxu0 %v1094
        %1429 = vmatmul.bf16.gmra.mxu0 %v689
        %v1430 = vpop.f32.mrf.mxu0
        %v1431 = vadd.f32 %v794, %v1430
        %v1432 = vpop.f32.mrf.mxu0
        %v1433 = vadd.f32 %v794, %v1432
        %1434 = vdwg.mxu0
        %1435 = vmatpush.bf16.msra.mxu0 %v1184
        %1436 = vmatpush.bf16.msra.mxu0 %v1178
        %1437 = vmatpush.bf16.msra.mxu0 %v1172
        %1438 = vmatpush.bf16.msra.mxu0 %v1166
        %1439 = vmatpush.bf16.msra.mxu0 %v1160
        %1440 = vmatpush.bf16.msra.mxu0 %v1154
        %1441 = vmatpush.bf16.msra.mxu0 %v1148
        %1442 = vmatpush.bf16.msra.mxu0 %v1142
        %1443 = vmatmul.bf16.gmra.mxu0 %v690
        %v1444 = vpop.f32.mrf.mxu0
        %v1445 = vadd.f32 %v1431, %v1444
        %v1446 = vpop.f32.mrf.mxu0
        %v1447 = vadd.f32 %v1433, %v1446
        %1448 = vdwg.mxu0
        %v1449 = vpack.c.bf16 %v1307, %v1305
        %v1450 = vpack.c.bf16 %v1363, %v1361
        %v1451 = vpack.c.bf16 %v1419, %v1417
        %1452 = vmatpush.bf16.xpose.msra.mxu0 0
        %1453 = vmatpush.bf16.xpose.msra.mxu0 0
        %1454 = vmatpush.bf16.xpose.msra.mxu0 0
        %1455 = vmatpush.bf16.xpose.msra.mxu0 0
        %1456 = vmatpush.bf16.xpose.msra.mxu0 0
        %1457 = vmatpush.bf16.xpose.msra.mxu0 0
        %1458 = vmatpush.bf16.xpose.msra.mxu0 0
        %1459 = vmatpush.bf16.xpose.msra.mxu0 %v1450
        %1460 = vmatmul.bf16.gmra.mxu0 %v1449
        %v1461 = vpop.f32.mrf.mxu0
        %v1462 = vadd.f32 0.0, %v1461
        %v1463 = vpop.f32.mrf.mxu0
        %v1464 = vadd.f32 0.0, %v1463
        %1465 = vdwg.mxu0
        %vm1466 = vcmask 130048
        %v1467 = vsel %vm1466, %v1462, -inf
        %1468 = vmax.xlane.f32.xlu0 %v1467
        %v1469 = vpop.xlane.xlu0 %1468
        %v1470 = vsel %vm1466, %v1464, -inf
        %1471 = vmax.xlane.f32.xlu0 %v1470
        %v1472 = vpop.xlane.xlu0 %1471
        %v1473 = vsub.f32 %v1462, %v1469
        %v1474 = vsub.f32 %v1464, %v1472
        %v1475 = vmul.f32 %v1473, 1.442695
        %v1476 = vpow.pop %v1475
        %v1477 = vmul.f32 %v1474, 1.442695
        %v1478 = vpow.pop %v1477
        %v1479 = vsel %vm1466, %v1476, 0.0
        %1480 = vadd.xlane.f32.xlu0 %v1479
        %v1481 = vpop.xlane.xlu0 %1480
        %v1482 = vsel %vm1466, %v1478, 0.0
        %1483 = vadd.xlane.f32.xlu0 %v1482
        %v1484 = vpop.xlane.xlu0 %1483
        %v1485 = vrcp.pop %v1481
        %v1486 = vrcp.pop %v1484
        %v1487 = vmul.f32 %v1476, %v1485
        %v1488 = vmul.f32 %v1478, %v1486
        %v1489 = vpack.c.bf16 %v1488, %v1487
        %v1491 = vsel %vm1466, %v1489, 0
        %1493 = vmatpush.bf16.msra.mxu0 0
        %1494 = vmatpush.bf16.msra.mxu0 0
        %1495 = vmatpush.bf16.msra.mxu0 0
        %1496 = vmatpush.bf16.msra.mxu0 0
        %1497 = vmatpush.bf16.msra.mxu0 0
        %1498 = vmatpush.bf16.msra.mxu0 0
        %1499 = vmatpush.bf16.msra.mxu0 0
        %1500 = vmatpush.bf16.msra.mxu0 %v1451
        %1501 = vmatmul.bf16.gmra.mxu0 %v1491
        %v1502 = vpop.f32.mrf.mxu0
        %v1503 = vadd.f32 0.0, %v1502
        %v1504 = vpop.f32.mrf.mxu0
        %v1505 = vadd.f32 0.0, %v1504
        %1506 = vdwg.mxu0
        %v1507 = vpack.c.bf16 %v1503, %v1503
        %v1508 = vpack.c.bf16 %v1505, %v1505
        %1509 = vst [vmem:[#allocation2] sm:$0xf] %v1507
        %1510 = vst [vmem:[#allocation2 + $0x8] sm:$0xf] %v1508
        %v1511 = vpack.c.bf16 %v1335, %v1333
        %v1512 = vpack.c.bf16 %v1391, %v1389
        %v1513 = vpack.c.bf16 %v1447, %v1445
        %1514 = vmatpush.bf16.xpose.msra.mxu0 0
        %1515 = vmatpush.bf16.xpose.msra.mxu0 0
        %1516 = vmatpush.bf16.xpose.msra.mxu0 0
        %1517 = vmatpush.bf16.xpose.msra.mxu0 0
        %1518 = vmatpush.bf16.xpose.msra.mxu0 0
        %1519 = vmatpush.bf16.xpose.msra.mxu0 0
        %1520 = vmatpush.bf16.xpose.msra.mxu0 0
        %1521 = vmatpush.bf16.xpose.msra.mxu0 %v1512
        %1522 = vmatmul.bf16.gmra.mxu0 %v1511
        %v1523 = vpop.f32.mrf.mxu0
        %v1524 = vadd.f32 0.0, %v1523
        %v1525 = vpop.f32.mrf.mxu0
        %v1526 = vadd.f32 0.0, %v1525
        %1527 = vdwg.mxu0
        %v1528 = vsel %vm1466, %v1524, -inf
        %1529 = vmax.xlane.f32.xlu0 %v1528
        %v1530 = vpop.xlane.xlu0 %1529
        %v1531 = vsel %vm1466, %v1526, -inf
        %1532 = vmax.xlane.f32.xlu0 %v1531
        %v1533 = vpop.xlane.xlu0 %1532
        %v1534 = vsub.f32 %v1524, %v1530
        %v1535 = vsub.f32 %v1526, %v1533
        %v1536 = vmul.f32 %v1534, 1.442695
        %v1537 = vpow.pop %v1536
        %v1538 = vmul.f32 %v1535, 1.442695
        %v1539 = vpow.pop %v1538
        %v1540 = vsel %vm1466, %v1537, 0.0
        %1541 = vadd.xlane.f32.xlu0 %v1540
        %v1542 = vpop.xlane.xlu0 %1541
        %v1543 = vsel %vm1466, %v1539, 0.0
        %1544 = vadd.xlane.f32.xlu0 %v1543
        %v1545 = vpop.xlane.xlu0 %1544
        %v1546 = vrcp.pop %v1542
        %v1547 = vrcp.pop %v1545
        %v1548 = vmul.f32 %v1537, %v1546
        %v1549 = vmul.f32 %v1539, %v1547
        %v1550 = vpack.c.bf16 %v1549, %v1548
        %v1552 = vsel %vm1466, %v1550, 0
        %1554 = vmatpush.bf16.msra.mxu0 0
        %1555 = vmatpush.bf16.msra.mxu0 0
        %1556 = vmatpush.bf16.msra.mxu0 0
        %1557 = vmatpush.bf16.msra.mxu0 0
        %1558 = vmatpush.bf16.msra.mxu0 0
        %1559 = vmatpush.bf16.msra.mxu0 0
        %1560 = vmatpush.bf16.msra.mxu0 0
        %1561 = vmatpush.bf16.msra.mxu0 %v1513
        %1562 = vmatmul.bf16.gmra.mxu0 %v1552
        %v1563 = vpop.f32.mrf.mxu0
        %v1564 = vadd.f32 0.0, %v1563
        %v1565 = vpop.f32.mrf.mxu0
        %v1566 = vadd.f32 0.0, %v1565
        %1567 = vdwg.mxu0
        %v1568 = vpack.c.bf16 %v1564, %v1564
        %v1569 = vpack.c.bf16 %v1566, %v1566
        %1570 = vst [vmem:[#allocation2 + $0x4] sm:$0xf] %v1568
        %1571 = vst [vmem:[#allocation2 + $0xc] sm:$0xf] %v1569
        %v1572 = vld [vmem:[#allocation2] sm:$0xff]
        %v1573 = vld [vmem:[#allocation2 + $0x8] sm:$0xff]
        %v1574 = vld [vmem:[#allocation12] sm:$0xff]
        %v1575 = vld [vmem:[#allocation12 + $0x8] sm:$0xff]
        %v1576 = vld [vmem:[#allocation12 + $0x10] sm:$0xff]
        %v1577 = vld [vmem:[#allocation12 + $0x18] sm:$0xff]
        %v1578 = vld [vmem:[#allocation12 + $0x20] sm:$0xff]
        %v1579 = vld [vmem:[#allocation12 + $0x28] sm:$0xff]
        %v1580 = vld [vmem:[#allocation12 + $0x30] sm:$0xff]
        %v1581 = vld [vmem:[#allocation12 + $0x38] sm:$0xff]
        %v1582 = vld [vmem:[#allocation12 + $0x40] sm:$0xff]
        %v1583 = vld [vmem:[#allocation12 + $0x48] sm:$0xff]
        %v1584 = vld [vmem:[#allocation12 + $0x50] sm:$0xff]
        %v1585 = vld [vmem:[#allocation12 + $0x58] sm:$0xff]
        %v1586 = vld [vmem:[#allocation12 + $0x60] sm:$0xff]
        %v1587 = vld [vmem:[#allocation12 + $0x68] sm:$0xff]
        %v1588 = vld [vmem:[#allocation12 + $0x70] sm:$0xff]
        %v1589 = vld [vmem:[#allocation12 + $0x78] sm:$0xff]
        %v1590 = vld [vmem:[#allocation12 + $0x80] sm:$0xff]
        %v1591 = vld [vmem:[#allocation12 + $0x88] sm:$0xff]
        %v1592 = vld [vmem:[#allocation12 + $0x90] sm:$0xff]
        %v1593 = vld [vmem:[#allocation12 + $0x98] sm:$0xff]
        %v1594 = vld [vmem:[#allocation12 + $0xa0] sm:$0xff]
        %v1595 = vld [vmem:[#allocation12 + $0xa8] sm:$0xff]
        %v1596 = vld [vmem:[#allocation12 + $0xb0] sm:$0xff]
        %v1597 = vld [vmem:[#allocation12 + $0xb8] sm:$0xff]
        %v1598 = vld [vmem:[#allocation12 + $0xc0] sm:$0xff]
        %v1599 = vld [vmem:[#allocation12 + $0xc8] sm:$0xff]
        %v1600 = vld [vmem:[#allocation12 + $0xd0] sm:$0xff]
        %v1601 = vld [vmem:[#allocation12 + $0xd8] sm:$0xff]
        %v1602 = vld [vmem:[#allocation12 + $0xe0] sm:$0xff]
        %v1603 = vld [vmem:[#allocation12 + $0xe8] sm:$0xff]
        %v1604 = vld [vmem:[#allocation12 + $0xf0] sm:$0xff]
        %v1605 = vld [vmem:[#allocation12 + $0xf8] sm:$0xff]
        %v1608 = vunpack.c.l.b16 %v1572
        %v1609 = vunpack.c.h.b16 %v1572
        %v1610 = vunpack.c.l.b16 %v1573
        %v1611 = vunpack.c.h.b16 %v1573
        %v1612 = vpack.c.b16 %v1610, %v1608
        %v1613 = vpack.c.b16 %v1611, %v1609
        %v1648 = vunpack.c.l.b16 %v1574
        %v1649 = vunpack.c.h.b16 %v1574
        %v1650 = vunpack.c.l.b16 %v1575
        %v1651 = vunpack.c.h.b16 %v1575
        %v1652 = vunpack.c.l.b16 %v1576
        %v1653 = vunpack.c.h.b16 %v1576
        %v1654 = vunpack.c.l.b16 %v1577
        %v1655 = vunpack.c.h.b16 %v1577
        %v1656 = vunpack.c.l.b16 %v1578
        %v1657 = vunpack.c.h.b16 %v1578
        %v1658 = vunpack.c.l.b16 %v1579
        %v1659 = vunpack.c.h.b16 %v1579
        %v1660 = vunpack.c.l.b16 %v1580
        %v1661 = vunpack.c.h.b16 %v1580
        %v1662 = vunpack.c.l.b16 %v1581
        %v1663 = vunpack.c.h.b16 %v1581
        %v1664 = vunpack.c.l.b16 %v1582
        %v1665 = vunpack.c.h.b16 %v1582
        %v1666 = vunpack.c.l.b16 %v1583
        %v1667 = vunpack.c.h.b16 %v1583
        %v1668 = vunpack.c.l.b16 %v1584
        %v1669 = vunpack.c.h.b16 %v1584
        %v1670 = vunpack.c.l.b16 %v1585
        %v1671 = vunpack.c.h.b16 %v1585
        %v1672 = vunpack.c.l.b16 %v1586
        %v1673 = vunpack.c.h.b16 %v1586
        %v1674 = vunpack.c.l.b16 %v1587
        %v1675 = vunpack.c.h.b16 %v1587
        %v1676 = vunpack.c.l.b16 %v1588
        %v1677 = vunpack.c.h.b16 %v1588
        %v1678 = vunpack.c.l.b16 %v1589
        %v1679 = vunpack.c.h.b16 %v1589
        %v1680 = vunpack.c.l.b16 %v1590
        %v1681 = vunpack.c.h.b16 %v1590
        %v1682 = vunpack.c.l.b16 %v1591
        %v1683 = vunpack.c.h.b16 %v1591
        %v1684 = vunpack.c.l.b16 %v1592
        %v1685 = vunpack.c.h.b16 %v1592
        %v1686 = vunpack.c.l.b16 %v1593
        %v1687 = vunpack.c.h.b16 %v1593
        %v1688 = vunpack.c.l.b16 %v1594
        %v1689 = vunpack.c.h.b16 %v1594
        %v1690 = vunpack.c.l.b16 %v1595
        %v1691 = vunpack.c.h.b16 %v1595
        %v1692 = vunpack.c.l.b16 %v1596
        %v1693 = vunpack.c.h.b16 %v1596
        %v1694 = vunpack.c.l.b16 %v1597
        %v1695 = vunpack.c.h.b16 %v1597
        %v1696 = vunpack.c.l.b16 %v1598
        %v1697 = vunpack.c.h.b16 %v1598
        %v1698 = vunpack.c.l.b16 %v1599
        %v1699 = vunpack.c.h.b16 %v1599
        %v1700 = vunpack.c.l.b16 %v1600
        %v1701 = vunpack.c.h.b16 %v1600
        %v1702 = vunpack.c.l.b16 %v1601
        %v1703 = vunpack.c.h.b16 %v1601
        %v1704 = vunpack.c.l.b16 %v1602
        %v1705 = vunpack.c.h.b16 %v1602
        %v1706 = vunpack.c.l.b16 %v1603
        %v1707 = vunpack.c.h.b16 %v1603
        %v1708 = vunpack.c.l.b16 %v1604
        %v1709 = vunpack.c.h.b16 %v1604
        %v1710 = vunpack.c.l.b16 %v1605
        %v1711 = vunpack.c.h.b16 %v1605
        %v1712 = vpack.c.b16 %v1650, %v1648
        %v1713 = vpack.c.b16 %v1651, %v1649
        %v1714 = vpack.c.b16 %v1654, %v1652
        %v1715 = vpack.c.b16 %v1655, %v1653
        %v1716 = vpack.c.b16 %v1658, %v1656
        %v1717 = vpack.c.b16 %v1659, %v1657
        %v1718 = vpack.c.b16 %v1662, %v1660
        %v1719 = vpack.c.b16 %v1663, %v1661
        %v1720 = vpack.c.b16 %v1666, %v1664
        %v1721 = vpack.c.b16 %v1667, %v1665
        %v1722 = vpack.c.b16 %v1670, %v1668
        %v1723 = vpack.c.b16 %v1671, %v1669
        %v1724 = vpack.c.b16 %v1674, %v1672
        %v1725 = vpack.c.b16 %v1675, %v1673
        %v1726 = vpack.c.b16 %v1678, %v1676
        %v1727 = vpack.c.b16 %v1679, %v1677
        %v1728 = vpack.c.b16 %v1682, %v1680
        %v1729 = vpack.c.b16 %v1683, %v1681
        %v1730 = vpack.c.b16 %v1686, %v1684
        %v1731 = vpack.c.b16 %v1687, %v1685
        %v1732 = vpack.c.b16 %v1690, %v1688
        %v1733 = vpack.c.b16 %v1691, %v1689
        %v1734 = vpack.c.b16 %v1694, %v1692
        %v1735 = vpack.c.b16 %v1695, %v1693
        %v1736 = vpack.c.b16 %v1698, %v1696
        %v1737 = vpack.c.b16 %v1699, %v1697
        %v1738 = vpack.c.b16 %v1702, %v1700
        %v1739 = vpack.c.b16 %v1703, %v1701
        %v1740 = vpack.c.b16 %v1706, %v1704
        %v1741 = vpack.c.b16 %v1707, %v1705
        %v1742 = vpack.c.b16 %v1710, %v1708
        %v1743 = vpack.c.b16 %v1711, %v1709
        %1776 = vmatpush.bf16.msra.mxu0 %v1726
        %1777 = vmatpush.bf16.msra.mxu0 %v1724
        %1778 = vmatpush.bf16.msra.mxu0 %v1722
        %1779 = vmatpush.bf16.msra.mxu0 %v1720
        %1780 = vmatpush.bf16.msra.mxu0 %v1718
        %1781 = vmatpush.bf16.msra.mxu0 %v1716
        %1782 = vmatpush.bf16.msra.mxu0 %v1714
        %1783 = vmatpush.bf16.msra.mxu0 %v1712
        %1784 = vmatmul.bf16.gmra.mxu0 %v1612
        %v1785 = vpop.f32.mrf.mxu0
        %v1786 = vadd.f32 0.0, %v1785
        %v1787 = vpop.f32.mrf.mxu0
        %v1788 = vadd.f32 0.0, %v1787
        %1789 = vdwg.mxu0
        %1790 = vmatpush.bf16.msra.mxu0 %v1742
        %1791 = vmatpush.bf16.msra.mxu0 %v1740
        %1792 = vmatpush.bf16.msra.mxu0 %v1738
        %1793 = vmatpush.bf16.msra.mxu0 %v1736
        %1794 = vmatpush.bf16.msra.mxu0 %v1734
        %1795 = vmatpush.bf16.msra.mxu0 %v1732
        %1796 = vmatpush.bf16.msra.mxu0 %v1730
        %1797 = vmatpush.bf16.msra.mxu0 %v1728
        %1798 = vmatmul.bf16.gmra.mxu0 %v1613
        %v1799 = vpop.f32.mrf.mxu0
        %v1800 = vadd.f32 %v1786, %v1799
        %v1801 = vpop.f32.mrf.mxu0
        %v1802 = vadd.f32 %v1788, %v1801
        %1803 = vdwg.mxu0
        %1804 = vmatpush.bf16.msra.mxu0 %v1727
        %1805 = vmatpush.bf16.msra.mxu0 %v1725
        %1806 = vmatpush.bf16.msra.mxu0 %v1723
        %1807 = vmatpush.bf16.msra.mxu0 %v1721
        %1808 = vmatpush.bf16.msra.mxu0 %v1719
        %1809 = vmatpush.bf16.msra.mxu0 %v1717
        %1810 = vmatpush.bf16.msra.mxu0 %v1715
        %1811 = vmatpush.bf16.msra.mxu0 %v1713
        %1812 = vmatmul.bf16.gmra.mxu0 %v1612
        %v1813 = vpop.f32.mrf.mxu0
        %v1814 = vadd.f32 0.0, %v1813
        %v1815 = vpop.f32.mrf.mxu0
        %v1816 = vadd.f32 0.0, %v1815
        %1817 = vdwg.mxu0
        %1818 = vmatpush.bf16.msra.mxu0 %v1743
        %1819 = vmatpush.bf16.msra.mxu0 %v1741
        %1820 = vmatpush.bf16.msra.mxu0 %v1739
        %1821 = vmatpush.bf16.msra.mxu0 %v1737
        %1822 = vmatpush.bf16.msra.mxu0 %v1735
        %1823 = vmatpush.bf16.msra.mxu0 %v1733
        %1824 = vmatpush.bf16.msra.mxu0 %v1731
        %1825 = vmatpush.bf16.msra.mxu0 %v1729
        %1826 = vmatmul.bf16.gmra.mxu0 %v1613
        %v1827 = vpop.f32.mrf.mxu0
        %v1828 = vadd.f32 %v1814, %v1827
        %v1829 = vpop.f32.mrf.mxu0
        %v1830 = vadd.f32 %v1816, %v1829
        %1831 = vdwg.mxu0
        %v1832 = vadd.f32 %v615, %v1800
        %v1833 = vadd.f32 %v616, %v1828
        %v1834 = vadd.f32 %v617, %v1802
        %v1835 = vadd.f32 %v618, %v1830
        %v1836 = vld [vmem:[#allocation14] sm:$0x3]
        %v1838 = vperm.slane %v1836, 0
        %v1839 = vperm.slane %v1836, 1
        %v1842 = vadd.f32 %v1832, %v1838
        %v1843 = vadd.f32 %v1833, %v1839
        %v1844 = vadd.f32 %v1834, %v1838
        %v1845 = vadd.f32 %v1835, %v1839
        %v1846 = vld [vmem:[#allocation15] sm:$0x3]
        %v1847 = vld [vmem:[#allocation17] sm:$0x3]
        %v1848 = vadd.f32 %v1842, %v1843
        %1849 = vadd.xlane.f32.xlu0 %v1848
        %v1850 = vpop.xlane.xlu0 %1849
        %v1851 = vadd.f32 %v1844, %v1845
        %1852 = vadd.xlane.f32.xlu0 %v1851
        %v1853 = vpop.xlane.xlu0 %1852
        %v1854 = vmul.f32 %v1850, 0.00390625
        %v1855 = vmul.f32 %v1853, 0.00390625
        %v1856 = vsub.f32 %v1842, %v1854
        %v1857 = vsub.f32 %v1843, %v1854
        %v1858 = vsub.f32 %v1844, %v1855
        %v1859 = vsub.f32 %v1845, %v1855
        %v1860 = vmul.f32 %v1856, %v1856
        %v1861 = vmul.f32 %v1857, %v1857
        %v1862 = vmul.f32 %v1858, %v1858
        %v1863 = vmul.f32 %v1859, %v1859
        %v1864 = vadd.f32 %v1860, %v1861
        %1865 = vadd.xlane.f32.xlu0 %v1864
        %v1866 = vpop.xlane.xlu0 %1865
        %v1867 = vadd.f32 %v1862, %v1863
        %1868 = vadd.xlane.f32.xlu0 %v1867
        %v1869 = vpop.xlane.xlu0 %1868
        %v1870 = vmul.f32 %v1866, 0.00390625
        %v1871 = vmul.f32 %v1869, 0.00390625
        %v1872 = vadd.f32 %v1870, 1e-05
        %v1873 = vadd.f32 %v1871, 1e-05
        %v1874 = vrsqrt.pop %v1872
        %v1875 = vmul.f32 %v1874, %v1872
        %v1876 = vmul.f32 %v1875, %v1874
        %v1877 = vmul.f32 0.5, %v1876
        %v1878 = vsub.f32 1.5, %v1877
        %v1879 = vmul.f32 %v1874, %v1878
        %vm1880 = vweird.f32 %v1872
        %vm1881 = vweird.f32 %v1874
        %vm1882 = vmor %vm1880, %vm1881
        %v1883 = vsel %vm1882, %v1874, %v1879
        %v1884 = vrsqrt.pop %v1873
        %v1885 = vmul.f32 %v1884, %v1873
        %v1886 = vmul.f32 %v1885, %v1884
        %v1887 = vmul.f32 0.5, %v1886
        %v1888 = vsub.f32 1.5, %v1887
        %v1889 = vmul.f32 %v1884, %v1888
        %vm1890 = vweird.f32 %v1873
        %vm1891 = vweird.f32 %v1884
        %vm1892 = vmor %vm1890, %vm1891
        %v1893 = vsel %vm1892, %v1884, %v1889
        %v1894 = vmul.f32 %v1856, %v1883
        %v1895 = vmul.f32 %v1857, %v1883
        %v1896 = vmul.f32 %v1858, %v1893
        %v1897 = vmul.f32 %v1859, %v1893
        %v1899 = vperm.slane %v1846, 0
        %v1900 = vperm.slane %v1846, 1
        %v1903 = vmul.f32 %v1894, %v1899
        %v1904 = vmul.f32 %v1895, %v1900
        %v1905 = vmul.f32 %v1896, %v1899
        %v1906 = vmul.f32 %v1897, %v1900
        %v1908 = vperm.slane %v1847, 0
        %v1909 = vperm.slane %v1847, 1
        %v1912 = vadd.f32 %v1903, %v1908
        %v1913 = vadd.f32 %v1904, %v1909
        %v1914 = vadd.f32 %v1905, %v1908
        %v1915 = vadd.f32 %v1906, %v1909
        %v1916 = vpack.c.bf16 %v1914, %v1912
        %v1917 = vpack.c.bf16 %v1915, %v1913
        %v1918 = vld [vmem:[#allocation18] sm:$0xff]
        %v1919 = vld [vmem:[#allocation18 + $0x8] sm:$0xff]
        %v1920 = vld [vmem:[#allocation18 + $0x10] sm:$0xff]
        %v1921 = vld [vmem:[#allocation18 + $0x18] sm:$0xff]
        %v1922 = vld [vmem:[#allocation18 + $0x20] sm:$0xff]
        %v1923 = vld [vmem:[#allocation18 + $0x28] sm:$0xff]
        %v1924 = vld [vmem:[#allocation18 + $0x30] sm:$0xff]
        %v1925 = vld [vmem:[#allocation18 + $0x38] sm:$0xff]
        %v1926 = vld [vmem:[#allocation18 + $0x40] sm:$0xff]
        %v1927 = vld [vmem:[#allocation18 + $0x48] sm:$0xff]
        %v1928 = vld [vmem:[#allocation18 + $0x50] sm:$0xff]
        %v1929 = vld [vmem:[#allocation18 + $0x58] sm:$0xff]
        %v1930 = vld [vmem:[#allocation18 + $0x60] sm:$0xff]
        %v1931 = vld [vmem:[#allocation18 + $0x68] sm:$0xff]
        %v1932 = vld [vmem:[#allocation18 + $0x70] sm:$0xff]
        %v1933 = vld [vmem:[#allocation18 + $0x78] sm:$0xff]
        %v1934 = vld [vmem:[#allocation18 + $0x80] sm:$0xff]
        %v1935 = vld [vmem:[#allocation18 + $0x88] sm:$0xff]
        %v1936 = vld [vmem:[#allocation18 + $0x90] sm:$0xff]
        %v1937 = vld [vmem:[#allocation18 + $0x98] sm:$0xff]
        %v1938 = vld [vmem:[#allocation18 + $0xa0] sm:$0xff]
        %v1939 = vld [vmem:[#allocation18 + $0xa8] sm:$0xff]
        %v1940 = vld [vmem:[#allocation18 + $0xb0] sm:$0xff]
        %v1941 = vld [vmem:[#allocation18 + $0xb8] sm:$0xff]
        %v1942 = vld [vmem:[#allocation18 + $0xc0] sm:$0xff]
        %v1943 = vld [vmem:[#allocation18 + $0xc8] sm:$0xff]
        %v1944 = vld [vmem:[#allocation18 + $0xd0] sm:$0xff]
        %v1945 = vld [vmem:[#allocation18 + $0xd8] sm:$0xff]
        %v1946 = vld [vmem:[#allocation18 + $0xe0] sm:$0xff]
        %v1947 = vld [vmem:[#allocation18 + $0xe8] sm:$0xff]
        %v1948 = vld [vmem:[#allocation18 + $0xf0] sm:$0xff]
        %v1949 = vld [vmem:[#allocation18 + $0xf8] sm:$0xff]
        %v1950 = vld [vmem:[#allocation18 + $0x100] sm:$0xff]
        %v1951 = vld [vmem:[#allocation18 + $0x108] sm:$0xff]
        %v1952 = vld [vmem:[#allocation18 + $0x110] sm:$0xff]
        %v1953 = vld [vmem:[#allocation18 + $0x118] sm:$0xff]
        %v1954 = vld [vmem:[#allocation18 + $0x120] sm:$0xff]
        %v1955 = vld [vmem:[#allocation18 + $0x128] sm:$0xff]
        %v1956 = vld [vmem:[#allocation18 + $0x130] sm:$0xff]
        %v1957 = vld [vmem:[#allocation18 + $0x138] sm:$0xff]
        %v1958 = vld [vmem:[#allocation18 + $0x140] sm:$0xff]
        %v1959 = vld [vmem:[#allocation18 + $0x148] sm:$0xff]
        %v1960 = vld [vmem:[#allocation18 + $0x150] sm:$0xff]
        %v1961 = vld [vmem:[#allocation18 + $0x158] sm:$0xff]
        %v1962 = vld [vmem:[#allocation18 + $0x160] sm:$0xff]
        %v1963 = vld [vmem:[#allocation18 + $0x168] sm:$0xff]
        %v1964 = vld [vmem:[#allocation18 + $0x170] sm:$0xff]
        %v1965 = vld [vmem:[#allocation18 + $0x178] sm:$0xff]
        %v1966 = vld [vmem:[#allocation18 + $0x180] sm:$0xff]
        %v1967 = vld [vmem:[#allocation18 + $0x188] sm:$0xff]
        %v1968 = vld [vmem:[#allocation18 + $0x190] sm:$0xff]
        %v1969 = vld [vmem:[#allocation18 + $0x198] sm:$0xff]
        %v1970 = vld [vmem:[#allocation18 + $0x1a0] sm:$0xff]
        %v1971 = vld [vmem:[#allocation18 + $0x1a8] sm:$0xff]
        %v1972 = vld [vmem:[#allocation18 + $0x1b0] sm:$0xff]
        %v1973 = vld [vmem:[#allocation18 + $0x1b8] sm:$0xff]
        %v1974 = vld [vmem:[#allocation18 + $0x1c0] sm:$0xff]
        %v1975 = vld [vmem:[#allocation18 + $0x1c8] sm:$0xff]
        %v1976 = vld [vmem:[#allocation18 + $0x1d0] sm:$0xff]
        %v1977 = vld [vmem:[#allocation18 + $0x1d8] sm:$0xff]
        %v1978 = vld [vmem:[#allocation18 + $0x1e0] sm:$0xff]
        %v1979 = vld [vmem:[#allocation18 + $0x1e8] sm:$0xff]
        %v1980 = vld [vmem:[#allocation18 + $0x1f0] sm:$0xff]
        %v1981 = vld [vmem:[#allocation18 + $0x1f8] sm:$0xff]
        %v1982 = vld [vmem:[#allocation18 + $0x200] sm:$0xff]
        %v1983 = vld [vmem:[#allocation18 + $0x208] sm:$0xff]
        %v1984 = vld [vmem:[#allocation18 + $0x210] sm:$0xff]
        %v1985 = vld [vmem:[#allocation18 + $0x218] sm:$0xff]
        %v1986 = vld [vmem:[#allocation18 + $0x220] sm:$0xff]
        %v1987 = vld [vmem:[#allocation18 + $0x228] sm:$0xff]
        %v1988 = vld [vmem:[#allocation18 + $0x230] sm:$0xff]
        %v1989 = vld [vmem:[#allocation18 + $0x238] sm:$0xff]
        %v1990 = vld [vmem:[#allocation18 + $0x240] sm:$0xff]
        %v1991 = vld [vmem:[#allocation18 + $0x248] sm:$0xff]
        %v1992 = vld [vmem:[#allocation18 + $0x250] sm:$0xff]
        %v1993 = vld [vmem:[#allocation18 + $0x258] sm:$0xff]
        %v1994 = vld [vmem:[#allocation18 + $0x260] sm:$0xff]
        %v1995 = vld [vmem:[#allocation18 + $0x268] sm:$0xff]
        %v1996 = vld [vmem:[#allocation18 + $0x270] sm:$0xff]
        %v1997 = vld [vmem:[#allocation18 + $0x278] sm:$0xff]
        %v1998 = vld [vmem:[#allocation18 + $0x280] sm:$0xff]
        %v1999 = vld [vmem:[#allocation18 + $0x288] sm:$0xff]
        %v2000 = vld [vmem:[#allocation18 + $0x290] sm:$0xff]
        %v2001 = vld [vmem:[#allocation18 + $0x298] sm:$0xff]
        %v2002 = vld [vmem:[#allocation18 + $0x2a0] sm:$0xff]
        %v2003 = vld [vmem:[#allocation18 + $0x2a8] sm:$0xff]
        %v2004 = vld [vmem:[#allocation18 + $0x2b0] sm:$0xff]
        %v2005 = vld [vmem:[#allocation18 + $0x2b8] sm:$0xff]
        %v2006 = vld [vmem:[#allocation18 + $0x2c0] sm:$0xff]
        %v2007 = vld [vmem:[#allocation18 + $0x2c8] sm:$0xff]
        %v2008 = vld [vmem:[#allocation18 + $0x2d0] sm:$0xff]
        %v2009 = vld [vmem:[#allocation18 + $0x2d8] sm:$0xff]
        %v2010 = vld [vmem:[#allocation18 + $0x2e0] sm:$0xff]
        %v2011 = vld [vmem:[#allocation18 + $0x2e8] sm:$0xff]
        %v2012 = vld [vmem:[#allocation18 + $0x2f0] sm:$0xff]
        %v2013 = vld [vmem:[#allocation18 + $0x2f8] sm:$0xff]
        %v2014 = vld [vmem:[#allocation18 + $0x300] sm:$0xff]
        %v2015 = vld [vmem:[#allocation18 + $0x308] sm:$0xff]
        %v2016 = vld [vmem:[#allocation18 + $0x310] sm:$0xff]
        %v2017 = vld [vmem:[#allocation18 + $0x318] sm:$0xff]
        %v2018 = vld [vmem:[#allocation18 + $0x320] sm:$0xff]
        %v2019 = vld [vmem:[#allocation18 + $0x328] sm:$0xff]
        %v2020 = vld [vmem:[#allocation18 + $0x330] sm:$0xff]
        %v2021 = vld [vmem:[#allocation18 + $0x338] sm:$0xff]
        %v2022 = vld [vmem:[#allocation18 + $0x340] sm:$0xff]
        %v2023 = vld [vmem:[#allocation18 + $0x348] sm:$0xff]
        %v2024 = vld [vmem:[#allocation18 + $0x350] sm:$0xff]
        %v2025 = vld [vmem:[#allocation18 + $0x358] sm:$0xff]
        %v2026 = vld [vmem:[#allocation18 + $0x360] sm:$0xff]
        %v2027 = vld [vmem:[#allocation18 + $0x368] sm:$0xff]
        %v2028 = vld [vmem:[#allocation18 + $0x370] sm:$0xff]
        %v2029 = vld [vmem:[#allocation18 + $0x378] sm:$0xff]
        %v2030 = vld [vmem:[#allocation18 + $0x380] sm:$0xff]
        %v2031 = vld [vmem:[#allocation18 + $0x388] sm:$0xff]
        %v2032 = vld [vmem:[#allocation18 + $0x390] sm:$0xff]
        %v2033 = vld [vmem:[#allocation18 + $0x398] sm:$0xff]
        %v2034 = vld [vmem:[#allocation18 + $0x3a0] sm:$0xff]
        %v2035 = vld [vmem:[#allocation18 + $0x3a8] sm:$0xff]
        %v2036 = vld [vmem:[#allocation18 + $0x3b0] sm:$0xff]
        %v2037 = vld [vmem:[#allocation18 + $0x3b8] sm:$0xff]
        %v2038 = vld [vmem:[#allocation18 + $0x3c0] sm:$0xff]
        %v2039 = vld [vmem:[#allocation18 + $0x3c8] sm:$0xff]
        %v2040 = vld [vmem:[#allocation18 + $0x3d0] sm:$0xff]
        %v2041 = vld [vmem:[#allocation18 + $0x3d8] sm:$0xff]
        %v2042 = vld [vmem:[#allocation18 + $0x3e0] sm:$0xff]
        %v2043 = vld [vmem:[#allocation18 + $0x3e8] sm:$0xff]
        %v2044 = vld [vmem:[#allocation18 + $0x3f0] sm:$0xff]
        %v2045 = vld [vmem:[#allocation18 + $0x3f8] sm:$0xff]
        %v2046 = vld [vmem:[%s10] sm:$0xff]
        %v2048 = vperm.slane %v2046, 0
        %v2049 = vperm.slane %v2046, 1
        %v2050 = vperm.slane %v2046, 2
        %v2051 = vperm.slane %v2046, 3
        %v2052 = vperm.slane %v2046, 4
        %v2053 = vperm.slane %v2046, 5
        %v2054 = vperm.slane %v2046, 6
        %v2055 = vperm.slane %v2046, 7
        %v2192 = vunpack.c.l.b16 %v1918
        %v2193 = vunpack.c.h.b16 %v1918
        %v2194 = vunpack.c.l.b16 %v1919
        %v2195 = vunpack.c.h.b16 %v1919
        %v2196 = vunpack.c.l.b16 %v1920
        %v2197 = vunpack.c.h.b16 %v1920
        %v2198 = vunpack.c.l.b16 %v1921
        %v2199 = vunpack.c.h.b16 %v1921
        %v2200 = vunpack.c.l.b16 %v1922
        %v2201 = vunpack.c.h.b16 %v1922
        %v2202 = vunpack.c.l.b16 %v1923
        %v2203 = vunpack.c.h.b16 %v1923
        %v2204 = vunpack.c.l.b16 %v1924
        %v2205 = vunpack.c.h.b16 %v1924
        %v2206 = vunpack.c.l.b16 %v1925
        %v2207 = vunpack.c.h.b16 %v1925
        %v2208 = vunpack.c.l.b16 %v1926
        %v2209 = vunpack.c.h.b16 %v1926
        %v2210 = vunpack.c.l.b16 %v1927
        %v2211 = vunpack.c.h.b16 %v1927
        %v2212 = vunpack.c.l.b16 %v1928
        %v2213 = vunpack.c.h.b16 %v1928
        %v2214 = vunpack.c.l.b16 %v1929
        %v2215 = vunpack.c.h.b16 %v1929
        %v2216 = vunpack.c.l.b16 %v1930
        %v2217 = vunpack.c.h.b16 %v1930
        %v2218 = vunpack.c.l.b16 %v1931
        %v2219 = vunpack.c.h.b16 %v1931
        %v2220 = vunpack.c.l.b16 %v1932
        %v2221 = vunpack.c.h.b16 %v1932
        %v2222 = vunpack.c.l.b16 %v1933
        %v2223 = vunpack.c.h.b16 %v1933
        %v2224 = vunpack.c.l.b16 %v1934
        %v2225 = vunpack.c.h.b16 %v1934
        %v2226 = vunpack.c.l.b16 %v1935
        %v2227 = vunpack.c.h.b16 %v1935
        %v2228 = vunpack.c.l.b16 %v1936
        %v2229 = vunpack.c.h.b16 %v1936
        %v2230 = vunpack.c.l.b16 %v1937
        %v2231 = vunpack.c.h.b16 %v1937
        %v2232 = vunpack.c.l.b16 %v1938
        %v2233 = vunpack.c.h.b16 %v1938
        %v2234 = vunpack.c.l.b16 %v1939
        %v2235 = vunpack.c.h.b16 %v1939
        %v2236 = vunpack.c.l.b16 %v1940
        %v2237 = vunpack.c.h.b16 %v1940
        %v2238 = vunpack.c.l.b16 %v1941
        %v2239 = vunpack.c.h.b16 %v1941
        %v2240 = vunpack.c.l.b16 %v1942
        %v2241 = vunpack.c.h.b16 %v1942
        %v2242 = vunpack.c.l.b16 %v1943
        %v2243 = vunpack.c.h.b16 %v1943
        %v2244 = vunpack.c.l.b16 %v1944
        %v2245 = vunpack.c.h.b16 %v1944
        %v2246 = vunpack.c.l.b16 %v1945
        %v2247 = vunpack.c.h.b16 %v1945
        %v2248 = vunpack.c.l.b16 %v1946
        %v2249 = vunpack.c.h.b16 %v1946
        %v2250 = vunpack.c.l.b16 %v1947
        %v2251 = vunpack.c.h.b16 %v1947
        %v2252 = vunpack.c.l.b16 %v1948
        %v2253 = vunpack.c.h.b16 %v1948
        %v2254 = vunpack.c.l.b16 %v1949
        %v2255 = vunpack.c.h.b16 %v1949
        %v2256 = vunpack.c.l.b16 %v1950
        %v2257 = vunpack.c.h.b16 %v1950
        %v2258 = vunpack.c.l.b16 %v1951
        %v2259 = vunpack.c.h.b16 %v1951
        %v2260 = vunpack.c.l.b16 %v1952
        %v2261 = vunpack.c.h.b16 %v1952
        %v2262 = vunpack.c.l.b16 %v1953
        %v2263 = vunpack.c.h.b16 %v1953
        %v2264 = vunpack.c.l.b16 %v1954
        %v2265 = vunpack.c.h.b16 %v1954
        %v2266 = vunpack.c.l.b16 %v1955
        %v2267 = vunpack.c.h.b16 %v1955
        %v2268 = vunpack.c.l.b16 %v1956
        %v2269 = vunpack.c.h.b16 %v1956
        %v2270 = vunpack.c.l.b16 %v1957
        %v2271 = vunpack.c.h.b16 %v1957
        %v2272 = vunpack.c.l.b16 %v1958
        %v2273 = vunpack.c.h.b16 %v1958
        %v2274 = vunpack.c.l.b16 %v1959
        %v2275 = vunpack.c.h.b16 %v1959
        %v2276 = vunpack.c.l.b16 %v1960
        %v2277 = vunpack.c.h.b16 %v1960
        %v2278 = vunpack.c.l.b16 %v1961
        %v2279 = vunpack.c.h.b16 %v1961
        %v2280 = vunpack.c.l.b16 %v1962
        %v2281 = vunpack.c.h.b16 %v1962
        %v2282 = vunpack.c.l.b16 %v1963
        %v2283 = vunpack.c.h.b16 %v1963
        %v2284 = vunpack.c.l.b16 %v1964
        %v2285 = vunpack.c.h.b16 %v1964
        %v2286 = vunpack.c.l.b16 %v1965
        %v2287 = vunpack.c.h.b16 %v1965
        %v2288 = vunpack.c.l.b16 %v1966
        %v2289 = vunpack.c.h.b16 %v1966
        %v2290 = vunpack.c.l.b16 %v1967
        %v2291 = vunpack.c.h.b16 %v1967
        %v2292 = vunpack.c.l.b16 %v1968
        %v2293 = vunpack.c.h.b16 %v1968
        %v2294 = vunpack.c.l.b16 %v1969
        %v2295 = vunpack.c.h.b16 %v1969
        %v2296 = vunpack.c.l.b16 %v1970
        %v2297 = vunpack.c.h.b16 %v1970
        %v2298 = vunpack.c.l.b16 %v1971
        %v2299 = vunpack.c.h.b16 %v1971
        %v2300 = vunpack.c.l.b16 %v1972
        %v2301 = vunpack.c.h.b16 %v1972
        %v2302 = vunpack.c.l.b16 %v1973
        %v2303 = vunpack.c.h.b16 %v1973
        %v2304 = vunpack.c.l.b16 %v1974
        %v2305 = vunpack.c.h.b16 %v1974
        %v2306 = vunpack.c.l.b16 %v1975
        %v2307 = vunpack.c.h.b16 %v1975
        %v2308 = vunpack.c.l.b16 %v1976
        %v2309 = vunpack.c.h.b16 %v1976
        %v2310 = vunpack.c.l.b16 %v1977
        %v2311 = vunpack.c.h.b16 %v1977
        %v2312 = vunpack.c.l.b16 %v1978
        %v2313 = vunpack.c.h.b16 %v1978
        %v2314 = vunpack.c.l.b16 %v1979
        %v2315 = vunpack.c.h.b16 %v1979
        %v2316 = vunpack.c.l.b16 %v1980
        %v2317 = vunpack.c.h.b16 %v1980
        %v2318 = vunpack.c.l.b16 %v1981
        %v2319 = vunpack.c.h.b16 %v1981
        %v2320 = vunpack.c.l.b16 %v1982
        %v2321 = vunpack.c.h.b16 %v1982
        %v2322 = vunpack.c.l.b16 %v1983
        %v2323 = vunpack.c.h.b16 %v1983
        %v2324 = vunpack.c.l.b16 %v1984
        %v2325 = vunpack.c.h.b16 %v1984
        %v2326 = vunpack.c.l.b16 %v1985
        %v2327 = vunpack.c.h.b16 %v1985
        %v2328 = vunpack.c.l.b16 %v1986
        %v2329 = vunpack.c.h.b16 %v1986
        %v2330 = vunpack.c.l.b16 %v1987
        %v2331 = vunpack.c.h.b16 %v1987
        %v2332 = vunpack.c.l.b16 %v1988
        %v2333 = vunpack.c.h.b16 %v1988
        %v2334 = vunpack.c.l.b16 %v1989
        %v2335 = vunpack.c.h.b16 %v1989
        %v2336 = vunpack.c.l.b16 %v1990
        %v2337 = vunpack.c.h.b16 %v1990
        %v2338 = vunpack.c.l.b16 %v1991
        %v2339 = vunpack.c.h.b16 %v1991
        %v2340 = vunpack.c.l.b16 %v1992
        %v2341 = vunpack.c.h.b16 %v1992
        %v2342 = vunpack.c.l.b16 %v1993
        %v2343 = vunpack.c.h.b16 %v1993
        %v2344 = vunpack.c.l.b16 %v1994
        %v2345 = vunpack.c.h.b16 %v1994
        %v2346 = vunpack.c.l.b16 %v1995
        %v2347 = vunpack.c.h.b16 %v1995
        %v2348 = vunpack.c.l.b16 %v1996
        %v2349 = vunpack.c.h.b16 %v1996
        %v2350 = vunpack.c.l.b16 %v1997
        %v2351 = vunpack.c.h.b16 %v1997
        %v2352 = vunpack.c.l.b16 %v1998
        %v2353 = vunpack.c.h.b16 %v1998
        %v2354 = vunpack.c.l.b16 %v1999
        %v2355 = vunpack.c.h.b16 %v1999
        %v2356 = vunpack.c.l.b16 %v2000
        %v2357 = vunpack.c.h.b16 %v2000
        %v2358 = vunpack.c.l.b16 %v2001
        %v2359 = vunpack.c.h.b16 %v2001
        %v2360 = vunpack.c.l.b16 %v2002
        %v2361 = vunpack.c.h.b16 %v2002
        %v2362 = vunpack.c.l.b16 %v2003
        %v2363 = vunpack.c.h.b16 %v2003
        %v2364 = vunpack.c.l.b16 %v2004
        %v2365 = vunpack.c.h.b16 %v2004
        %v2366 = vunpack.c.l.b16 %v2005
        %v2367 = vunpack.c.h.b16 %v2005
        %v2368 = vunpack.c.l.b16 %v2006
        %v2369 = vunpack.c.h.b16 %v2006
        %v2370 = vunpack.c.l.b16 %v2007
        %v2371 = vunpack.c.h.b16 %v2007
        %v2372 = vunpack.c.l.b16 %v2008
        %v2373 = vunpack.c.h.b16 %v2008
        %v2374 = vunpack.c.l.b16 %v2009
        %v2375 = vunpack.c.h.b16 %v2009
        %v2376 = vunpack.c.l.b16 %v2010
        %v2377 = vunpack.c.h.b16 %v2010
        %v2378 = vunpack.c.l.b16 %v2011
        %v2379 = vunpack.c.h.b16 %v2011
        %v2380 = vunpack.c.l.b16 %v2012
        %v2381 = vunpack.c.h.b16 %v2012
        %v2382 = vunpack.c.l.b16 %v2013
        %v2383 = vunpack.c.h.b16 %v2013
        %v2384 = vunpack.c.l.b16 %v2014
        %v2385 = vunpack.c.h.b16 %v2014
        %v2386 = vunpack.c.l.b16 %v2015
        %v2387 = vunpack.c.h.b16 %v2015
        %v2388 = vunpack.c.l.b16 %v2016
        %v2389 = vunpack.c.h.b16 %v2016
        %v2390 = vunpack.c.l.b16 %v2017
        %v2391 = vunpack.c.h.b16 %v2017
        %v2392 = vunpack.c.l.b16 %v2018
        %v2393 = vunpack.c.h.b16 %v2018
        %v2394 = vunpack.c.l.b16 %v2019
        %v2395 = vunpack.c.h.b16 %v2019
        %v2396 = vunpack.c.l.b16 %v2020
        %v2397 = vunpack.c.h.b16 %v2020
        %v2398 = vunpack.c.l.b16 %v2021
        %v2399 = vunpack.c.h.b16 %v2021
        %v2400 = vunpack.c.l.b16 %v2022
        %v2401 = vunpack.c.h.b16 %v2022
        %v2402 = vunpack.c.l.b16 %v2023
        %v2403 = vunpack.c.h.b16 %v2023
        %v2404 = vunpack.c.l.b16 %v2024
        %v2405 = vunpack.c.h.b16 %v2024
        %v2406 = vunpack.c.l.b16 %v2025
        %v2407 = vunpack.c.h.b16 %v2025
        %v2408 = vunpack.c.l.b16 %v2026
        %v2409 = vunpack.c.h.b16 %v2026
        %v2410 = vunpack.c.l.b16 %v2027
        %v2411 = vunpack.c.h.b16 %v2027
        %v2412 = vunpack.c.l.b16 %v2028
        %v2413 = vunpack.c.h.b16 %v2028
        %v2414 = vunpack.c.l.b16 %v2029
        %v2415 = vunpack.c.h.b16 %v2029
        %v2416 = vunpack.c.l.b16 %v2030
        %v2417 = vunpack.c.h.b16 %v2030
        %v2418 = vunpack.c.l.b16 %v2031
        %v2419 = vunpack.c.h.b16 %v2031
        %v2420 = vunpack.c.l.b16 %v2032
        %v2421 = vunpack.c.h.b16 %v2032
        %v2422 = vunpack.c.l.b16 %v2033
        %v2423 = vunpack.c.h.b16 %v2033
        %v2424 = vunpack.c.l.b16 %v2034
        %v2425 = vunpack.c.h.b16 %v2034
        %v2426 = vunpack.c.l.b16 %v2035
        %v2427 = vunpack.c.h.b16 %v2035
        %v2428 = vunpack.c.l.b16 %v2036
        %v2429 = vunpack.c.h.b16 %v2036
        %v2430 = vunpack.c.l.b16 %v2037
        %v2431 = vunpack.c.h.b16 %v2037
        %v2432 = vunpack.c.l.b16 %v2038
        %v2433 = vunpack.c.h.b16 %v2038
        %v2434 = vunpack.c.l.b16 %v2039
        %v2435 = vunpack.c.h.b16 %v2039
        %v2436 = vunpack.c.l.b16 %v2040
        %v2437 = vunpack.c.h.b16 %v2040
        %v2438 = vunpack.c.l.b16 %v2041
        %v2439 = vunpack.c.h.b16 %v2041
        %v2440 = vunpack.c.l.b16 %v2042
        %v2441 = vunpack.c.h.b16 %v2042
        %v2442 = vunpack.c.l.b16 %v2043
        %v2443 = vunpack.c.h.b16 %v2043
        %v2444 = vunpack.c.l.b16 %v2044
        %v2445 = vunpack.c.h.b16 %v2044
        %v2446 = vunpack.c.l.b16 %v2045
        %v2447 = vunpack.c.h.b16 %v2045
        %v2448 = vpack.c.b16 %v2200, %v2192
        %v2449 = vpack.c.b16 %v2201, %v2193
        %v2450 = vpack.c.b16 %v2202, %v2194
        %v2451 = vpack.c.b16 %v2203, %v2195
        %v2452 = vpack.c.b16 %v2204, %v2196
        %v2453 = vpack.c.b16 %v2205, %v2197
        %v2454 = vpack.c.b16 %v2206, %v2198
        %v2455 = vpack.c.b16 %v2207, %v2199
        %v2456 = vpack.c.b16 %v2216, %v2208
        %v2457 = vpack.c.b16 %v2217, %v2209
        %v2458 = vpack.c.b16 %v2218, %v2210
        %v2459 = vpack.c.b16 %v2219, %v2211
        %v2460 = vpack.c.b16 %v2220, %v2212
        %v2461 = vpack.c.b16 %v2221, %v2213
        %v2462 = vpack.c.b16 %v2222, %v2214
        %v2463 = vpack.c.b16 %v2223, %v2215
        %v2464 = vpack.c.b16 %v2232, %v2224
        %v2465 = vpack.c.b16 %v2233, %v2225
        %v2466 = vpack.c.b16 %v2234, %v2226
        %v2467 = vpack.c.b16 %v2235, %v2227
        %v2468 = vpack.c.b16 %v2236, %v2228
        %v2469 = vpack.c.b16 %v2237, %v2229
        %v2470 = vpack.c.b16 %v2238, %v2230
        %v2471 = vpack.c.b16 %v2239, %v2231
        %v2472 = vpack.c.b16 %v2248, %v2240
        %v2473 = vpack.c.b16 %v2249, %v2241
        %v2474 = vpack.c.b16 %v2250, %v2242
        %v2475 = vpack.c.b16 %v2251, %v2243
        %v2476 = vpack.c.b16 %v2252, %v2244
        %v2477 = vpack.c.b16 %v2253, %v2245
        %v2478 = vpack.c.b16 %v2254, %v2246
        %v2479 = vpack.c.b16 %v2255, %v2247
        %v2480 = vpack.c.b16 %v2264, %v2256
        %v2481 = vpack.c.b16 %v2265, %v2257
        %v2482 = vpack.c.b16 %v2266, %v2258
        %v2483 = vpack.c.b16 %v2267, %v2259
        %v2484 = vpack.c.b16 %v2268, %v2260
        %v2485 = vpack.c.b16 %v2269, %v2261
        %v2486 = vpack.c.b16 %v2270, %v2262
        %v2487 = vpack.c.b16 %v2271, %v2263
        %v2488 = vpack.c.b16 %v2280, %v2272
        %v2489 = vpack.c.b16 %v2281, %v2273
        %v2490 = vpack.c.b16 %v2282, %v2274
        %v2491 = vpack.c.b16 %v2283, %v2275
        %v2492 = vpack.c.b16 %v2284, %v2276
        %v2493 = vpack.c.b16 %v2285, %v2277
        %v2494 = vpack.c.b16 %v2286, %v2278
        %v2495 = vpack.c.b16 %v2287, %v2279
        %v2496 = vpack.c.b16 %v2296, %v2288
        %v2497 = vpack.c.b16 %v2297, %v2289
        %v2498 = vpack.c.b16 %v2298, %v2290
        %v2499 = vpack.c.b16 %v2299, %v2291
        %v2500 = vpack.c.b16 %v2300, %v2292
        %v2501 = vpack.c.b16 %v2301, %v2293
        %v2502 = vpack.c.b16 %v2302, %v2294
        %v2503 = vpack.c.b16 %v2303, %v2295
        %v2504 = vpack.c.b16 %v2312, %v2304
        %v2505 = vpack.c.b16 %v2313, %v2305
        %v2506 = vpack.c.b16 %v2314, %v2306
        %v2507 = vpack.c.b16 %v2315, %v2307
        %v2508 = vpack.c.b16 %v2316, %v2308
        %v2509 = vpack.c.b16 %v2317, %v2309
        %v2510 = vpack.c.b16 %v2318, %v2310
        %v2511 = vpack.c.b16 %v2319, %v2311
        %v2512 = vpack.c.b16 %v2328, %v2320
        %v2513 = vpack.c.b16 %v2329, %v2321
        %v2514 = vpack.c.b16 %v2330, %v2322
        %v2515 = vpack.c.b16 %v2331, %v2323
        %v2516 = vpack.c.b16 %v2332, %v2324
        %v2517 = vpack.c.b16 %v2333, %v2325
        %v2518 = vpack.c.b16 %v2334, %v2326
        %v2519 = vpack.c.b16 %v2335, %v2327
        %v2520 = vpack.c.b16 %v2344, %v2336
        %v2521 = vpack.c.b16 %v2345, %v2337
        %v2522 = vpack.c.b16 %v2346, %v2338
        %v2523 = vpack.c.b16 %v2347, %v2339
        %v2524 = vpack.c.b16 %v2348, %v2340
        %v2525 = vpack.c.b16 %v2349, %v2341
        %v2526 = vpack.c.b16 %v2350, %v2342
        %v2527 = vpack.c.b16 %v2351, %v2343
        %v2528 = vpack.c.b16 %v2360, %v2352
        %v2529 = vpack.c.b16 %v2361, %v2353
        %v2530 = vpack.c.b16 %v2362, %v2354
        %v2531 = vpack.c.b16 %v2363, %v2355
        %v2532 = vpack.c.b16 %v2364, %v2356
        %v2533 = vpack.c.b16 %v2365, %v2357
        %v2534 = vpack.c.b16 %v2366, %v2358
        %v2535 = vpack.c.b16 %v2367, %v2359
        %v2536 = vpack.c.b16 %v2376, %v2368
        %v2537 = vpack.c.b16 %v2377, %v2369
        %v2538 = vpack.c.b16 %v2378, %v2370
        %v2539 = vpack.c.b16 %v2379, %v2371
        %v2540 = vpack.c.b16 %v2380, %v2372
        %v2541 = vpack.c.b16 %v2381, %v2373
        %v2542 = vpack.c.b16 %v2382, %v2374
        %v2543 = vpack.c.b16 %v2383, %v2375
        %v2544 = vpack.c.b16 %v2392, %v2384
        %v2545 = vpack.c.b16 %v2393, %v2385
        %v2546 = vpack.c.b16 %v2394, %v2386
        %v2547 = vpack.c.b16 %v2395, %v2387
        %v2548 = vpack.c.b16 %v2396, %v2388
        %v2549 = vpack.c.b16 %v2397, %v2389
        %v2550 = vpack.c.b16 %v2398, %v2390
        %v2551 = vpack.c.b16 %v2399, %v2391
        %v2552 = vpack.c.b16 %v2408, %v2400
        %v2553 = vpack.c.b16 %v2409, %v2401
        %v2554 = vpack.c.b16 %v2410, %v2402
        %v2555 = vpack.c.b16 %v2411, %v2403
        %v2556 = vpack.c.b16 %v2412, %v2404
        %v2557 = vpack.c.b16 %v2413, %v2405
        %v2558 = vpack.c.b16 %v2414, %v2406
        %v2559 = vpack.c.b16 %v2415, %v2407
        %v2560 = vpack.c.b16 %v2424, %v2416
        %v2561 = vpack.c.b16 %v2425, %v2417
        %v2562 = vpack.c.b16 %v2426, %v2418
        %v2563 = vpack.c.b16 %v2427, %v2419
        %v2564 = vpack.c.b16 %v2428, %v2420
        %v2565 = vpack.c.b16 %v2429, %v2421
        %v2566 = vpack.c.b16 %v2430, %v2422
        %v2567 = vpack.c.b16 %v2431, %v2423
        %v2568 = vpack.c.b16 %v2440, %v2432
        %v2569 = vpack.c.b16 %v2441, %v2433
        %v2570 = vpack.c.b16 %v2442, %v2434
        %v2571 = vpack.c.b16 %v2443, %v2435
        %v2572 = vpack.c.b16 %v2444, %v2436
        %v2573 = vpack.c.b16 %v2445, %v2437
        %v2574 = vpack.c.b16 %v2446, %v2438
        %v2575 = vpack.c.b16 %v2447, %v2439
        %2704 = vmatpush.bf16.msra.mxu0 %v2504
        %2705 = vmatpush.bf16.msra.mxu0 %v2496
        %2706 = vmatpush.bf16.msra.mxu0 %v2488
        %2707 = vmatpush.bf16.msra.mxu0 %v2480
        %2708 = vmatpush.bf16.msra.mxu0 %v2472
        %2709 = vmatpush.bf16.msra.mxu0 %v2464
        %2710 = vmatpush.bf16.msra.mxu0 %v2456
        %2711 = vmatpush.bf16.msra.mxu0 %v2448
        %2712 = vmatmul.bf16.gmra.mxu0 %v1916
        %v2713 = vpop.f32.mrf.mxu0
        %v2714 = vadd.f32 %v2048, %v2713
        %v2715 = vpop.f32.mrf.mxu0
        %v2716 = vadd.f32 %v2048, %v2715
        %2717 = vdwg.mxu0
        %2718 = vmatpush.bf16.msra.mxu0 %v2568
        %2719 = vmatpush.bf16.msra.mxu0 %v2560
        %2720 = vmatpush.bf16.msra.mxu0 %v2552
        %2721 = vmatpush.bf16.msra.mxu0 %v2544
        %2722 = vmatpush.bf16.msra.mxu0 %v2536
        %2723 = vmatpush.bf16.msra.mxu0 %v2528
        %2724 = vmatpush.bf16.msra.mxu0 %v2520
        %2725 = vmatpush.bf16.msra.mxu0 %v2512
        %2726 = vmatmul.bf16.gmra.mxu0 %v1917
        %v2727 = vpop.f32.mrf.mxu0
        %v2728 = vadd.f32 %v2714, %v2727
        %v2729 = vpop.f32.mrf.mxu0
        %v2730 = vadd.f32 %v2716, %v2729
        %2731 = vdwg.mxu0
        %2732 = vmatpush.bf16.msra.mxu0 %v2505
        %2733 = vmatpush.bf16.msra.mxu0 %v2497
        %2734 = vmatpush.bf16.msra.mxu0 %v2489
        %2735 = vmatpush.bf16.msra.mxu0 %v2481
        %2736 = vmatpush.bf16.msra.mxu0 %v2473
        %2737 = vmatpush.bf16.msra.mxu0 %v2465
        %2738 = vmatpush.bf16.msra.mxu0 %v2457
        %2739 = vmatpush.bf16.msra.mxu0 %v2449
        %2740 = vmatmul.bf16.gmra.mxu0 %v1916
        %v2741 = vpop.f32.mrf.mxu0
        %v2742 = vadd.f32 %v2049, %v2741
        %v2743 = vpop.f32.mrf.mxu0
        %v2744 = vadd.f32 %v2049, %v2743
        %2745 = vdwg.mxu0
        %2746 = vmatpush.bf16.msra.mxu0 %v2569
        %2747 = vmatpush.bf16.msra.mxu0 %v2561
        %2748 = vmatpush.bf16.msra.mxu0 %v2553
        %2749 = vmatpush.bf16.msra.mxu0 %v2545
        %2750 = vmatpush.bf16.msra.mxu0 %v2537
        %2751 = vmatpush.bf16.msra.mxu0 %v2529
        %2752 = vmatpush.bf16.msra.mxu0 %v2521
        %2753 = vmatpush.bf16.msra.mxu0 %v2513
        %2754 = vmatmul.bf16.gmra.mxu0 %v1917
        %v2755 = vpop.f32.mrf.mxu0
        %v2756 = vadd.f32 %v2742, %v2755
        %v2757 = vpop.f32.mrf.mxu0
        %v2758 = vadd.f32 %v2744, %v2757
        %2759 = vdwg.mxu0
        %2760 = vmatpush.bf16.msra.mxu0 %v2506
        %2761 = vmatpush.bf16.msra.mxu0 %v2498
        %2762 = vmatpush.bf16.msra.mxu0 %v2490
        %2763 = vmatpush.bf16.msra.mxu0 %v2482
        %2764 = vmatpush.bf16.msra.mxu0 %v2474
        %2765 = vmatpush.bf16.msra.mxu0 %v2466
        %2766 = vmatpush.bf16.msra.mxu0 %v2458
        %2767 = vmatpush.bf16.msra.mxu0 %v2450
        %2768 = vmatmul.bf16.gmra.mxu0 %v1916
        %v2769 = vpop.f32.mrf.mxu0
        %v2770 = vadd.f32 %v2050, %v2769
        %v2771 = vpop.f32.mrf.mxu0
        %v2772 = vadd.f32 %v2050, %v2771
        %2773 = vdwg.mxu0
        %2774 = vmatpush.bf16.msra.mxu0 %v2570
        %2775 = vmatpush.bf16.msra.mxu0 %v2562
        %2776 = vmatpush.bf16.msra.mxu0 %v2554
        %2777 = vmatpush.bf16.msra.mxu0 %v2546
        %2778 = vmatpush.bf16.msra.mxu0 %v2538
        %2779 = vmatpush.bf16.msra.mxu0 %v2530
        %2780 = vmatpush.bf16.msra.mxu0 %v2522
        %2781 = vmatpush.bf16.msra.mxu0 %v2514
        %2782 = vmatmul.bf16.gmra.mxu0 %v1917
        %v2783 = vpop.f32.mrf.mxu0
        %v2784 = vadd.f32 %v2770, %v2783
        %v2785 = vpop.f32.mrf.mxu0
        %v2786 = vadd.f32 %v2772, %v2785
        %2787 = vdwg.mxu0
        %2788 = vmatpush.bf16.msra.mxu0 %v2507
        %2789 = vmatpush.bf16.msra.mxu0 %v2499
        %2790 = vmatpush.bf16.msra.mxu0 %v2491
        %2791 = vmatpush.bf16.msra.mxu0 %v2483
        %2792 = vmatpush.bf16.msra.mxu0 %v2475
        %2793 = vmatpush.bf16.msra.mxu0 %v2467
        %2794 = vmatpush.bf16.msra.mxu0 %v2459
        %2795 = vmatpush.bf16.msra.mxu0 %v2451
        %2796 = vmatmul.bf16.gmra.mxu0 %v1916
        %v2797 = vpop.f32.mrf.mxu0
        %v2798 = vadd.f32 %v2051, %v2797
        %v2799 = vpop.f32.mrf.mxu0
        %v2800 = vadd.f32 %v2051, %v2799
        %2801 = vdwg.mxu0
        %2802 = vmatpush.bf16.msra.mxu0 %v2571
        %2803 = vmatpush.bf16.msra.mxu0 %v2563
        %2804 = vmatpush.bf16.msra.mxu0 %v2555
        %2805 = vmatpush.bf16.msra.mxu0 %v2547
        %2806 = vmatpush.bf16.msra.mxu0 %v2539
        %2807 = vmatpush.bf16.msra.mxu0 %v2531
        %2808 = vmatpush.bf16.msra.mxu0 %v2523
        %2809 = vmatpush.bf16.msra.mxu0 %v2515
        %2810 = vmatmul.bf16.gmra.mxu0 %v1917
        %v2811 = vpop.f32.mrf.mxu0
        %v2812 = vadd.f32 %v2798, %v2811
        %v2813 = vpop.f32.mrf.mxu0
        %v2814 = vadd.f32 %v2800, %v2813
        %2815 = vdwg.mxu0
        %2816 = vmatpush.bf16.msra.mxu0 %v2508
        %2817 = vmatpush.bf16.msra.mxu0 %v2500
        %2818 = vmatpush.bf16.msra.mxu0 %v2492
        %2819 = vmatpush.bf16.msra.mxu0 %v2484
        %2820 = vmatpush.bf16.msra.mxu0 %v2476
        %2821 = vmatpush.bf16.msra.mxu0 %v2468
        %2822 = vmatpush.bf16.msra.mxu0 %v2460
        %2823 = vmatpush.bf16.msra.mxu0 %v2452
        %2824 = vmatmul.bf16.gmra.mxu0 %v1916
        %v2825 = vpop.f32.mrf.mxu0
        %v2826 = vadd.f32 %v2052, %v2825
        %v2827 = vpop.f32.mrf.mxu0
        %v2828 = vadd.f32 %v2052, %v2827
        %2829 = vdwg.mxu0
        %2830 = vmatpush.bf16.msra.mxu0 %v2572
        %2831 = vmatpush.bf16.msra.mxu0 %v2564
        %2832 = vmatpush.bf16.msra.mxu0 %v2556
        %2833 = vmatpush.bf16.msra.mxu0 %v2548
        %2834 = vmatpush.bf16.msra.mxu0 %v2540
        %2835 = vmatpush.bf16.msra.mxu0 %v2532
        %2836 = vmatpush.bf16.msra.mxu0 %v2524
        %2837 = vmatpush.bf16.msra.mxu0 %v2516
        %2838 = vmatmul.bf16.gmra.mxu0 %v1917
        %v2839 = vpop.f32.mrf.mxu0
        %v2840 = vadd.f32 %v2826, %v2839
        %v2841 = vpop.f32.mrf.mxu0
        %v2842 = vadd.f32 %v2828, %v2841
        %2843 = vdwg.mxu0
        %2844 = vmatpush.bf16.msra.mxu0 %v2509
        %2845 = vmatpush.bf16.msra.mxu0 %v2501
        %2846 = vmatpush.bf16.msra.mxu0 %v2493
        %2847 = vmatpush.bf16.msra.mxu0 %v2485
        %2848 = vmatpush.bf16.msra.mxu0 %v2477
        %2849 = vmatpush.bf16.msra.mxu0 %v2469
        %2850 = vmatpush.bf16.msra.mxu0 %v2461
        %2851 = vmatpush.bf16.msra.mxu0 %v2453
        %2852 = vmatmul.bf16.gmra.mxu0 %v1916
        %v2853 = vpop.f32.mrf.mxu0
        %v2854 = vadd.f32 %v2053, %v2853
        %v2855 = vpop.f32.mrf.mxu0
        %v2856 = vadd.f32 %v2053, %v2855
        %2857 = vdwg.mxu0
        %2858 = vmatpush.bf16.msra.mxu0 %v2573
        %2859 = vmatpush.bf16.msra.mxu0 %v2565
        %2860 = vmatpush.bf16.msra.mxu0 %v2557
        %2861 = vmatpush.bf16.msra.mxu0 %v2549
        %2862 = vmatpush.bf16.msra.mxu0 %v2541
        %2863 = vmatpush.bf16.msra.mxu0 %v2533
        %2864 = vmatpush.bf16.msra.mxu0 %v2525
        %2865 = vmatpush.bf16.msra.mxu0 %v2517
        %2866 = vmatmul.bf16.gmra.mxu0 %v1917
        %v2867 = vpop.f32.mrf.mxu0
        %v2868 = vadd.f32 %v2854, %v2867
        %v2869 = vpop.f32.mrf.mxu0
        %v2870 = vadd.f32 %v2856, %v2869
        %2871 = vdwg.mxu0
        %2872 = vmatpush.bf16.msra.mxu0 %v2510
        %2873 = vmatpush.bf16.msra.mxu0 %v2502
        %2874 = vmatpush.bf16.msra.mxu0 %v2494
        %2875 = vmatpush.bf16.msra.mxu0 %v2486
        %2876 = vmatpush.bf16.msra.mxu0 %v2478
        %2877 = vmatpush.bf16.msra.mxu0 %v2470
        %2878 = vmatpush.bf16.msra.mxu0 %v2462
        %2879 = vmatpush.bf16.msra.mxu0 %v2454
        %2880 = vmatmul.bf16.gmra.mxu0 %v1916
        %v2881 = vpop.f32.mrf.mxu0
        %v2882 = vadd.f32 %v2054, %v2881
        %v2883 = vpop.f32.mrf.mxu0
        %v2884 = vadd.f32 %v2054, %v2883
        %2885 = vdwg.mxu0
        %2886 = vmatpush.bf16.msra.mxu0 %v2574
        %2887 = vmatpush.bf16.msra.mxu0 %v2566
        %2888 = vmatpush.bf16.msra.mxu0 %v2558
        %2889 = vmatpush.bf16.msra.mxu0 %v2550
        %2890 = vmatpush.bf16.msra.mxu0 %v2542
        %2891 = vmatpush.bf16.msra.mxu0 %v2534
        %2892 = vmatpush.bf16.msra.mxu0 %v2526
        %2893 = vmatpush.bf16.msra.mxu0 %v2518
        %2894 = vmatmul.bf16.gmra.mxu0 %v1917
        %v2895 = vpop.f32.mrf.mxu0
        %v2896 = vadd.f32 %v2882, %v2895
        %v2897 = vpop.f32.mrf.mxu0
        %v2898 = vadd.f32 %v2884, %v2897
        %2899 = vdwg.mxu0
        %2900 = vmatpush.bf16.msra.mxu0 %v2511
        %2901 = vmatpush.bf16.msra.mxu0 %v2503
        %2902 = vmatpush.bf16.msra.mxu0 %v2495
        %2903 = vmatpush.bf16.msra.mxu0 %v2487
        %2904 = vmatpush.bf16.msra.mxu0 %v2479
        %2905 = vmatpush.bf16.msra.mxu0 %v2471
        %2906 = vmatpush.bf16.msra.mxu0 %v2463
        %2907 = vmatpush.bf16.msra.mxu0 %v2455
        %2908 = vmatmul.bf16.gmra.mxu0 %v1916
        %v2909 = vpop.f32.mrf.mxu0
        %v2910 = vadd.f32 %v2055, %v2909
        %v2911 = vpop.f32.mrf.mxu0
        %v2912 = vadd.f32 %v2055, %v2911
        %2913 = vdwg.mxu0
        %2914 = vmatpush.bf16.msra.mxu0 %v2575
        %2915 = vmatpush.bf16.msra.mxu0 %v2567
        %2916 = vmatpush.bf16.msra.mxu0 %v2559
        %2917 = vmatpush.bf16.msra.mxu0 %v2551
        %2918 = vmatpush.bf16.msra.mxu0 %v2543
        %2919 = vmatpush.bf16.msra.mxu0 %v2535
        %2920 = vmatpush.bf16.msra.mxu0 %v2527
        %2921 = vmatpush.bf16.msra.mxu0 %v2519
        %2922 = vmatmul.bf16.gmra.mxu0 %v1917
        %v2923 = vpop.f32.mrf.mxu0
        %v2924 = vadd.f32 %v2910, %v2923
        %v2925 = vpop.f32.mrf.mxu0
        %v2926 = vadd.f32 %v2912, %v2925
        %2927 = vdwg.mxu0
        %v2928 = vmul.f32 %v2728, 0.5
        %v2929 = vmul.f32 %v2756, 0.5
        %v2930 = vmul.f32 %v2784, 0.5
        %v2931 = vmul.f32 %v2812, 0.5
        %v2932 = vmul.f32 %v2840, 0.5
        %v2933 = vmul.f32 %v2868, 0.5
        %v2934 = vmul.f32 %v2896, 0.5
        %v2935 = vmul.f32 %v2924, 0.5
        %v2936 = vmul.f32 %v2730, 0.5
        %v2937 = vmul.f32 %v2758, 0.5
        %v2938 = vmul.f32 %v2786, 0.5
        %v2939 = vmul.f32 %v2814, 0.5
        %v2940 = vmul.f32 %v2842, 0.5
        %v2941 = vmul.f32 %v2870, 0.5
        %v2942 = vmul.f32 %v2898, 0.5
        %v2943 = vmul.f32 %v2926, 0.5
        %v2944 = vmul.f32 %v2728, 0.70710677
        %v2945 = vmul.f32 %v2756, 0.70710677
        %v2946 = vmul.f32 %v2784, 0.70710677
        %v2947 = vmul.f32 %v2812, 0.70710677
        %v2948 = vmul.f32 %v2840, 0.70710677
        %v2949 = vmul.f32 %v2868, 0.70710677
        %v2950 = vmul.f32 %v2896, 0.70710677
        %v2951 = vmul.f32 %v2924, 0.70710677
        %v2952 = vmul.f32 %v2730, 0.70710677
        %v2953 = vmul.f32 %v2758, 0.70710677
        %v2954 = vmul.f32 %v2786, 0.70710677
        %v2955 = vmul.f32 %v2814, 0.70710677
        %v2956 = vmul.f32 %v2842, 0.70710677
        %v2957 = vmul.f32 %v2870, 0.70710677
        %v2958 = vmul.f32 %v2898, 0.70710677
        %v2959 = vmul.f32 %v2926, 0.70710677
        %v2960 = vmul.f32 %v2944, %v2944
        %v2961 = vmin.f32 16.0, %v2960
        %v2962 = vmul.f32 %v2961, 2.1237322e-06
        %v2963 = vadd.f32 %v2962, 0.00028619796
        %v2964 = vmul.f32 %v2961, %v2963
        %v2965 = vadd.f32 %v2964, 0.0036580483
        %v2966 = vmul.f32 %v2961, %v2965
        %v2967 = vadd.f32 %v2966, 0.05243302
        %v2968 = vmul.f32 %v2961, %v2967
        %v2969 = vadd.f32 %v2968, 0.18741608
        %v2970 = vmul.f32 %v2961, %v2969
        %v2971 = vadd.f32 %v2970, 1.1283791
        %v2972 = vmul.f32 %v2944, %v2971
        %v2973 = vmul.f32 %v2961, 3.8918573e-05
        %v2974 = vadd.f32 %v2973, 0.001143296
        %v2975 = vmul.f32 %v2961, %v2974
        %v2976 = vadd.f32 %v2975, 0.014752088
        %v2977 = vmul.f32 %v2961, %v2976
        %v2978 = vadd.f32 %v2977, 0.112945676
        %v2979 = vmul.f32 %v2961, %v2978
        %v2980 = vadd.f32 %v2979, 0.4994258
        %v2981 = vmul.f32 %v2961, %v2980
        %v2982 = vadd.f32 %v2981, 1.0
        %v2983 = vrcp.pop %v2982
        %v2984 = vmul.f32 %v2982, %v2983
        %v2985 = vsub.f32 1.0, %v2984
        %v2986 = vmul.f32 %v2983, %v2985
        %v2987 = vadd.f32 %v2983, %v2986
        %vm2988 = vweird.f32 %v2982
        %vm2989 = vweird.f32 %v2983
        %vm2990 = vmor %vm2988, %vm2989
        %v2991 = vsel %vm2990, %v2983, %v2987
        %v2992 = vand.u32 2147483647, %v2982
        %vm2993 = vcmp.eq.f32.partialorder %v2992, 8.507059e+37
        %v2994 = vand.u32 %v2982, 2147483648
        %v2995 = vor.u32 1.1754944e-38, %v2994
        %v2996 = vsel %vm2993, %v2995, %v2991
        %v2997 = vmul.f32 %v2972, %v2996
        %v2998 = vmin.f32 %v2997, 1.0
        %v2999 = vmax.f32 %v2998, -1.0
        %v3000 = vmul.f32 %v2945, %v2945
        %v3001 = vmin.f32 16.0, %v3000
        %v3002 = vmul.f32 %v3001, 2.1237322e-06
        %v3003 = vadd.f32 %v3002, 0.00028619796
        %v3004 = vmul.f32 %v3001, %v3003
        %v3005 = vadd.f32 %v3004, 0.0036580483
        %v3006 = vmul.f32 %v3001, %v3005
        %v3007 = vadd.f32 %v3006, 0.05243302
        %v3008 = vmul.f32 %v3001, %v3007
        %v3009 = vadd.f32 %v3008, 0.18741608
        %v3010 = vmul.f32 %v3001, %v3009
        %v3011 = vadd.f32 %v3010, 1.1283791
        %v3012 = vmul.f32 %v2945, %v3011
        %v3013 = vmul.f32 %v3001, 3.8918573e-05
        %v3014 = vadd.f32 %v3013, 0.001143296
        %v3015 = vmul.f32 %v3001, %v3014
        %v3016 = vadd.f32 %v3015, 0.014752088
        %v3017 = vmul.f32 %v3001, %v3016
        %v3018 = vadd.f32 %v3017, 0.112945676
        %v3019 = vmul.f32 %v3001, %v3018
        %v3020 = vadd.f32 %v3019, 0.4994258
        %v3021 = vmul.f32 %v3001, %v3020
        %v3022 = vadd.f32 %v3021, 1.0
        %v3023 = vrcp.pop %v3022
        %v3024 = vmul.f32 %v3022, %v3023
        %v3025 = vsub.f32 1.0, %v3024
        %v3026 = vmul.f32 %v3023, %v3025
        %v3027 = vadd.f32 %v3023, %v3026
        %vm3028 = vweird.f32 %v3022
        %vm3029 = vweird.f32 %v3023
        %vm3030 = vmor %vm3028, %vm3029
        %v3031 = vsel %vm3030, %v3023, %v3027
        %v3032 = vand.u32 2147483647, %v3022
        %vm3033 = vcmp.eq.f32.partialorder %v3032, 8.507059e+37
        %v3034 = vand.u32 %v3022, 2147483648
        %v3035 = vor.u32 1.1754944e-38, %v3034
        %v3036 = vsel %vm3033, %v3035, %v3031
        %v3037 = vmul.f32 %v3012, %v3036
        %v3038 = vmin.f32 %v3037, 1.0
        %v3039 = vmax.f32 %v3038, -1.0
        %v3040 = vmul.f32 %v2946, %v2946
        %v3041 = vmin.f32 16.0, %v3040
        %v3042 = vmul.f32 %v3041, 2.1237322e-06
        %v3043 = vadd.f32 %v3042, 0.00028619796
        %v3044 = vmul.f32 %v3041, %v3043
        %v3045 = vadd.f32 %v3044, 0.0036580483
        %v3046 = vmul.f32 %v3041, %v3045
        %v3047 = vadd.f32 %v3046, 0.05243302
        %v3048 = vmul.f32 %v3041, %v3047
        %v3049 = vadd.f32 %v3048, 0.18741608
        %v3050 = vmul.f32 %v3041, %v3049
        %v3051 = vadd.f32 %v3050, 1.1283791
        %v3052 = vmul.f32 %v2946, %v3051
        %v3053 = vmul.f32 %v3041, 3.8918573e-05
        %v3054 = vadd.f32 %v3053, 0.001143296
        %v3055 = vmul.f32 %v3041, %v3054
        %v3056 = vadd.f32 %v3055, 0.014752088
        %v3057 = vmul.f32 %v3041, %v3056
        %v3058 = vadd.f32 %v3057, 0.112945676
        %v3059 = vmul.f32 %v3041, %v3058
        %v3060 = vadd.f32 %v3059, 0.4994258
        %v3061 = vmul.f32 %v3041, %v3060
        %v3062 = vadd.f32 %v3061, 1.0
        %v3063 = vrcp.pop %v3062
        %v3064 = vmul.f32 %v3062, %v3063
        %v3065 = vsub.f32 1.0, %v3064
        %v3066 = vmul.f32 %v3063, %v3065
        %v3067 = vadd.f32 %v3063, %v3066
        %vm3068 = vweird.f32 %v3062
        %vm3069 = vweird.f32 %v3063
        %vm3070 = vmor %vm3068, %vm3069
        %v3071 = vsel %vm3070, %v3063, %v3067
        %v3072 = vand.u32 2147483647, %v3062
        %vm3073 = vcmp.eq.f32.partialorder %v3072, 8.507059e+37
        %v3074 = vand.u32 %v3062, 2147483648
        %v3075 = vor.u32 1.1754944e-38, %v3074
        %v3076 = vsel %vm3073, %v3075, %v3071
        %v3077 = vmul.f32 %v3052, %v3076
        %v3078 = vmin.f32 %v3077, 1.0
        %v3079 = vmax.f32 %v3078, -1.0
        %v3080 = vmul.f32 %v2947, %v2947
        %v3081 = vmin.f32 16.0, %v3080
        %v3082 = vmul.f32 %v3081, 2.1237322e-06
        %v3083 = vadd.f32 %v3082, 0.00028619796
        %v3084 = vmul.f32 %v3081, %v3083
        %v3085 = vadd.f32 %v3084, 0.0036580483
        %v3086 = vmul.f32 %v3081, %v3085
        %v3087 = vadd.f32 %v3086, 0.05243302
        %v3088 = vmul.f32 %v3081, %v3087
        %v3089 = vadd.f32 %v3088, 0.18741608
        %v3090 = vmul.f32 %v3081, %v3089
        %v3091 = vadd.f32 %v3090, 1.1283791
        %v3092 = vmul.f32 %v2947, %v3091
        %v3093 = vmul.f32 %v3081, 3.8918573e-05
        %v3094 = vadd.f32 %v3093, 0.001143296
        %v3095 = vmul.f32 %v3081, %v3094
        %v3096 = vadd.f32 %v3095, 0.014752088
        %v3097 = vmul.f32 %v3081, %v3096
        %v3098 = vadd.f32 %v3097, 0.112945676
        %v3099 = vmul.f32 %v3081, %v3098
        %v3100 = vadd.f32 %v3099, 0.4994258
        %v3101 = vmul.f32 %v3081, %v3100
        %v3102 = vadd.f32 %v3101, 1.0
        %v3103 = vrcp.pop %v3102
        %v3104 = vmul.f32 %v3102, %v3103
        %v3105 = vsub.f32 1.0, %v3104
        %v3106 = vmul.f32 %v3103, %v3105
        %v3107 = vadd.f32 %v3103, %v3106
        %vm3108 = vweird.f32 %v3102
        %vm3109 = vweird.f32 %v3103
        %vm3110 = vmor %vm3108, %vm3109
        %v3111 = vsel %vm3110, %v3103, %v3107
        %v3112 = vand.u32 2147483647, %v3102
        %vm3113 = vcmp.eq.f32.partialorder %v3112, 8.507059e+37
        %v3114 = vand.u32 %v3102, 2147483648
        %v3115 = vor.u32 1.1754944e-38, %v3114
        %v3116 = vsel %vm3113, %v3115, %v3111
        %v3117 = vmul.f32 %v3092, %v3116
        %v3118 = vmin.f32 %v3117, 1.0
        %v3119 = vmax.f32 %v3118, -1.0
        %v3120 = vmul.f32 %v2948, %v2948
        %v3121 = vmin.f32 16.0, %v3120
        %v3122 = vmul.f32 %v3121, 2.1237322e-06
        %v3123 = vadd.f32 %v3122, 0.00028619796
        %v3124 = vmul.f32 %v3121, %v3123
        %v3125 = vadd.f32 %v3124, 0.0036580483
        %v3126 = vmul.f32 %v3121, %v3125
        %v3127 = vadd.f32 %v3126, 0.05243302
        %v3128 = vmul.f32 %v3121, %v3127
        %v3129 = vadd.f32 %v3128, 0.18741608
        %v3130 = vmul.f32 %v3121, %v3129
        %v3131 = vadd.f32 %v3130, 1.1283791
        %v3132 = vmul.f32 %v2948, %v3131
        %v3133 = vmul.f32 %v3121, 3.8918573e-05
        %v3134 = vadd.f32 %v3133, 0.001143296
        %v3135 = vmul.f32 %v3121, %v3134
        %v3136 = vadd.f32 %v3135, 0.014752088
        %v3137 = vmul.f32 %v3121, %v3136
        %v3138 = vadd.f32 %v3137, 0.112945676
        %v3139 = vmul.f32 %v3121, %v3138
        %v3140 = vadd.f32 %v3139, 0.4994258
        %v3141 = vmul.f32 %v3121, %v3140
        %v3142 = vadd.f32 %v3141, 1.0
        %v3143 = vrcp.pop %v3142
        %v3144 = vmul.f32 %v3142, %v3143
        %v3145 = vsub.f32 1.0, %v3144
        %v3146 = vmul.f32 %v3143, %v3145
        %v3147 = vadd.f32 %v3143, %v3146
        %vm3148 = vweird.f32 %v3142
        %vm3149 = vweird.f32 %v3143
        %vm3150 = vmor %vm3148, %vm3149
        %v3151 = vsel %vm3150, %v3143, %v3147
        %v3152 = vand.u32 2147483647, %v3142
        %vm3153 = vcmp.eq.f32.partialorder %v3152, 8.507059e+37
        %v3154 = vand.u32 %v3142, 2147483648
        %v3155 = vor.u32 1.1754944e-38, %v3154
        %v3156 = vsel %vm3153, %v3155, %v3151
        %v3157 = vmul.f32 %v3132, %v3156
        %v3158 = vmin.f32 %v3157, 1.0
        %v3159 = vmax.f32 %v3158, -1.0
        %v3160 = vmul.f32 %v2949, %v2949
        %v3161 = vmin.f32 16.0, %v3160
        %v3162 = vmul.f32 %v3161, 2.1237322e-06
        %v3163 = vadd.f32 %v3162, 0.00028619796
        %v3164 = vmul.f32 %v3161, %v3163
        %v3165 = vadd.f32 %v3164, 0.0036580483
        %v3166 = vmul.f32 %v3161, %v3165
        %v3167 = vadd.f32 %v3166, 0.05243302
        %v3168 = vmul.f32 %v3161, %v3167
        %v3169 = vadd.f32 %v3168, 0.18741608
        %v3170 = vmul.f32 %v3161, %v3169
        %v3171 = vadd.f32 %v3170, 1.1283791
        %v3172 = vmul.f32 %v2949, %v3171
        %v3173 = vmul.f32 %v3161, 3.8918573e-05
        %v3174 = vadd.f32 %v3173, 0.001143296
        %v3175 = vmul.f32 %v3161, %v3174
        %v3176 = vadd.f32 %v3175, 0.014752088
        %v3177 = vmul.f32 %v3161, %v3176
        %v3178 = vadd.f32 %v3177, 0.112945676
        %v3179 = vmul.f32 %v3161, %v3178
        %v3180 = vadd.f32 %v3179, 0.4994258
        %v3181 = vmul.f32 %v3161, %v3180
        %v3182 = vadd.f32 %v3181, 1.0
        %v3183 = vrcp.pop %v3182
        %v3184 = vmul.f32 %v3182, %v3183
        %v3185 = vsub.f32 1.0, %v3184
        %v3186 = vmul.f32 %v3183, %v3185
        %v3187 = vadd.f32 %v3183, %v3186
        %vm3188 = vweird.f32 %v3182
        %vm3189 = vweird.f32 %v3183
        %vm3190 = vmor %vm3188, %vm3189
        %v3191 = vsel %vm3190, %v3183, %v3187
        %v3192 = vand.u32 2147483647, %v3182
        %vm3193 = vcmp.eq.f32.partialorder %v3192, 8.507059e+37
        %v3194 = vand.u32 %v3182, 2147483648
        %v3195 = vor.u32 1.1754944e-38, %v3194
        %v3196 = vsel %vm3193, %v3195, %v3191
        %v3197 = vmul.f32 %v3172, %v3196
        %v3198 = vmin.f32 %v3197, 1.0
        %v3199 = vmax.f32 %v3198, -1.0
        %v3200 = vmul.f32 %v2950, %v2950
        %v3201 = vmin.f32 16.0, %v3200
        %v3202 = vmul.f32 %v3201, 2.1237322e-06
        %v3203 = vadd.f32 %v3202, 0.00028619796
        %v3204 = vmul.f32 %v3201, %v3203
        %v3205 = vadd.f32 %v3204, 0.0036580483
        %v3206 = vmul.f32 %v3201, %v3205
        %v3207 = vadd.f32 %v3206, 0.05243302
        %v3208 = vmul.f32 %v3201, %v3207
        %v3209 = vadd.f32 %v3208, 0.18741608
        %v3210 = vmul.f32 %v3201, %v3209
        %v3211 = vadd.f32 %v3210, 1.1283791
        %v3212 = vmul.f32 %v2950, %v3211
        %v3213 = vmul.f32 %v3201, 3.8918573e-05
        %v3214 = vadd.f32 %v3213, 0.001143296
        %v3215 = vmul.f32 %v3201, %v3214
        %v3216 = vadd.f32 %v3215, 0.014752088
        %v3217 = vmul.f32 %v3201, %v3216
        %v3218 = vadd.f32 %v3217, 0.112945676
        %v3219 = vmul.f32 %v3201, %v3218
        %v3220 = vadd.f32 %v3219, 0.4994258
        %v3221 = vmul.f32 %v3201, %v3220
        %v3222 = vadd.f32 %v3221, 1.0
        %v3223 = vrcp.pop %v3222
        %v3224 = vmul.f32 %v3222, %v3223
        %v3225 = vsub.f32 1.0, %v3224
        %v3226 = vmul.f32 %v3223, %v3225
        %v3227 = vadd.f32 %v3223, %v3226
        %vm3228 = vweird.f32 %v3222
        %vm3229 = vweird.f32 %v3223
        %vm3230 = vmor %vm3228, %vm3229
        %v3231 = vsel %vm3230, %v3223, %v3227
        %v3232 = vand.u32 2147483647, %v3222
        %vm3233 = vcmp.eq.f32.partialorder %v3232, 8.507059e+37
        %v3234 = vand.u32 %v3222, 2147483648
        %v3235 = vor.u32 1.1754944e-38, %v3234
        %v3236 = vsel %vm3233, %v3235, %v3231
        %v3237 = vmul.f32 %v3212, %v3236
        %v3238 = vmin.f32 %v3237, 1.0
        %v3239 = vmax.f32 %v3238, -1.0
        %v3240 = vmul.f32 %v2951, %v2951
        %v3241 = vmin.f32 16.0, %v3240
        %v3242 = vmul.f32 %v3241, 2.1237322e-06
        %v3243 = vadd.f32 %v3242, 0.00028619796
        %v3244 = vmul.f32 %v3241, %v3243
        %v3245 = vadd.f32 %v3244, 0.0036580483
        %v3246 = vmul.f32 %v3241, %v3245
        %v3247 = vadd.f32 %v3246, 0.05243302
        %v3248 = vmul.f32 %v3241, %v3247
        %v3249 = vadd.f32 %v3248, 0.18741608
        %v3250 = vmul.f32 %v3241, %v3249
        %v3251 = vadd.f32 %v3250, 1.1283791
        %v3252 = vmul.f32 %v2951, %v3251
        %v3253 = vmul.f32 %v3241, 3.8918573e-05
        %v3254 = vadd.f32 %v3253, 0.001143296
        %v3255 = vmul.f32 %v3241, %v3254
        %v3256 = vadd.f32 %v3255, 0.014752088
        %v3257 = vmul.f32 %v3241, %v3256
        %v3258 = vadd.f32 %v3257, 0.112945676
        %v3259 = vmul.f32 %v3241, %v3258
        %v3260 = vadd.f32 %v3259, 0.4994258
        %v3261 = vmul.f32 %v3241, %v3260
        %v3262 = vadd.f32 %v3261, 1.0
        %v3263 = vrcp.pop %v3262
        %v3264 = vmul.f32 %v3262, %v3263
        %v3265 = vsub.f32 1.0, %v3264
        %v3266 = vmul.f32 %v3263, %v3265
        %v3267 = vadd.f32 %v3263, %v3266
        %vm3268 = vweird.f32 %v3262
        %vm3269 = vweird.f32 %v3263
        %vm3270 = vmor %vm3268, %vm3269
        %v3271 = vsel %vm3270, %v3263, %v3267
        %v3272 = vand.u32 2147483647, %v3262
        %vm3273 = vcmp.eq.f32.partialorder %v3272, 8.507059e+37
        %v3274 = vand.u32 %v3262, 2147483648
        %v3275 = vor.u32 1.1754944e-38, %v3274
        %v3276 = vsel %vm3273, %v3275, %v3271
        %v3277 = vmul.f32 %v3252, %v3276
        %v3278 = vmin.f32 %v3277, 1.0
        %v3279 = vmax.f32 %v3278, -1.0
        %v3280 = vmul.f32 %v2952, %v2952
        %v3281 = vmin.f32 16.0, %v3280
        %v3282 = vmul.f32 %v3281, 2.1237322e-06
        %v3283 = vadd.f32 %v3282, 0.00028619796
        %v3284 = vmul.f32 %v3281, %v3283
        %v3285 = vadd.f32 %v3284, 0.0036580483
        %v3286 = vmul.f32 %v3281, %v3285
        %v3287 = vadd.f32 %v3286, 0.05243302
        %v3288 = vmul.f32 %v3281, %v3287
        %v3289 = vadd.f32 %v3288, 0.18741608
        %v3290 = vmul.f32 %v3281, %v3289
        %v3291 = vadd.f32 %v3290, 1.1283791
        %v3292 = vmul.f32 %v2952, %v3291
        %v3293 = vmul.f32 %v3281, 3.8918573e-05
        %v3294 = vadd.f32 %v3293, 0.001143296
        %v3295 = vmul.f32 %v3281, %v3294
        %v3296 = vadd.f32 %v3295, 0.014752088
        %v3297 = vmul.f32 %v3281, %v3296
        %v3298 = vadd.f32 %v3297, 0.112945676
        %v3299 = vmul.f32 %v3281, %v3298
        %v3300 = vadd.f32 %v3299, 0.4994258
        %v3301 = vmul.f32 %v3281, %v3300
        %v3302 = vadd.f32 %v3301, 1.0
        %v3303 = vrcp.pop %v3302
        %v3304 = vmul.f32 %v3302, %v3303
        %v3305 = vsub.f32 1.0, %v3304
        %v3306 = vmul.f32 %v3303, %v3305
        %v3307 = vadd.f32 %v3303, %v3306
        %vm3308 = vweird.f32 %v3302
        %vm3309 = vweird.f32 %v3303
        %vm3310 = vmor %vm3308, %vm3309
        %v3311 = vsel %vm3310, %v3303, %v3307
        %v3312 = vand.u32 2147483647, %v3302
        %vm3313 = vcmp.eq.f32.partialorder %v3312, 8.507059e+37
        %v3314 = vand.u32 %v3302, 2147483648
        %v3315 = vor.u32 1.1754944e-38, %v3314
        %v3316 = vsel %vm3313, %v3315, %v3311
        %v3317 = vmul.f32 %v3292, %v3316
        %v3318 = vmin.f32 %v3317, 1.0
        %v3319 = vmax.f32 %v3318, -1.0
        %v3320 = vmul.f32 %v2953, %v2953
        %v3321 = vmin.f32 16.0, %v3320
        %v3322 = vmul.f32 %v3321, 2.1237322e-06
        %v3323 = vadd.f32 %v3322, 0.00028619796
        %v3324 = vmul.f32 %v3321, %v3323
        %v3325 = vadd.f32 %v3324, 0.0036580483
        %v3326 = vmul.f32 %v3321, %v3325
        %v3327 = vadd.f32 %v3326, 0.05243302
        %v3328 = vmul.f32 %v3321, %v3327
        %v3329 = vadd.f32 %v3328, 0.18741608
        %v3330 = vmul.f32 %v3321, %v3329
        %v3331 = vadd.f32 %v3330, 1.1283791
        %v3332 = vmul.f32 %v2953, %v3331
        %v3333 = vmul.f32 %v3321, 3.8918573e-05
        %v3334 = vadd.f32 %v3333, 0.001143296
        %v3335 = vmul.f32 %v3321, %v3334
        %v3336 = vadd.f32 %v3335, 0.014752088
        %v3337 = vmul.f32 %v3321, %v3336
        %v3338 = vadd.f32 %v3337, 0.112945676
        %v3339 = vmul.f32 %v3321, %v3338
        %v3340 = vadd.f32 %v3339, 0.4994258
        %v3341 = vmul.f32 %v3321, %v3340
        %v3342 = vadd.f32 %v3341, 1.0
        %v3343 = vrcp.pop %v3342
        %v3344 = vmul.f32 %v3342, %v3343
        %v3345 = vsub.f32 1.0, %v3344
        %v3346 = vmul.f32 %v3343, %v3345
        %v3347 = vadd.f32 %v3343, %v3346
        %vm3348 = vweird.f32 %v3342
        %vm3349 = vweird.f32 %v3343
        %vm3350 = vmor %vm3348, %vm3349
        %v3351 = vsel %vm3350, %v3343, %v3347
        %v3352 = vand.u32 2147483647, %v3342
        %vm3353 = vcmp.eq.f32.partialorder %v3352, 8.507059e+37
        %v3354 = vand.u32 %v3342, 2147483648
        %v3355 = vor.u32 1.1754944e-38, %v3354
        %v3356 = vsel %vm3353, %v3355, %v3351
        %v3357 = vmul.f32 %v3332, %v3356
        %v3358 = vmin.f32 %v3357, 1.0
        %v3359 = vmax.f32 %v3358, -1.0
        %v3360 = vmul.f32 %v2954, %v2954
        %v3361 = vmin.f32 16.0, %v3360
        %v3362 = vmul.f32 %v3361, 2.1237322e-06
        %v3363 = vadd.f32 %v3362, 0.00028619796
        %v3364 = vmul.f32 %v3361, %v3363
        %v3365 = vadd.f32 %v3364, 0.0036580483
        %v3366 = vmul.f32 %v3361, %v3365
        %v3367 = vadd.f32 %v3366, 0.05243302
        %v3368 = vmul.f32 %v3361, %v3367
        %v3369 = vadd.f32 %v3368, 0.18741608
        %v3370 = vmul.f32 %v3361, %v3369
        %v3371 = vadd.f32 %v3370, 1.1283791
        %v3372 = vmul.f32 %v2954, %v3371
        %v3373 = vmul.f32 %v3361, 3.8918573e-05
        %v3374 = vadd.f32 %v3373, 0.001143296
        %v3375 = vmul.f32 %v3361, %v3374
        %v3376 = vadd.f32 %v3375, 0.014752088
        %v3377 = vmul.f32 %v3361, %v3376
        %v3378 = vadd.f32 %v3377, 0.112945676
        %v3379 = vmul.f32 %v3361, %v3378
        %v3380 = vadd.f32 %v3379, 0.4994258
        %v3381 = vmul.f32 %v3361, %v3380
        %v3382 = vadd.f32 %v3381, 1.0
        %v3383 = vrcp.pop %v3382
        %v3384 = vmul.f32 %v3382, %v3383
        %v3385 = vsub.f32 1.0, %v3384
        %v3386 = vmul.f32 %v3383, %v3385
        %v3387 = vadd.f32 %v3383, %v3386
        %vm3388 = vweird.f32 %v3382
        %vm3389 = vweird.f32 %v3383
        %vm3390 = vmor %vm3388, %vm3389
        %v3391 = vsel %vm3390, %v3383, %v3387
        %v3392 = vand.u32 2147483647, %v3382
        %vm3393 = vcmp.eq.f32.partialorder %v3392, 8.507059e+37
        %v3394 = vand.u32 %v3382, 2147483648
        %v3395 = vor.u32 1.1754944e-38, %v3394
        %v3396 = vsel %vm3393, %v3395, %v3391
        %v3397 = vmul.f32 %v3372, %v3396
        %v3398 = vmin.f32 %v3397, 1.0
        %v3399 = vmax.f32 %v3398, -1.0
        %v3400 = vmul.f32 %v2955, %v2955
        %v3401 = vmin.f32 16.0, %v3400
        %v3402 = vmul.f32 %v3401, 2.1237322e-06
        %v3403 = vadd.f32 %v3402, 0.00028619796
        %v3404 = vmul.f32 %v3401, %v3403
        %v3405 = vadd.f32 %v3404, 0.0036580483
        %v3406 = vmul.f32 %v3401, %v3405
        %v3407 = vadd.f32 %v3406, 0.05243302
        %v3408 = vmul.f32 %v3401, %v3407
        %v3409 = vadd.f32 %v3408, 0.18741608
        %v3410 = vmul.f32 %v3401, %v3409
        %v3411 = vadd.f32 %v3410, 1.1283791
        %v3412 = vmul.f32 %v2955, %v3411
        %v3413 = vmul.f32 %v3401, 3.8918573e-05
        %v3414 = vadd.f32 %v3413, 0.001143296
        %v3415 = vmul.f32 %v3401, %v3414
        %v3416 = vadd.f32 %v3415, 0.014752088
        %v3417 = vmul.f32 %v3401, %v3416
        %v3418 = vadd.f32 %v3417, 0.112945676
        %v3419 = vmul.f32 %v3401, %v3418
        %v3420 = vadd.f32 %v3419, 0.4994258
        %v3421 = vmul.f32 %v3401, %v3420
        %v3422 = vadd.f32 %v3421, 1.0
        %v3423 = vrcp.pop %v3422
        %v3424 = vmul.f32 %v3422, %v3423
        %v3425 = vsub.f32 1.0, %v3424
        %v3426 = vmul.f32 %v3423, %v3425
        %v3427 = vadd.f32 %v3423, %v3426
        %vm3428 = vweird.f32 %v3422
        %vm3429 = vweird.f32 %v3423
        %vm3430 = vmor %vm3428, %vm3429
        %v3431 = vsel %vm3430, %v3423, %v3427
        %v3432 = vand.u32 2147483647, %v3422
        %vm3433 = vcmp.eq.f32.partialorder %v3432, 8.507059e+37
        %v3434 = vand.u32 %v3422, 2147483648
        %v3435 = vor.u32 1.1754944e-38, %v3434
        %v3436 = vsel %vm3433, %v3435, %v3431
        %v3437 = vmul.f32 %v3412, %v3436
        %v3438 = vmin.f32 %v3437, 1.0
        %v3439 = vmax.f32 %v3438, -1.0
        %v3440 = vmul.f32 %v2956, %v2956
        %v3441 = vmin.f32 16.0, %v3440
        %v3442 = vmul.f32 %v3441, 2.1237322e-06
        %v3443 = vadd.f32 %v3442, 0.00028619796
        %v3444 = vmul.f32 %v3441, %v3443
        %v3445 = vadd.f32 %v3444, 0.0036580483
        %v3446 = vmul.f32 %v3441, %v3445
        %v3447 = vadd.f32 %v3446, 0.05243302
        %v3448 = vmul.f32 %v3441, %v3447
        %v3449 = vadd.f32 %v3448, 0.18741608
        %v3450 = vmul.f32 %v3441, %v3449
        %v3451 = vadd.f32 %v3450, 1.1283791
        %v3452 = vmul.f32 %v2956, %v3451
        %v3453 = vmul.f32 %v3441, 3.8918573e-05
        %v3454 = vadd.f32 %v3453, 0.001143296
        %v3455 = vmul.f32 %v3441, %v3454
        %v3456 = vadd.f32 %v3455, 0.014752088
        %v3457 = vmul.f32 %v3441, %v3456
        %v3458 = vadd.f32 %v3457, 0.112945676
        %v3459 = vmul.f32 %v3441, %v3458
        %v3460 = vadd.f32 %v3459, 0.4994258
        %v3461 = vmul.f32 %v3441, %v3460
        %v3462 = vadd.f32 %v3461, 1.0
        %v3463 = vrcp.pop %v3462
        %v3464 = vmul.f32 %v3462, %v3463
        %v3465 = vsub.f32 1.0, %v3464
        %v3466 = vmul.f32 %v3463, %v3465
        %v3467 = vadd.f32 %v3463, %v3466
        %vm3468 = vweird.f32 %v3462
        %vm3469 = vweird.f32 %v3463
        %vm3470 = vmor %vm3468, %vm3469
        %v3471 = vsel %vm3470, %v3463, %v3467
        %v3472 = vand.u32 2147483647, %v3462
        %vm3473 = vcmp.eq.f32.partialorder %v3472, 8.507059e+37
        %v3474 = vand.u32 %v3462, 2147483648
        %v3475 = vor.u32 1.1754944e-38, %v3474
        %v3476 = vsel %vm3473, %v3475, %v3471
        %v3477 = vmul.f32 %v3452, %v3476
        %v3478 = vmin.f32 %v3477, 1.0
        %v3479 = vmax.f32 %v3478, -1.0
        %v3480 = vmul.f32 %v2957, %v2957
        %v3481 = vmin.f32 16.0, %v3480
        %v3482 = vmul.f32 %v3481, 2.1237322e-06
        %v3483 = vadd.f32 %v3482, 0.00028619796
        %v3484 = vmul.f32 %v3481, %v3483
        %v3485 = vadd.f32 %v3484, 0.0036580483
        %v3486 = vmul.f32 %v3481, %v3485
        %v3487 = vadd.f32 %v3486, 0.05243302
        %v3488 = vmul.f32 %v3481, %v3487
        %v3489 = vadd.f32 %v3488, 0.18741608
        %v3490 = vmul.f32 %v3481, %v3489
        %v3491 = vadd.f32 %v3490, 1.1283791
        %v3492 = vmul.f32 %v2957, %v3491
        %v3493 = vmul.f32 %v3481, 3.8918573e-05
        %v3494 = vadd.f32 %v3493, 0.001143296
        %v3495 = vmul.f32 %v3481, %v3494
        %v3496 = vadd.f32 %v3495, 0.014752088
        %v3497 = vmul.f32 %v3481, %v3496
        %v3498 = vadd.f32 %v3497, 0.112945676
        %v3499 = vmul.f32 %v3481, %v3498
        %v3500 = vadd.f32 %v3499, 0.4994258
        %v3501 = vmul.f32 %v3481, %v3500
        %v3502 = vadd.f32 %v3501, 1.0
        %v3503 = vrcp.pop %v3502
        %v3504 = vmul.f32 %v3502, %v3503
        %v3505 = vsub.f32 1.0, %v3504
        %v3506 = vmul.f32 %v3503, %v3505
        %v3507 = vadd.f32 %v3503, %v3506
        %vm3508 = vweird.f32 %v3502
        %vm3509 = vweird.f32 %v3503
        %vm3510 = vmor %vm3508, %vm3509
        %v3511 = vsel %vm3510, %v3503, %v3507
        %v3512 = vand.u32 2147483647, %v3502
        %vm3513 = vcmp.eq.f32.partialorder %v3512, 8.507059e+37
        %v3514 = vand.u32 %v3502, 2147483648
        %v3515 = vor.u32 1.1754944e-38, %v3514
        %v3516 = vsel %vm3513, %v3515, %v3511
        %v3517 = vmul.f32 %v3492, %v3516
        %v3518 = vmin.f32 %v3517, 1.0
        %v3519 = vmax.f32 %v3518, -1.0
        %v3520 = vmul.f32 %v2958, %v2958
        %v3521 = vmin.f32 16.0, %v3520
        %v3522 = vmul.f32 %v3521, 2.1237322e-06
        %v3523 = vadd.f32 %v3522, 0.00028619796
        %v3524 = vmul.f32 %v3521, %v3523
        %v3525 = vadd.f32 %v3524, 0.0036580483
        %v3526 = vmul.f32 %v3521, %v3525
        %v3527 = vadd.f32 %v3526, 0.05243302
        %v3528 = vmul.f32 %v3521, %v3527
        %v3529 = vadd.f32 %v3528, 0.18741608
        %v3530 = vmul.f32 %v3521, %v3529
        %v3531 = vadd.f32 %v3530, 1.1283791
        %v3532 = vmul.f32 %v2958, %v3531
        %v3533 = vmul.f32 %v3521, 3.8918573e-05
        %v3534 = vadd.f32 %v3533, 0.001143296
        %v3535 = vmul.f32 %v3521, %v3534
        %v3536 = vadd.f32 %v3535, 0.014752088
        %v3537 = vmul.f32 %v3521, %v3536
        %v3538 = vadd.f32 %v3537, 0.112945676
        %v3539 = vmul.f32 %v3521, %v3538
        %v3540 = vadd.f32 %v3539, 0.4994258
        %v3541 = vmul.f32 %v3521, %v3540
        %v3542 = vadd.f32 %v3541, 1.0
        %v3543 = vrcp.pop %v3542
        %v3544 = vmul.f32 %v3542, %v3543
        %v3545 = vsub.f32 1.0, %v3544
        %v3546 = vmul.f32 %v3543, %v3545
        %v3547 = vadd.f32 %v3543, %v3546
        %vm3548 = vweird.f32 %v3542
        %vm3549 = vweird.f32 %v3543
        %vm3550 = vmor %vm3548, %vm3549
        %v3551 = vsel %vm3550, %v3543, %v3547
        %v3552 = vand.u32 2147483647, %v3542
        %vm3553 = vcmp.eq.f32.partialorder %v3552, 8.507059e+37
        %v3554 = vand.u32 %v3542, 2147483648
        %v3555 = vor.u32 1.1754944e-38, %v3554
        %v3556 = vsel %vm3553, %v3555, %v3551
        %v3557 = vmul.f32 %v3532, %v3556
        %v3558 = vmin.f32 %v3557, 1.0
        %v3559 = vmax.f32 %v3558, -1.0
        %v3560 = vmul.f32 %v2959, %v2959
        %v3561 = vmin.f32 16.0, %v3560
        %v3562 = vmul.f32 %v3561, 2.1237322e-06
        %v3563 = vadd.f32 %v3562, 0.00028619796
        %v3564 = vmul.f32 %v3561, %v3563
        %v3565 = vadd.f32 %v3564, 0.0036580483
        %v3566 = vmul.f32 %v3561, %v3565
        %v3567 = vadd.f32 %v3566, 0.05243302
        %v3568 = vmul.f32 %v3561, %v3567
        %v3569 = vadd.f32 %v3568, 0.18741608
        %v3570 = vmul.f32 %v3561, %v3569
        %v3571 = vadd.f32 %v3570, 1.1283791
        %v3572 = vmul.f32 %v2959, %v3571
        %v3573 = vmul.f32 %v3561, 3.8918573e-05
        %v3574 = vadd.f32 %v3573, 0.001143296
        %v3575 = vmul.f32 %v3561, %v3574
        %v3576 = vadd.f32 %v3575, 0.014752088
        %v3577 = vmul.f32 %v3561, %v3576
        %v3578 = vadd.f32 %v3577, 0.112945676
        %v3579 = vmul.f32 %v3561, %v3578
        %v3580 = vadd.f32 %v3579, 0.4994258
        %v3581 = vmul.f32 %v3561, %v3580
        %v3582 = vadd.f32 %v3581, 1.0
        %v3583 = vrcp.pop %v3582
        %v3584 = vmul.f32 %v3582, %v3583
        %v3585 = vsub.f32 1.0, %v3584
        %v3586 = vmul.f32 %v3583, %v3585
        %v3587 = vadd.f32 %v3583, %v3586
        %vm3588 = vweird.f32 %v3582
        %vm3589 = vweird.f32 %v3583
        %vm3590 = vmor %vm3588, %vm3589
        %v3591 = vsel %vm3590, %v3583, %v3587
        %v3592 = vand.u32 2147483647, %v3582
        %vm3593 = vcmp.eq.f32.partialorder %v3592, 8.507059e+37
        %v3594 = vand.u32 %v3582, 2147483648
        %v3595 = vor.u32 1.1754944e-38, %v3594
        %v3596 = vsel %vm3593, %v3595, %v3591
        %v3597 = vmul.f32 %v3572, %v3596
        %v3598 = vmin.f32 %v3597, 1.0
        %v3599 = vmax.f32 %v3598, -1.0
        %v3600 = vadd.f32 %v2999, 1.0
        %v3601 = vadd.f32 %v3039, 1.0
        %v3602 = vadd.f32 %v3079, 1.0
        %v3603 = vadd.f32 %v3119, 1.0
        %v3604 = vadd.f32 %v3159, 1.0
        %v3605 = vadd.f32 %v3199, 1.0
        %v3606 = vadd.f32 %v3239, 1.0
        %v3607 = vadd.f32 %v3279, 1.0
        %v3608 = vadd.f32 %v3319, 1.0
        %v3609 = vadd.f32 %v3359, 1.0
        %v3610 = vadd.f32 %v3399, 1.0
        %v3611 = vadd.f32 %v3439, 1.0
        %v3612 = vadd.f32 %v3479, 1.0
        %v3613 = vadd.f32 %v3519, 1.0
        %v3614 = vadd.f32 %v3559, 1.0
        %v3615 = vadd.f32 %v3599, 1.0
        %v3616 = vmul.f32 %v2928, %v3600
        %v3617 = vmul.f32 %v2929, %v3601
        %v3618 = vmul.f32 %v2930, %v3602
        %v3619 = vmul.f32 %v2931, %v3603
        %v3620 = vmul.f32 %v2932, %v3604
        %v3621 = vmul.f32 %v2933, %v3605
        %v3622 = vmul.f32 %v2934, %v3606
        %v3623 = vmul.f32 %v2935, %v3607
        %v3624 = vmul.f32 %v2936, %v3608
        %v3625 = vmul.f32 %v2937, %v3609
        %v3626 = vmul.f32 %v2938, %v3610
        %v3627 = vmul.f32 %v2939, %v3611
        %v3628 = vmul.f32 %v2940, %v3612
        %v3629 = vmul.f32 %v2941, %v3613
        %v3630 = vmul.f32 %v2942, %v3614
        %v3631 = vmul.f32 %v2943, %v3615
        %v3632 = vpack.c.bf16 %v3624, %v3616
        %v3633 = vpack.c.bf16 %v3625, %v3617
        %v3634 = vpack.c.bf16 %v3626, %v3618
        %v3635 = vpack.c.bf16 %v3627, %v3619
        %v3636 = vpack.c.bf16 %v3628, %v3620
        %v3637 = vpack.c.bf16 %v3629, %v3621
        %v3638 = vpack.c.bf16 %v3630, %v3622
        %v3639 = vpack.c.bf16 %v3631, %v3623
        %v3640 = vld [vmem:[#allocation20] sm:$0xff]
        %v3641 = vld [vmem:[#allocation20 + $0x8] sm:$0xff]
        %v3642 = vld [vmem:[#allocation20 + $0x10] sm:$0xff]
        %v3643 = vld [vmem:[#allocation20 + $0x18] sm:$0xff]
        %v3644 = vld [vmem:[#allocation20 + $0x20] sm:$0xff]
        %v3645 = vld [vmem:[#allocation20 + $0x28] sm:$0xff]
        %v3646 = vld [vmem:[#allocation20 + $0x30] sm:$0xff]
        %v3647 = vld [vmem:[#allocation20 + $0x38] sm:$0xff]
        %v3648 = vld [vmem:[#allocation20 + $0x40] sm:$0xff]
        %v3649 = vld [vmem:[#allocation20 + $0x48] sm:$0xff]
        %v3650 = vld [vmem:[#allocation20 + $0x50] sm:$0xff]
        %v3651 = vld [vmem:[#allocation20 + $0x58] sm:$0xff]
        %v3652 = vld [vmem:[#allocation20 + $0x60] sm:$0xff]
        %v3653 = vld [vmem:[#allocation20 + $0x68] sm:$0xff]
        %v3654 = vld [vmem:[#allocation20 + $0x70] sm:$0xff]
        %v3655 = vld [vmem:[#allocation20 + $0x78] sm:$0xff]
        %v3656 = vld [vmem:[#allocation20 + $0x80] sm:$0xff]
        %v3657 = vld [vmem:[#allocation20 + $0x88] sm:$0xff]
        %v3658 = vld [vmem:[#allocation20 + $0x90] sm:$0xff]
        %v3659 = vld [vmem:[#allocation20 + $0x98] sm:$0xff]
        %v3660 = vld [vmem:[#allocation20 + $0xa0] sm:$0xff]
        %v3661 = vld [vmem:[#allocation20 + $0xa8] sm:$0xff]
        %v3662 = vld [vmem:[#allocation20 + $0xb0] sm:$0xff]
        %v3663 = vld [vmem:[#allocation20 + $0xb8] sm:$0xff]
        %v3664 = vld [vmem:[#allocation20 + $0xc0] sm:$0xff]
        %v3665 = vld [vmem:[#allocation20 + $0xc8] sm:$0xff]
        %v3666 = vld [vmem:[#allocation20 + $0xd0] sm:$0xff]
        %v3667 = vld [vmem:[#allocation20 + $0xd8] sm:$0xff]
        %v3668 = vld [vmem:[#allocation20 + $0xe0] sm:$0xff]
        %v3669 = vld [vmem:[#allocation20 + $0xe8] sm:$0xff]
        %v3670 = vld [vmem:[#allocation20 + $0xf0] sm:$0xff]
        %v3671 = vld [vmem:[#allocation20 + $0xf8] sm:$0xff]
        %v3672 = vld [vmem:[#allocation20 + $0x100] sm:$0xff]
        %v3673 = vld [vmem:[#allocation20 + $0x108] sm:$0xff]
        %v3674 = vld [vmem:[#allocation20 + $0x110] sm:$0xff]
        %v3675 = vld [vmem:[#allocation20 + $0x118] sm:$0xff]
        %v3676 = vld [vmem:[#allocation20 + $0x120] sm:$0xff]
        %v3677 = vld [vmem:[#allocation20 + $0x128] sm:$0xff]
        %v3678 = vld [vmem:[#allocation20 + $0x130] sm:$0xff]
        %v3679 = vld [vmem:[#allocation20 + $0x138] sm:$0xff]
        %v3680 = vld [vmem:[#allocation20 + $0x140] sm:$0xff]
        %v3681 = vld [vmem:[#allocation20 + $0x148] sm:$0xff]
        %v3682 = vld [vmem:[#allocation20 + $0x150] sm:$0xff]
        %v3683 = vld [vmem:[#allocation20 + $0x158] sm:$0xff]
        %v3684 = vld [vmem:[#allocation20 + $0x160] sm:$0xff]
        %v3685 = vld [vmem:[#allocation20 + $0x168] sm:$0xff]
        %v3686 = vld [vmem:[#allocation20 + $0x170] sm:$0xff]
        %v3687 = vld [vmem:[#allocation20 + $0x178] sm:$0xff]
        %v3688 = vld [vmem:[#allocation20 + $0x180] sm:$0xff]
        %v3689 = vld [vmem:[#allocation20 + $0x188] sm:$0xff]
        %v3690 = vld [vmem:[#allocation20 + $0x190] sm:$0xff]
        %v3691 = vld [vmem:[#allocation20 + $0x198] sm:$0xff]
        %v3692 = vld [vmem:[#allocation20 + $0x1a0] sm:$0xff]
        %v3693 = vld [vmem:[#allocation20 + $0x1a8] sm:$0xff]
        %v3694 = vld [vmem:[#allocation20 + $0x1b0] sm:$0xff]
        %v3695 = vld [vmem:[#allocation20 + $0x1b8] sm:$0xff]
        %v3696 = vld [vmem:[#allocation20 + $0x1c0] sm:$0xff]
        %v3697 = vld [vmem:[#allocation20 + $0x1c8] sm:$0xff]
        %v3698 = vld [vmem:[#allocation20 + $0x1d0] sm:$0xff]
        %v3699 = vld [vmem:[#allocation20 + $0x1d8] sm:$0xff]
        %v3700 = vld [vmem:[#allocation20 + $0x1e0] sm:$0xff]
        %v3701 = vld [vmem:[#allocation20 + $0x1e8] sm:$0xff]
        %v3702 = vld [vmem:[#allocation20 + $0x1f0] sm:$0xff]
        %v3703 = vld [vmem:[#allocation20 + $0x1f8] sm:$0xff]
        %v3704 = vld [vmem:[#allocation20 + $0x200] sm:$0xff]
        %v3705 = vld [vmem:[#allocation20 + $0x208] sm:$0xff]
        %v3706 = vld [vmem:[#allocation20 + $0x210] sm:$0xff]
        %v3707 = vld [vmem:[#allocation20 + $0x218] sm:$0xff]
        %v3708 = vld [vmem:[#allocation20 + $0x220] sm:$0xff]
        %v3709 = vld [vmem:[#allocation20 + $0x228] sm:$0xff]
        %v3710 = vld [vmem:[#allocation20 + $0x230] sm:$0xff]
        %v3711 = vld [vmem:[#allocation20 + $0x238] sm:$0xff]
        %v3712 = vld [vmem:[#allocation20 + $0x240] sm:$0xff]
        %v3713 = vld [vmem:[#allocation20 + $0x248] sm:$0xff]
        %v3714 = vld [vmem:[#allocation20 + $0x250] sm:$0xff]
        %v3715 = vld [vmem:[#allocation20 + $0x258] sm:$0xff]
        %v3716 = vld [vmem:[#allocation20 + $0x260] sm:$0xff]
        %v3717 = vld [vmem:[#allocation20 + $0x268] sm:$0xff]
        %v3718 = vld [vmem:[#allocation20 + $0x270] sm:$0xff]
        %v3719 = vld [vmem:[#allocation20 + $0x278] sm:$0xff]
        %v3720 = vld [vmem:[#allocation20 + $0x280] sm:$0xff]
        %v3721 = vld [vmem:[#allocation20 + $0x288] sm:$0xff]
        %v3722 = vld [vmem:[#allocation20 + $0x290] sm:$0xff]
        %v3723 = vld [vmem:[#allocation20 + $0x298] sm:$0xff]
        %v3724 = vld [vmem:[#allocation20 + $0x2a0] sm:$0xff]
        %v3725 = vld [vmem:[#allocation20 + $0x2a8] sm:$0xff]
        %v3726 = vld [vmem:[#allocation20 + $0x2b0] sm:$0xff]
        %v3727 = vld [vmem:[#allocation20 + $0x2b8] sm:$0xff]
        %v3728 = vld [vmem:[#allocation20 + $0x2c0] sm:$0xff]
        %v3729 = vld [vmem:[#allocation20 + $0x2c8] sm:$0xff]
        %v3730 = vld [vmem:[#allocation20 + $0x2d0] sm:$0xff]
        %v3731 = vld [vmem:[#allocation20 + $0x2d8] sm:$0xff]
        %v3732 = vld [vmem:[#allocation20 + $0x2e0] sm:$0xff]
        %v3733 = vld [vmem:[#allocation20 + $0x2e8] sm:$0xff]
        %v3734 = vld [vmem:[#allocation20 + $0x2f0] sm:$0xff]
        %v3735 = vld [vmem:[#allocation20 + $0x2f8] sm:$0xff]
        %v3736 = vld [vmem:[#allocation20 + $0x300] sm:$0xff]
        %v3737 = vld [vmem:[#allocation20 + $0x308] sm:$0xff]
        %v3738 = vld [vmem:[#allocation20 + $0x310] sm:$0xff]
        %v3739 = vld [vmem:[#allocation20 + $0x318] sm:$0xff]
        %v3740 = vld [vmem:[#allocation20 + $0x320] sm:$0xff]
        %v3741 = vld [vmem:[#allocation20 + $0x328] sm:$0xff]
        %v3742 = vld [vmem:[#allocation20 + $0x330] sm:$0xff]
        %v3743 = vld [vmem:[#allocation20 + $0x338] sm:$0xff]
        %v3744 = vld [vmem:[#allocation20 + $0x340] sm:$0xff]
        %v3745 = vld [vmem:[#allocation20 + $0x348] sm:$0xff]
        %v3746 = vld [vmem:[#allocation20 + $0x350] sm:$0xff]
        %v3747 = vld [vmem:[#allocation20 + $0x358] sm:$0xff]
        %v3748 = vld [vmem:[#allocation20 + $0x360] sm:$0xff]
        %v3749 = vld [vmem:[#allocation20 + $0x368] sm:$0xff]
        %v3750 = vld [vmem:[#allocation20 + $0x370] sm:$0xff]
        %v3751 = vld [vmem:[#allocation20 + $0x378] sm:$0xff]
        %v3752 = vld [vmem:[#allocation20 + $0x380] sm:$0xff]
        %v3753 = vld [vmem:[#allocation20 + $0x388] sm:$0xff]
        %v3754 = vld [vmem:[#allocation20 + $0x390] sm:$0xff]
        %v3755 = vld [vmem:[#allocation20 + $0x398] sm:$0xff]
        %v3756 = vld [vmem:[#allocation20 + $0x3a0] sm:$0xff]
        %v3757 = vld [vmem:[#allocation20 + $0x3a8] sm:$0xff]
        %v3758 = vld [vmem:[#allocation20 + $0x3b0] sm:$0xff]
        %v3759 = vld [vmem:[#allocation20 + $0x3b8] sm:$0xff]
        %v3760 = vld [vmem:[#allocation20 + $0x3c0] sm:$0xff]
        %v3761 = vld [vmem:[#allocation20 + $0x3c8] sm:$0xff]
        %v3762 = vld [vmem:[#allocation20 + $0x3d0] sm:$0xff]
        %v3763 = vld [vmem:[#allocation20 + $0x3d8] sm:$0xff]
        %v3764 = vld [vmem:[#allocation20 + $0x3e0] sm:$0xff]
        %v3765 = vld [vmem:[#allocation20 + $0x3e8] sm:$0xff]
        %v3766 = vld [vmem:[#allocation20 + $0x3f0] sm:$0xff]
        %v3767 = vld [vmem:[#allocation20 + $0x3f8] sm:$0xff]
        %v3768 = vld [vmem:[%s12] sm:$0x3]
        %v3770 = vperm.slane %v3768, 0
        %v3771 = vperm.slane %v3768, 1
        %v3902 = vunpack.c.l.b16 %v3640
        %v3903 = vunpack.c.h.b16 %v3640
        %v3904 = vunpack.c.l.b16 %v3641
        %v3905 = vunpack.c.h.b16 %v3641
        %v3906 = vunpack.c.l.b16 %v3642
        %v3907 = vunpack.c.h.b16 %v3642
        %v3908 = vunpack.c.l.b16 %v3643
        %v3909 = vunpack.c.h.b16 %v3643
        %v3910 = vunpack.c.l.b16 %v3644
        %v3911 = vunpack.c.h.b16 %v3644
        %v3912 = vunpack.c.l.b16 %v3645
        %v3913 = vunpack.c.h.b16 %v3645
        %v3914 = vunpack.c.l.b16 %v3646
        %v3915 = vunpack.c.h.b16 %v3646
        %v3916 = vunpack.c.l.b16 %v3647
        %v3917 = vunpack.c.h.b16 %v3647
        %v3918 = vunpack.c.l.b16 %v3648
        %v3919 = vunpack.c.h.b16 %v3648
        %v3920 = vunpack.c.l.b16 %v3649
        %v3921 = vunpack.c.h.b16 %v3649
        %v3922 = vunpack.c.l.b16 %v3650
        %v3923 = vunpack.c.h.b16 %v3650
        %v3924 = vunpack.c.l.b16 %v3651
        %v3925 = vunpack.c.h.b16 %v3651
        %v3926 = vunpack.c.l.b16 %v3652
        %v3927 = vunpack.c.h.b16 %v3652
        %v3928 = vunpack.c.l.b16 %v3653
        %v3929 = vunpack.c.h.b16 %v3653
        %v3930 = vunpack.c.l.b16 %v3654
        %v3931 = vunpack.c.h.b16 %v3654
        %v3932 = vunpack.c.l.b16 %v3655
        %v3933 = vunpack.c.h.b16 %v3655
        %v3934 = vunpack.c.l.b16 %v3656
        %v3935 = vunpack.c.h.b16 %v3656
        %v3936 = vunpack.c.l.b16 %v3657
        %v3937 = vunpack.c.h.b16 %v3657
        %v3938 = vunpack.c.l.b16 %v3658
        %v3939 = vunpack.c.h.b16 %v3658
        %v3940 = vunpack.c.l.b16 %v3659
        %v3941 = vunpack.c.h.b16 %v3659
        %v3942 = vunpack.c.l.b16 %v3660
        %v3943 = vunpack.c.h.b16 %v3660
        %v3944 = vunpack.c.l.b16 %v3661
        %v3945 = vunpack.c.h.b16 %v3661
        %v3946 = vunpack.c.l.b16 %v3662
        %v3947 = vunpack.c.h.b16 %v3662
        %v3948 = vunpack.c.l.b16 %v3663
        %v3949 = vunpack.c.h.b16 %v3663
        %v3950 = vunpack.c.l.b16 %v3664
        %v3951 = vunpack.c.h.b16 %v3664
        %v3952 = vunpack.c.l.b16 %v3665
        %v3953 = vunpack.c.h.b16 %v3665
        %v3954 = vunpack.c.l.b16 %v3666
        %v3955 = vunpack.c.h.b16 %v3666
        %v3956 = vunpack.c.l.b16 %v3667
        %v3957 = vunpack.c.h.b16 %v3667
        %v3958 = vunpack.c.l.b16 %v3668
        %v3959 = vunpack.c.h.b16 %v3668
        %v3960 = vunpack.c.l.b16 %v3669
        %v3961 = vunpack.c.h.b16 %v3669
        %v3962 = vunpack.c.l.b16 %v3670
        %v3963 = vunpack.c.h.b16 %v3670
        %v3964 = vunpack.c.l.b16 %v3671
        %v3965 = vunpack.c.h.b16 %v3671
        %v3966 = vunpack.c.l.b16 %v3672
        %v3967 = vunpack.c.h.b16 %v3672
        %v3968 = vunpack.c.l.b16 %v3673
        %v3969 = vunpack.c.h.b16 %v3673
        %v3970 = vunpack.c.l.b16 %v3674
        %v3971 = vunpack.c.h.b16 %v3674
        %v3972 = vunpack.c.l.b16 %v3675
        %v3973 = vunpack.c.h.b16 %v3675
        %v3974 = vunpack.c.l.b16 %v3676
        %v3975 = vunpack.c.h.b16 %v3676
        %v3976 = vunpack.c.l.b16 %v3677
        %v3977 = vunpack.c.h.b16 %v3677
        %v3978 = vunpack.c.l.b16 %v3678
        %v3979 = vunpack.c.h.b16 %v3678
        %v3980 = vunpack.c.l.b16 %v3679
        %v3981 = vunpack.c.h.b16 %v3679
        %v3982 = vunpack.c.l.b16 %v3680
        %v3983 = vunpack.c.h.b16 %v3680
        %v3984 = vunpack.c.l.b16 %v3681
        %v3985 = vunpack.c.h.b16 %v3681
        %v3986 = vunpack.c.l.b16 %v3682
        %v3987 = vunpack.c.h.b16 %v3682
        %v3988 = vunpack.c.l.b16 %v3683
        %v3989 = vunpack.c.h.b16 %v3683
        %v3990 = vunpack.c.l.b16 %v3684
        %v3991 = vunpack.c.h.b16 %v3684
        %v3992 = vunpack.c.l.b16 %v3685
        %v3993 = vunpack.c.h.b16 %v3685
        %v3994 = vunpack.c.l.b16 %v3686
        %v3995 = vunpack.c.h.b16 %v3686
        %v3996 = vunpack.c.l.b16 %v3687
        %v3997 = vunpack.c.h.b16 %v3687
        %v3998 = vunpack.c.l.b16 %v3688
        %v3999 = vunpack.c.h.b16 %v3688
        %v4000 = vunpack.c.l.b16 %v3689
        %v4001 = vunpack.c.h.b16 %v3689
        %v4002 = vunpack.c.l.b16 %v3690
        %v4003 = vunpack.c.h.b16 %v3690
        %v4004 = vunpack.c.l.b16 %v3691
        %v4005 = vunpack.c.h.b16 %v3691
        %v4006 = vunpack.c.l.b16 %v3692
        %v4007 = vunpack.c.h.b16 %v3692
        %v4008 = vunpack.c.l.b16 %v3693
        %v4009 = vunpack.c.h.b16 %v3693
        %v4010 = vunpack.c.l.b16 %v3694
        %v4011 = vunpack.c.h.b16 %v3694
        %v4012 = vunpack.c.l.b16 %v3695
        %v4013 = vunpack.c.h.b16 %v3695
        %v4014 = vunpack.c.l.b16 %v3696
        %v4015 = vunpack.c.h.b16 %v3696
        %v4016 = vunpack.c.l.b16 %v3697
        %v4017 = vunpack.c.h.b16 %v3697
        %v4018 = vunpack.c.l.b16 %v3698
        %v4019 = vunpack.c.h.b16 %v3698
        %v4020 = vunpack.c.l.b16 %v3699
        %v4021 = vunpack.c.h.b16 %v3699
        %v4022 = vunpack.c.l.b16 %v3700
        %v4023 = vunpack.c.h.b16 %v3700
        %v4024 = vunpack.c.l.b16 %v3701
        %v4025 = vunpack.c.h.b16 %v3701
        %v4026 = vunpack.c.l.b16 %v3702
        %v4027 = vunpack.c.h.b16 %v3702
        %v4028 = vunpack.c.l.b16 %v3703
        %v4029 = vunpack.c.h.b16 %v3703
        %v4030 = vunpack.c.l.b16 %v3704
        %v4031 = vunpack.c.h.b16 %v3704
        %v4032 = vunpack.c.l.b16 %v3705
        %v4033 = vunpack.c.h.b16 %v3705
        %v4034 = vunpack.c.l.b16 %v3706
        %v4035 = vunpack.c.h.b16 %v3706
        %v4036 = vunpack.c.l.b16 %v3707
        %v4037 = vunpack.c.h.b16 %v3707
        %v4038 = vunpack.c.l.b16 %v3708
        %v4039 = vunpack.c.h.b16 %v3708
        %v4040 = vunpack.c.l.b16 %v3709
        %v4041 = vunpack.c.h.b16 %v3709
        %v4042 = vunpack.c.l.b16 %v3710
        %v4043 = vunpack.c.h.b16 %v3710
        %v4044 = vunpack.c.l.b16 %v3711
        %v4045 = vunpack.c.h.b16 %v3711
        %v4046 = vunpack.c.l.b16 %v3712
        %v4047 = vunpack.c.h.b16 %v3712
        %v4048 = vunpack.c.l.b16 %v3713
        %v4049 = vunpack.c.h.b16 %v3713
        %v4050 = vunpack.c.l.b16 %v3714
        %v4051 = vunpack.c.h.b16 %v3714
        %v4052 = vunpack.c.l.b16 %v3715
        %v4053 = vunpack.c.h.b16 %v3715
        %v4054 = vunpack.c.l.b16 %v3716
        %v4055 = vunpack.c.h.b16 %v3716
        %v4056 = vunpack.c.l.b16 %v3717
        %v4057 = vunpack.c.h.b16 %v3717
        %v4058 = vunpack.c.l.b16 %v3718
        %v4059 = vunpack.c.h.b16 %v3718
        %v4060 = vunpack.c.l.b16 %v3719
        %v4061 = vunpack.c.h.b16 %v3719
        %v4062 = vunpack.c.l.b16 %v3720
        %v4063 = vunpack.c.h.b16 %v3720
        %v4064 = vunpack.c.l.b16 %v3721
        %v4065 = vunpack.c.h.b16 %v3721
        %v4066 = vunpack.c.l.b16 %v3722
        %v4067 = vunpack.c.h.b16 %v3722
        %v4068 = vunpack.c.l.b16 %v3723
        %v4069 = vunpack.c.h.b16 %v3723
        %v4070 = vunpack.c.l.b16 %v3724
        %v4071 = vunpack.c.h.b16 %v3724
        %v4072 = vunpack.c.l.b16 %v3725
        %v4073 = vunpack.c.h.b16 %v3725
        %v4074 = vunpack.c.l.b16 %v3726
        %v4075 = vunpack.c.h.b16 %v3726
        %v4076 = vunpack.c.l.b16 %v3727
        %v4077 = vunpack.c.h.b16 %v3727
        %v4078 = vunpack.c.l.b16 %v3728
        %v4079 = vunpack.c.h.b16 %v3728
        %v4080 = vunpack.c.l.b16 %v3729
        %v4081 = vunpack.c.h.b16 %v3729
        %v4082 = vunpack.c.l.b16 %v3730
        %v4083 = vunpack.c.h.b16 %v3730
        %v4084 = vunpack.c.l.b16 %v3731
        %v4085 = vunpack.c.h.b16 %v3731
        %v4086 = vunpack.c.l.b16 %v3732
        %v4087 = vunpack.c.h.b16 %v3732
        %v4088 = vunpack.c.l.b16 %v3733
        %v4089 = vunpack.c.h.b16 %v3733
        %v4090 = vunpack.c.l.b16 %v3734
        %v4091 = vunpack.c.h.b16 %v3734
        %v4092 = vunpack.c.l.b16 %v3735
        %v4093 = vunpack.c.h.b16 %v3735
        %v4094 = vunpack.c.l.b16 %v3736
        %v4095 = vunpack.c.h.b16 %v3736
        %v4096 = vunpack.c.l.b16 %v3737
        %v4097 = vunpack.c.h.b16 %v3737
        %v4098 = vunpack.c.l.b16 %v3738
        %v4099 = vunpack.c.h.b16 %v3738
        %v4100 = vunpack.c.l.b16 %v3739
        %v4101 = vunpack.c.h.b16 %v3739
        %v4102 = vunpack.c.l.b16 %v3740
        %v4103 = vunpack.c.h.b16 %v3740
        %v4104 = vunpack.c.l.b16 %v3741
        %v4105 = vunpack.c.h.b16 %v3741
        %v4106 = vunpack.c.l.b16 %v3742
        %v4107 = vunpack.c.h.b16 %v3742
        %v4108 = vunpack.c.l.b16 %v3743
        %v4109 = vunpack.c.h.b16 %v3743
        %v4110 = vunpack.c.l.b16 %v3744
        %v4111 = vunpack.c.h.b16 %v3744
        %v4112 = vunpack.c.l.b16 %v3745
        %v4113 = vunpack.c.h.b16 %v3745
        %v4114 = vunpack.c.l.b16 %v3746
        %v4115 = vunpack.c.h.b16 %v3746
        %v4116 = vunpack.c.l.b16 %v3747
        %v4117 = vunpack.c.h.b16 %v3747
        %v4118 = vunpack.c.l.b16 %v3748
        %v4119 = vunpack.c.h.b16 %v3748
        %v4120 = vunpack.c.l.b16 %v3749
        %v4121 = vunpack.c.h.b16 %v3749
        %v4122 = vunpack.c.l.b16 %v3750
        %v4123 = vunpack.c.h.b16 %v3750
        %v4124 = vunpack.c.l.b16 %v3751
        %v4125 = vunpack.c.h.b16 %v3751
        %v4126 = vunpack.c.l.b16 %v3752
        %v4127 = vunpack.c.h.b16 %v3752
        %v4128 = vunpack.c.l.b16 %v3753
        %v4129 = vunpack.c.h.b16 %v3753
        %v4130 = vunpack.c.l.b16 %v3754
        %v4131 = vunpack.c.h.b16 %v3754
        %v4132 = vunpack.c.l.b16 %v3755
        %v4133 = vunpack.c.h.b16 %v3755
        %v4134 = vunpack.c.l.b16 %v3756
        %v4135 = vunpack.c.h.b16 %v3756
        %v4136 = vunpack.c.l.b16 %v3757
        %v4137 = vunpack.c.h.b16 %v3757
        %v4138 = vunpack.c.l.b16 %v3758
        %v4139 = vunpack.c.h.b16 %v3758
        %v4140 = vunpack.c.l.b16 %v3759
        %v4141 = vunpack.c.h.b16 %v3759
        %v4142 = vunpack.c.l.b16 %v3760
        %v4143 = vunpack.c.h.b16 %v3760
        %v4144 = vunpack.c.l.b16 %v3761
        %v4145 = vunpack.c.h.b16 %v3761
        %v4146 = vunpack.c.l.b16 %v3762
        %v4147 = vunpack.c.h.b16 %v3762
        %v4148 = vunpack.c.l.b16 %v3763
        %v4149 = vunpack.c.h.b16 %v3763
        %v4150 = vunpack.c.l.b16 %v3764
        %v4151 = vunpack.c.h.b16 %v3764
        %v4152 = vunpack.c.l.b16 %v3765
        %v4153 = vunpack.c.h.b16 %v3765
        %v4154 = vunpack.c.l.b16 %v3766
        %v4155 = vunpack.c.h.b16 %v3766
        %v4156 = vunpack.c.l.b16 %v3767
        %v4157 = vunpack.c.h.b16 %v3767
        %v4158 = vpack.c.b16 %v3904, %v3902
        %v4159 = vpack.c.b16 %v3905, %v3903
        %v4160 = vpack.c.b16 %v3908, %v3906
        %v4161 = vpack.c.b16 %v3909, %v3907
        %v4162 = vpack.c.b16 %v3912, %v3910
        %v4163 = vpack.c.b16 %v3913, %v3911
        %v4164 = vpack.c.b16 %v3916, %v3914
        %v4165 = vpack.c.b16 %v3917, %v3915
        %v4166 = vpack.c.b16 %v3920, %v3918
        %v4167 = vpack.c.b16 %v3921, %v3919
        %v4168 = vpack.c.b16 %v3924, %v3922
        %v4169 = vpack.c.b16 %v3925, %v3923
        %v4170 = vpack.c.b16 %v3928, %v3926
        %v4171 = vpack.c.b16 %v3929, %v3927
        %v4172 = vpack.c.b16 %v3932, %v3930
        %v4173 = vpack.c.b16 %v3933, %v3931
        %v4174 = vpack.c.b16 %v3936, %v3934
        %v4175 = vpack.c.b16 %v3937, %v3935
        %v4176 = vpack.c.b16 %v3940, %v3938
        %v4177 = vpack.c.b16 %v3941, %v3939
        %v4178 = vpack.c.b16 %v3944, %v3942
        %v4179 = vpack.c.b16 %v3945, %v3943
        %v4180 = vpack.c.b16 %v3948, %v3946
        %v4181 = vpack.c.b16 %v3949, %v3947
        %v4182 = vpack.c.b16 %v3952, %v3950
        %v4183 = vpack.c.b16 %v3953, %v3951
        %v4184 = vpack.c.b16 %v3956, %v3954
        %v4185 = vpack.c.b16 %v3957, %v3955
        %v4186 = vpack.c.b16 %v3960, %v3958
        %v4187 = vpack.c.b16 %v3961, %v3959
        %v4188 = vpack.c.b16 %v3964, %v3962
        %v4189 = vpack.c.b16 %v3965, %v3963
        %v4190 = vpack.c.b16 %v3968, %v3966
        %v4191 = vpack.c.b16 %v3969, %v3967
        %v4192 = vpack.c.b16 %v3972, %v3970
        %v4193 = vpack.c.b16 %v3973, %v3971
        %v4194 = vpack.c.b16 %v3976, %v3974
        %v4195 = vpack.c.b16 %v3977, %v3975
        %v4196 = vpack.c.b16 %v3980, %v3978
        %v4197 = vpack.c.b16 %v3981, %v3979
        %v4198 = vpack.c.b16 %v3984, %v3982
        %v4199 = vpack.c.b16 %v3985, %v3983
        %v4200 = vpack.c.b16 %v3988, %v3986
        %v4201 = vpack.c.b16 %v3989, %v3987
        %v4202 = vpack.c.b16 %v3992, %v3990
        %v4203 = vpack.c.b16 %v3993, %v3991
        %v4204 = vpack.c.b16 %v3996, %v3994
        %v4205 = vpack.c.b16 %v3997, %v3995
        %v4206 = vpack.c.b16 %v4000, %v3998
        %v4207 = vpack.c.b16 %v4001, %v3999
        %v4208 = vpack.c.b16 %v4004, %v4002
        %v4209 = vpack.c.b16 %v4005, %v4003
        %v4210 = vpack.c.b16 %v4008, %v4006
        %v4211 = vpack.c.b16 %v4009, %v4007
        %v4212 = vpack.c.b16 %v4012, %v4010
        %v4213 = vpack.c.b16 %v4013, %v4011
        %v4214 = vpack.c.b16 %v4016, %v4014
        %v4215 = vpack.c.b16 %v4017, %v4015
        %v4216 = vpack.c.b16 %v4020, %v4018
        %v4217 = vpack.c.b16 %v4021, %v4019
        %v4218 = vpack.c.b16 %v4024, %v4022
        %v4219 = vpack.c.b16 %v4025, %v4023
        %v4220 = vpack.c.b16 %v4028, %v4026
        %v4221 = vpack.c.b16 %v4029, %v4027
        %v4222 = vpack.c.b16 %v4032, %v4030
        %v4223 = vpack.c.b16 %v4033, %v4031
        %v4224 = vpack.c.b16 %v4036, %v4034
        %v4225 = vpack.c.b16 %v4037, %v4035
        %v4226 = vpack.c.b16 %v4040, %v4038
        %v4227 = vpack.c.b16 %v4041, %v4039
        %v4228 = vpack.c.b16 %v4044, %v4042
        %v4229 = vpack.c.b16 %v4045, %v4043
        %v4230 = vpack.c.b16 %v4048, %v4046
        %v4231 = vpack.c.b16 %v4049, %v4047
        %v4232 = vpack.c.b16 %v4052, %v4050
        %v4233 = vpack.c.b16 %v4053, %v4051
        %v4234 = vpack.c.b16 %v4056, %v4054
        %v4235 = vpack.c.b16 %v4057, %v4055
        %v4236 = vpack.c.b16 %v4060, %v4058
        %v4237 = vpack.c.b16 %v4061, %v4059
        %v4238 = vpack.c.b16 %v4064, %v4062
        %v4239 = vpack.c.b16 %v4065, %v4063
        %v4240 = vpack.c.b16 %v4068, %v4066
        %v4241 = vpack.c.b16 %v4069, %v4067
        %v4242 = vpack.c.b16 %v4072, %v4070
        %v4243 = vpack.c.b16 %v4073, %v4071
        %v4244 = vpack.c.b16 %v4076, %v4074
        %v4245 = vpack.c.b16 %v4077, %v4075
        %v4246 = vpack.c.b16 %v4080, %v4078
        %v4247 = vpack.c.b16 %v4081, %v4079
        %v4248 = vpack.c.b16 %v4084, %v4082
        %v4249 = vpack.c.b16 %v4085, %v4083
        %v4250 = vpack.c.b16 %v4088, %v4086
        %v4251 = vpack.c.b16 %v4089, %v4087
        %v4252 = vpack.c.b16 %v4092, %v4090
        %v4253 = vpack.c.b16 %v4093, %v4091
        %v4254 = vpack.c.b16 %v4096, %v4094
        %v4255 = vpack.c.b16 %v4097, %v4095
        %v4256 = vpack.c.b16 %v4100, %v4098
        %v4257 = vpack.c.b16 %v4101, %v4099
        %v4258 = vpack.c.b16 %v4104, %v4102
        %v4259 = vpack.c.b16 %v4105, %v4103
        %v4260 = vpack.c.b16 %v4108, %v4106
        %v4261 = vpack.c.b16 %v4109, %v4107
        %v4262 = vpack.c.b16 %v4112, %v4110
        %v4263 = vpack.c.b16 %v4113, %v4111
        %v4264 = vpack.c.b16 %v4116, %v4114
        %v4265 = vpack.c.b16 %v4117, %v4115
        %v4266 = vpack.c.b16 %v4120, %v4118
        %v4267 = vpack.c.b16 %v4121, %v4119
        %v4268 = vpack.c.b16 %v4124, %v4122
        %v4269 = vpack.c.b16 %v4125, %v4123
        %v4270 = vpack.c.b16 %v4128, %v4126
        %v4271 = vpack.c.b16 %v4129, %v4127
        %v4272 = vpack.c.b16 %v4132, %v4130
        %v4273 = vpack.c.b16 %v4133, %v4131
        %v4274 = vpack.c.b16 %v4136, %v4134
        %v4275 = vpack.c.b16 %v4137, %v4135
        %v4276 = vpack.c.b16 %v4140, %v4138
        %v4277 = vpack.c.b16 %v4141, %v4139
        %v4278 = vpack.c.b16 %v4144, %v4142
        %v4279 = vpack.c.b16 %v4145, %v4143
        %v4280 = vpack.c.b16 %v4148, %v4146
        %v4281 = vpack.c.b16 %v4149, %v4147
        %v4282 = vpack.c.b16 %v4152, %v4150
        %v4283 = vpack.c.b16 %v4153, %v4151
        %v4284 = vpack.c.b16 %v4156, %v4154
        %v4285 = vpack.c.b16 %v4157, %v4155
        %4414 = vmatpush.bf16.msra.mxu0 %v4172
        %4415 = vmatpush.bf16.msra.mxu0 %v4170
        %4416 = vmatpush.bf16.msra.mxu0 %v4168
        %4417 = vmatpush.bf16.msra.mxu0 %v4166
        %4418 = vmatpush.bf16.msra.mxu0 %v4164
        %4419 = vmatpush.bf16.msra.mxu0 %v4162
        %4420 = vmatpush.bf16.msra.mxu0 %v4160
        %4421 = vmatpush.bf16.msra.mxu0 %v4158
        %4422 = vmatmul.bf16.gmra.mxu0 %v3632
        %v4423 = vpop.f32.mrf.mxu0
        %v4424 = vadd.f32 %v3770, %v4423
        %v4425 = vpop.f32.mrf.mxu0
        %v4426 = vadd.f32 %v3770, %v4425
        %4427 = vdwg.mxu0
        %4428 = vmatpush.bf16.msra.mxu0 %v4188
        %4429 = vmatpush.bf16.msra.mxu0 %v4186
        %4430 = vmatpush.bf16.msra.mxu0 %v4184
        %4431 = vmatpush.bf16.msra.mxu0 %v4182
        %4432 = vmatpush.bf16.msra.mxu0 %v4180
        %4433 = vmatpush.bf16.msra.mxu0 %v4178
        %4434 = vmatpush.bf16.msra.mxu0 %v4176
        %4435 = vmatpush.bf16.msra.mxu0 %v4174
        %4436 = vmatmul.bf16.gmra.mxu0 %v3633
        %v4437 = vpop.f32.mrf.mxu0
        %v4438 = vadd.f32 %v4424, %v4437
        %v4439 = vpop.f32.mrf.mxu0
        %v4440 = vadd.f32 %v4426, %v4439
        %4441 = vdwg.mxu0
        %4442 = vmatpush.bf16.msra.mxu0 %v4204
        %4443 = vmatpush.bf16.msra.mxu0 %v4202
        %4444 = vmatpush.bf16.msra.mxu0 %v4200
        %4445 = vmatpush.bf16.msra.mxu0 %v4198
        %4446 = vmatpush.bf16.msra.mxu0 %v4196
        %4447 = vmatpush.bf16.msra.mxu0 %v4194
        %4448 = vmatpush.bf16.msra.mxu0 %v4192
        %4449 = vmatpush.bf16.msra.mxu0 %v4190
        %4450 = vmatmul.bf16.gmra.mxu0 %v3634
        %v4451 = vpop.f32.mrf.mxu0
        %v4452 = vadd.f32 %v4438, %v4451
        %v4453 = vpop.f32.mrf.mxu0
        %v4454 = vadd.f32 %v4440, %v4453
        %4455 = vdwg.mxu0
        %4456 = vmatpush.bf16.msra.mxu0 %v4220
        %4457 = vmatpush.bf16.msra.mxu0 %v4218
        %4458 = vmatpush.bf16.msra.mxu0 %v4216
        %4459 = vmatpush.bf16.msra.mxu0 %v4214
        %4460 = vmatpush.bf16.msra.mxu0 %v4212
        %4461 = vmatpush.bf16.msra.mxu0 %v4210
        %4462 = vmatpush.bf16.msra.mxu0 %v4208
        %4463 = vmatpush.bf16.msra.mxu0 %v4206
        %4464 = vmatmul.bf16.gmra.mxu0 %v3635
        %v4465 = vpop.f32.mrf.mxu0
        %v4466 = vadd.f32 %v4452, %v4465
        %v4467 = vpop.f32.mrf.mxu0
        %v4468 = vadd.f32 %v4454, %v4467
        %4469 = vdwg.mxu0
        %4470 = vmatpush.bf16.msra.mxu0 %v4236
        %4471 = vmatpush.bf16.msra.mxu0 %v4234
        %4472 = vmatpush.bf16.msra.mxu0 %v4232
        %4473 = vmatpush.bf16.msra.mxu0 %v4230
        %4474 = vmatpush.bf16.msra.mxu0 %v4228
        %4475 = vmatpush.bf16.msra.mxu0 %v4226
        %4476 = vmatpush.bf16.msra.mxu0 %v4224
        %4477 = vmatpush.bf16.msra.mxu0 %v4222
        %4478 = vmatmul.bf16.gmra.mxu0 %v3636
        %v4479 = vpop.f32.mrf.mxu0
        %v4480 = vadd.f32 %v4466, %v4479
        %v4481 = vpop.f32.mrf.mxu0
        %v4482 = vadd.f32 %v4468, %v4481
        %4483 = vdwg.mxu0
        %4484 = vmatpush.bf16.msra.mxu0 %v4252
        %4485 = vmatpush.bf16.msra.mxu0 %v4250
        %4486 = vmatpush.bf16.msra.mxu0 %v4248
        %4487 = vmatpush.bf16.msra.mxu0 %v4246
        %4488 = vmatpush.bf16.msra.mxu0 %v4244
        %4489 = vmatpush.bf16.msra.mxu0 %v4242
        %4490 = vmatpush.bf16.msra.mxu0 %v4240
        %4491 = vmatpush.bf16.msra.mxu0 %v4238
        %4492 = vmatmul.bf16.gmra.mxu0 %v3637
        %v4493 = vpop.f32.mrf.mxu0
        %v4494 = vadd.f32 %v4480, %v4493
        %v4495 = vpop.f32.mrf.mxu0
        %v4496 = vadd.f32 %v4482, %v4495
        %4497 = vdwg.mxu0
        %4498 = vmatpush.bf16.msra.mxu0 %v4268
        %4499 = vmatpush.bf16.msra.mxu0 %v4266
        %4500 = vmatpush.bf16.msra.mxu0 %v4264
        %4501 = vmatpush.bf16.msra.mxu0 %v4262
        %4502 = vmatpush.bf16.msra.mxu0 %v4260
        %4503 = vmatpush.bf16.msra.mxu0 %v4258
        %4504 = vmatpush.bf16.msra.mxu0 %v4256
        %4505 = vmatpush.bf16.msra.mxu0 %v4254
        %4506 = vmatmul.bf16.gmra.mxu0 %v3638
        %v4507 = vpop.f32.mrf.mxu0
        %v4508 = vadd.f32 %v4494, %v4507
        %v4509 = vpop.f32.mrf.mxu0
        %v4510 = vadd.f32 %v4496, %v4509
        %4511 = vdwg.mxu0
        %4512 = vmatpush.bf16.msra.mxu0 %v4284
        %4513 = vmatpush.bf16.msra.mxu0 %v4282
        %4514 = vmatpush.bf16.msra.mxu0 %v4280
        %4515 = vmatpush.bf16.msra.mxu0 %v4278
        %4516 = vmatpush.bf16.msra.mxu0 %v4276
        %4517 = vmatpush.bf16.msra.mxu0 %v4274
        %4518 = vmatpush.bf16.msra.mxu0 %v4272
        %4519 = vmatpush.bf16.msra.mxu0 %v4270
        %4520 = vmatmul.bf16.gmra.mxu0 %v3639
        %v4521 = vpop.f32.mrf.mxu0
        %v4522 = vadd.f32 %v4508, %v4521
        %v4523 = vpop.f32.mrf.mxu0
        %v4524 = vadd.f32 %v4510, %v4523
        %4525 = vdwg.mxu0
        %4526 = vmatpush.bf16.msra.mxu0 %v4173
        %4527 = vmatpush.bf16.msra.mxu0 %v4171
        %4528 = vmatpush.bf16.msra.mxu0 %v4169
        %4529 = vmatpush.bf16.msra.mxu0 %v4167
        %4530 = vmatpush.bf16.msra.mxu0 %v4165
        %4531 = vmatpush.bf16.msra.mxu0 %v4163
        %4532 = vmatpush.bf16.msra.mxu0 %v4161
        %4533 = vmatpush.bf16.msra.mxu0 %v4159
        %4534 = vmatmul.bf16.gmra.mxu0 %v3632
        %v4535 = vpop.f32.mrf.mxu0
        %v4536 = vadd.f32 %v3771, %v4535
        %v4537 = vpop.f32.mrf.mxu0
        %v4538 = vadd.f32 %v3771, %v4537
        %4539 = vdwg.mxu0
        %4540 = vmatpush.bf16.msra.mxu0 %v4189
        %4541 = vmatpush.bf16.msra.mxu0 %v4187
        %4542 = vmatpush.bf16.msra.mxu0 %v4185
        %4543 = vmatpush.bf16.msra.mxu0 %v4183
        %4544 = vmatpush.bf16.msra.mxu0 %v4181
        %4545 = vmatpush.bf16.msra.mxu0 %v4179
        %4546 = vmatpush.bf16.msra.mxu0 %v4177
        %4547 = vmatpush.bf16.msra.mxu0 %v4175
        %4548 = vmatmul.bf16.gmra.mxu0 %v3633
        %v4549 = vpop.f32.mrf.mxu0
        %v4550 = vadd.f32 %v4536, %v4549
        %v4551 = vpop.f32.mrf.mxu0
        %v4552 = vadd.f32 %v4538, %v4551
        %4553 = vdwg.mxu0
        %4554 = vmatpush.bf16.msra.mxu0 %v4205
        %4555 = vmatpush.bf16.msra.mxu0 %v4203
        %4556 = vmatpush.bf16.msra.mxu0 %v4201
        %4557 = vmatpush.bf16.msra.mxu0 %v4199
        %4558 = vmatpush.bf16.msra.mxu0 %v4197
        %4559 = vmatpush.bf16.msra.mxu0 %v4195
        %4560 = vmatpush.bf16.msra.mxu0 %v4193
        %4561 = vmatpush.bf16.msra.mxu0 %v4191
        %4562 = vmatmul.bf16.gmra.mxu0 %v3634
        %v4563 = vpop.f32.mrf.mxu0
        %v4564 = vadd.f32 %v4550, %v4563
        %v4565 = vpop.f32.mrf.mxu0
        %v4566 = vadd.f32 %v4552, %v4565
        %4567 = vdwg.mxu0
        %4568 = vmatpush.bf16.msra.mxu0 %v4221
        %4569 = vmatpush.bf16.msra.mxu0 %v4219
        %4570 = vmatpush.bf16.msra.mxu0 %v4217
        %4571 = vmatpush.bf16.msra.mxu0 %v4215
        %4572 = vmatpush.bf16.msra.mxu0 %v4213
        %4573 = vmatpush.bf16.msra.mxu0 %v4211
        %4574 = vmatpush.bf16.msra.mxu0 %v4209
        %4575 = vmatpush.bf16.msra.mxu0 %v4207
        %4576 = vmatmul.bf16.gmra.mxu0 %v3635
        %v4577 = vpop.f32.mrf.mxu0
        %v4578 = vadd.f32 %v4564, %v4577
        %v4579 = vpop.f32.mrf.mxu0
        %v4580 = vadd.f32 %v4566, %v4579
        %4581 = vdwg.mxu0
        %4582 = vmatpush.bf16.msra.mxu0 %v4237
        %4583 = vmatpush.bf16.msra.mxu0 %v4235
        %4584 = vmatpush.bf16.msra.mxu0 %v4233
        %4585 = vmatpush.bf16.msra.mxu0 %v4231
        %4586 = vmatpush.bf16.msra.mxu0 %v4229
        %4587 = vmatpush.bf16.msra.mxu0 %v4227
        %4588 = vmatpush.bf16.msra.mxu0 %v4225
        %4589 = vmatpush.bf16.msra.mxu0 %v4223
        %4590 = vmatmul.bf16.gmra.mxu0 %v3636
        %v4591 = vpop.f32.mrf.mxu0
        %v4592 = vadd.f32 %v4578, %v4591
        %v4593 = vpop.f32.mrf.mxu0
        %v4594 = vadd.f32 %v4580, %v4593
        %4595 = vdwg.mxu0
        %4596 = vmatpush.bf16.msra.mxu0 %v4253
        %4597 = vmatpush.bf16.msra.mxu0 %v4251
        %4598 = vmatpush.bf16.msra.mxu0 %v4249
        %4599 = vmatpush.bf16.msra.mxu0 %v4247
        %4600 = vmatpush.bf16.msra.mxu0 %v4245
        %4601 = vmatpush.bf16.msra.mxu0 %v4243
        %4602 = vmatpush.bf16.msra.mxu0 %v4241
        %4603 = vmatpush.bf16.msra.mxu0 %v4239
        %4604 = vmatmul.bf16.gmra.mxu0 %v3637
        %v4605 = vpop.f32.mrf.mxu0
        %v4606 = vadd.f32 %v4592, %v4605
        %v4607 = vpop.f32.mrf.mxu0
        %v4608 = vadd.f32 %v4594, %v4607
        %4609 = vdwg.mxu0
        %4610 = vmatpush.bf16.msra.mxu0 %v4269
        %4611 = vmatpush.bf16.msra.mxu0 %v4267
        %4612 = vmatpush.bf16.msra.mxu0 %v4265
        %4613 = vmatpush.bf16.msra.mxu0 %v4263
        %4614 = vmatpush.bf16.msra.mxu0 %v4261
        %4615 = vmatpush.bf16.msra.mxu0 %v4259
        %4616 = vmatpush.bf16.msra.mxu0 %v4257
        %4617 = vmatpush.bf16.msra.mxu0 %v4255
        %4618 = vmatmul.bf16.gmra.mxu0 %v3638
        %v4619 = vpop.f32.mrf.mxu0
        %v4620 = vadd.f32 %v4606, %v4619
        %v4621 = vpop.f32.mrf.mxu0
        %v4622 = vadd.f32 %v4608, %v4621
        %4623 = vdwg.mxu0
        %4624 = vmatpush.bf16.msra.mxu0 %v4285
        %4625 = vmatpush.bf16.msra.mxu0 %v4283
        %4626 = vmatpush.bf16.msra.mxu0 %v4281
        %4627 = vmatpush.bf16.msra.mxu0 %v4279
        %4628 = vmatpush.bf16.msra.mxu0 %v4277
        %4629 = vmatpush.bf16.msra.mxu0 %v4275
        %4630 = vmatpush.bf16.msra.mxu0 %v4273
        %4631 = vmatpush.bf16.msra.mxu0 %v4271
        %4632 = vmatmul.bf16.gmra.mxu0 %v3639
        %v4633 = vpop.f32.mrf.mxu0
        %v4634 = vadd.f32 %v4620, %v4633
        %v4635 = vpop.f32.mrf.mxu0
        %v4636 = vadd.f32 %v4622, %v4635
        %4637 = vdwg.mxu0
        %v4638 = vadd.f32 %v1842, %v4522
        %v4639 = vadd.f32 %v1843, %v4634
        %v4640 = vadd.f32 %v1844, %v4524
        %v4641 = vadd.f32 %v1845, %v4636
        %4642 = vst [vmem:[%s613] sm:$0xff] %v4638
        %4643 = vst [vmem:[%s613 + $0x8] sm:$0xff] %v4639
        %4644 = vst [vmem:[%s613 + $0x10] sm:$0xff] %v4640
        %4645 = vst [vmem:[%s613 + $0x18] sm:$0xff] %v4641
        %s4646 = sand.u32 %s321, 1
        %s4647 = scalar_lea.sflag [#allocation5], %s4646
        %s4648 = sand.u32 %s321, 1
        %s4649 = smul.addr %s4648, 32
        %s4650 = scalar_lea.vmem [#allocation21], %s4649
        // Predicated region
        $region117: #{tpu_custom_call.1} parent=71 // pred_check
          %p4651 = pneg %p331
        $region118: #{tpu_custom_call.1} parent=71 // pred_check_branch
          %4653 = sbr.rel (%p4651) target = $region120
        $region119: #{tpu_custom_call.1} parent=71 // pred_region
          %4655 = vsyncadd %s4647, 0
          %s4656 = smul.addr %s35, 4
          %s4657 = smul.addr %s4656, 8
          %s4658 = scalar_lea.hbm %s13, %s4657
          %s4659 = sshll.u32 %s4650, 4
          %s4660 = int_to_ptr.vmem [resolvable:$true] %s4659
          %s4661 = sshll.u32 %s4658, 4
          %s4662 = int_to_ptr.hbm [resolvable:$true] %s4661
          %4667 = dma.vmem_to_hbm [thread:$0]  %s4660, 512, %s4662, %s4647, 256, 256, 16
        $region120: #{tpu_custom_call.1} parent=71 // pred_fallthru
          _
      $region72: #{tpu_custom_call.1} parent=5 // pred_fallthru
        _
      %p4668 = scmp.le.s32.totalorder 2, %s30
      // Predicated region
      $region121: #{tpu_custom_call.1} parent=5 // pred_check
        %p4669 = pneg %p4668
      $region122: #{tpu_custom_call.1} parent=5 // pred_check_branch
        %4671 = sbr.rel (%p4669) target = $region124
      $region123: #{tpu_custom_call.1} parent=5 // pred_region
        %s4672 = ssub.s32 %s30, 2
        // Predicated region
        $region125: #{tpu_custom_call.1} parent=123 // pred_check
          %p4673 = pneg %p337
        $region126: #{tpu_custom_call.1} parent=123 // pred_check_branch
          %4675 = sbr.rel (%p4673) target = $region128
        $region127: #{tpu_custom_call.1} parent=123 // pred_region
          %s4676 = sand.u32 %s322, 1
          %s4677 = scalar_lea.sflag [#allocation5], %s4676
          %s4678 = sand.u32 %s322, 1
          %s4679 = smul.addr %s4678, 32
          %s4680 = scalar_lea.vmem [#allocation21], %s4679
          %4682 = dma.done %s4677, 512
        $region128: #{tpu_custom_call.1} parent=123 // pred_fallthru
          _
      $region124: #{tpu_custom_call.1} parent=5 // pred_fallthru
        _
    $region6: #{tpu_custom_call.1} parent=1 // loop_footer
      %s34 = sadd.s32 1, %s30
    $region7: #{tpu_custom_call.1} parent=1 // loop_footer_branch
      %29 = sbr.rel target = $region3
    $region8: #{tpu_custom_call.1} parent=1 // loop_exit
      _
    %4683 = vsyncpa [#allocation4], 1
    %s4684 = scalar_lea.sflag [#allocation4], 1
    %4685 = vsyncpa %s4684, 1
    %4686 = vsyncpa [#allocation7], 1
    %4687 = vsyncpa [#allocation10], 1
    %4688 = vsyncpa [#allocation13], 1
    %4689 = vsyncpa [#allocation16], 1
    %4690 = vsyncpa [#allocation19], 1
    %4691 = vsyncpa [#allocation5], 1
    %s4692 = scalar_lea.sflag [#allocation5], 1
    %4693 = vsyncpa %s4692, 1

</llo_original>
